<compile_context>
chip_gen: v6e
topology: v6e:2x2x1
jax: 0.10.0
libtpu: 0.0.40
codegen_flags: <defaults>
</compile_context>

<pallas_src>
import functools

import jax
import jax.numpy as jnp
from jax.experimental import pallas as pl
from jax.experimental.pallas import tpu as pltpu

_MIB = 1024 * 1024


# ----------------------------------------------------------------------------
# helpers
# ----------------------------------------------------------------------------
def _round_up(x, m):
    return (x + m - 1) // m * m


try:  # generation-aware VMEM budget (v5e/v6e: 128 MiB, v7x: 64 MiB per TC)
    _VMEM_CAP = int(pltpu.get_tpu_info().vmem_capacity_bytes)
except Exception:  # interpret mode / no TPU: assume the smallest (v7x)
    _VMEM_CAP = 64 * _MIB

_HAS_BUFFERED = hasattr(pl, "Buffered")


def _const_spec(shape):
    """BlockSpec for a weight/bias that is constant across the grid.

    Single-buffered (pl.Buffered(1)) when supported: its index_map is
    constant so it is fetched once; no need for a second pipeline buffer."""
    idx = lambda bi, ci: tuple(0 for _ in shape)
    if _HAS_BUFFERED:
        try:
            return pl.BlockSpec(shape, idx, pipeline_mode=pl.Buffered(1))
        except TypeError:
            pass
    return pl.BlockSpec(shape, idx)


def _pick_batch_tile(B):
    """Sublane-padded batch tile: big enough to feed the MXU, capped at 128,
    and >= 2 tiles when the batch permits (v7x megacore sharding)."""
    Bp = _round_up(B, 8)
    if Bp <= 8:
        return 8
    half = _round_up((Bp + 1) // 2, 8)
    return min(half, 128)


def _layer_vmem_bytes(chunk, batch_tile, in_dim, Hp, out_feat, fuse_fc,
                      compute_dtype, x_dtype, out_dtype):
    """Estimate of one layer's VMEM footprint (weights single-buffered,
    streamed I/O blocks double-buffered, plus scratch)."""
    G = 4 * Hp
    cs = jnp.dtype(compute_dtype).itemsize
    w = (in_dim * G + Hp * G) * cs + G * 4
    if fuse_fc:
        w += Hp * out_feat * cs + out_feat * 4
    io = 2 * chunk * batch_tile * (in_dim * jnp.dtype(x_dtype).itemsize +
                                   out_feat * jnp.dtype(out_dtype).itemsize)
    sc = 2 * batch_tile * Hp * 4 + chunk * batch_tile * G * 4
    if fuse_fc:
        sc += chunk * batch_tile * Hp * cs
    return w + io + sc


def _pick_chunk(T, batch_tile, in_dim0, Hp, Op, compute_dtype):
    """Largest time chunk (<=64) whose worst-case layer footprint fits the
    VMEM budget; T is padded up to a multiple of it by the caller."""
    budget = int(0.45 * _VMEM_CAP)
    in_dim = max(in_dim0, Hp)
    chunk = max(1, min(T, 64))
    while chunk > 8 and _layer_vmem_bytes(
            chunk, batch_tile, in_dim, Hp, max(Hp, Op), True,
            compute_dtype, compute_dtype, jnp.float32) > budget:
        chunk = max(8, (chunk + 1) // 2)
    return chunk


# ----------------------------------------------------------------------------
# fused LSTM-layer kernel (optionally with the final Linear fused in)
# ----------------------------------------------------------------------------
def _lstm_chunk_kernel(*refs, hidden_pad, chunk, fuse_fc, compute_dtype):
    if fuse_fc:
        (x_ref, wih_ref, whh_ref, b_ref, wfc_ref, bfc_ref, out_ref,
         h_st, c_st, gx_scr, hseq_scr) = refs
    else:
        (x_ref, wih_ref, whh_ref, b_ref, out_ref,
         h_st, c_st, gx_scr) = refs
        hseq_scr = None

    Hp = hidden_pad
    bt = x_ref.shape[1]                          # batch tile (sublane-padded)

    # Reset recurrent state at the first time-chunk of each batch tile.
    @pl.when(pl.program_id(1) == 0)
    def _():
        h_st[...] = jnp.zeros_like(h_st)
        c_st[...] = jnp.zeros_like(c_st)

    # (1) Chunk-level input projection: one large MXU GEMM, bias folded in.
    #     No recurrent dependency -> off the sequential critical path.
    x2 = x_ref[...].astype(compute_dtype).reshape(chunk * bt, x_ref.shape[2])
    gx2 = jnp.dot(x2, wih_ref[...], preferred_element_type=jnp.float32)
    gx_scr[...] = (gx2 + b_ref[...]).reshape(chunk, bt, 4 * Hp)

    # (2) Sequential recurrence: only h @ W_hh + gate math per step.
    whh = whh_ref[...]                           # (Hp, 4Hp), VMEM-resident

    def sig(v):
        # sigmoid(x) = 0.5*tanh(0.5x)+0.5 : single EUP op, no VPU divide.
        return 0.5 * jnp.tanh(0.5 * v) + 0.5

    def step(t, carry):
        h_prev, c_prev = carry                   # values (vregs), not VMEM
        gates = gx_scr[t] + jnp.dot(h_prev.astype(compute_dtype), whh,
                                    preferred_element_type=jnp.float32)
        # Hp multiple of 128 -> each gate slice is lane-tile aligned.
        i_g = sig(gates[:, 0 * Hp:1 * Hp])
        f_g = sig(gates[:, 1 * Hp:2 * Hp])
        g_g = jnp.tanh(gates[:, 2 * Hp:3 * Hp])
        o_g = sig(gates[:, 3 * Hp:4 * Hp])
        c_new = f_g * c_prev + i_g * g_g
        h_new = o_g * jnp.tanh(c_new)
        if fuse_fc:
            hseq_scr[t] = h_new.astype(hseq_scr.dtype)
        else:
            out_ref[t] = h_new.astype(out_ref.dtype)
        return h_new, c_new

    h_fin, c_fin = jax.lax.fori_loop(0, chunk, step, (h_st[...], c_st[...]),
                                     unroll=min(chunk, 8))
    h_st[...] = h_fin                            # state written once per chunk
    c_st[...] = c_fin

    # (3) Fused FC epilogue (last layer only): one GEMM per chunk; the hidden
    #     slab never leaves VMEM.
    if fuse_fc:
        h2 = hseq_scr[...].astype(compute_dtype).reshape(chunk * bt, Hp)
        out2 = (jnp.dot(h2, wfc_ref[...], preferred_element_type=jnp.float32)
                + bfc_ref[...])
        out_ref[...] = out2.reshape(chunk, bt, out_ref.shape[2]).astype(
            out_ref.dtype)


def _lstm_layer_call(x_tm, wih, whh, bias, *, chunk, batch_tile, fuse_fc,
                     wfc=None, bfc=None, compute_dtype=jnp.bfloat16,
                     out_dtype=jnp.float32):
    """x_tm: (T, Bp, D) time-major, T multiple of chunk, Bp multiple of tile.

    Returns (T, Bp, Hp) hidden sequence, or (T, Bp, Op) if fuse_fc."""
    T, Bp, D = x_tm.shape
    Hp, G = whh.shape                            # G = 4 * Hp
    n_bt = Bp // batch_tile
    n_ch = T // chunk

    in_specs = [
        pl.BlockSpec((chunk, batch_tile, D), lambda bi, ci: (ci, bi, 0)),
        _const_spec((D, G)),
        _const_spec((Hp, G)),
        _const_spec((1, G)),
    ]
    scratch = [
        pltpu.VMEM((batch_tile, Hp), jnp.float32),        # h state (f32)
        pltpu.VMEM((batch_tile, Hp), jnp.float32),        # c state (f32)
        pltpu.VMEM((chunk, batch_tile, G), jnp.float32),  # precomputed x-gates
    ]
    args = [x_tm, wih, whh, bias]
    if fuse_fc:
        Op = wfc.shape[1]
        in_specs += [_const_spec((Hp, Op)), _const_spec((1, Op))]
        scratch.append(pltpu.VMEM((chunk, batch_tile, Hp), compute_dtype))
        args += [wfc, bfc]
        out_feat = Op
    else:
        out_feat = Hp

    est = _layer_vmem_bytes(chunk, batch_tile, D, Hp, out_feat, fuse_fc,
                            compute_dtype, x_tm.dtype, out_dtype)
    vmem_limit = int(min(max(2 * est, 32 * _MIB), 0.85 * _VMEM_CAP))

    kernel = functools.partial(_lstm_chunk_kernel, hidden_pad=Hp, chunk=chunk,
                               fuse_fc=fuse_fc, compute_dtype=compute_dtype)

    return pl.pallas_call(
        kernel,
        out_shape=jax.ShapeDtypeStruct((T, Bp, out_feat), out_dtype),
        grid=(n_bt, n_ch),
        in_specs=in_specs,
        out_specs=pl.BlockSpec((chunk, batch_tile, out_feat),
                               lambda bi, ci: (ci, bi, 0)),
        scratch_shapes=scratch,
        compiler_params=pltpu.CompilerParams(
            # batch tiles independent (megacore shardable); time chunks carry
            # the recurrence through scratch -> sequential.
            dimension_semantics=("parallel", "arbitrary"),
            vmem_limit_bytes=vmem_limit),
    )(*args)


# ----------------------------------------------------------------------------
# weight preparation (gate-reordered, lane-padded, optionally bf16)
# ----------------------------------------------------------------------------
def _prep_lstm_weights(layer, H, Hp, in_pad, compute_dtype):
    """Returns wih (in_pad, 4Hp), whh (Hp, 4Hp), bias (1, 4Hp).

    The contraction dim of W_ih is padded to `in_pad` (the layer input width
    seen by the kernel) with zeros — required for layers >= 1 whose input is
    the previous layer's lane-padded hidden slab."""
    w_ih, w_hh = layer["w_ih"], layer["w_hh"]
    b = layer["b_ih"] + layer["b_hh"]
    D = w_ih.shape[1]
    pad_h = Hp - H
    pad_d = in_pad - D
    # (4H, D) -> (D, 4, H) -> pad rows + gate lanes -> (in_pad, 4*Hp)
    wih = jnp.transpose(w_ih.reshape(4, H, D), (2, 0, 1))
    wih = jnp.pad(wih, ((0, pad_d), (0, 0), (0, pad_h))).reshape(in_pad, 4 * Hp)
    # (4H, H) -> (H, 4, H) -> pad contraction rows + gate lanes -> (Hp, 4*Hp)
    whh = jnp.transpose(w_hh.reshape(4, H, H), (2, 0, 1))
    whh = jnp.pad(whh, ((0, pad_h), (0, 0), (0, pad_h))).reshape(Hp, 4 * Hp)
    bias = jnp.pad(b.reshape(4, H), ((0, 0), (0, pad_h))).reshape(1, 4 * Hp)
    return (wih.astype(compute_dtype), whh.astype(compute_dtype),
            bias.astype(jnp.float32))


def _prep_fc_weights(w_fc, b_fc, H, Hp, O, Op, compute_dtype):
    w = jnp.pad(jnp.transpose(w_fc), ((0, Hp - H), (0, Op - O)))   # (Hp, Op)
    b = jnp.pad(b_fc, (0, Op - O)).reshape(1, Op)
    return w.astype(compute_dtype), b.astype(jnp.float32)


# ----------------------------------------------------------------------------
# full module forward
# ----------------------------------------------------------------------------
def multi_output_lstm_forward(x, params, *, compute_dtype=jnp.bfloat16,
                              chunk=None):
    """x: (B, T, input_size) batch_first.  Returns (B, T, output_size) f32."""
    B, T, Din = x.shape
    H = params["lstm"][0]["w_hh"].shape[1]
    O = params["fc_w"].shape[0]
    Hp = _round_up(H, 128)
    Op = _round_up(O, 128)
    batch_tile = _pick_batch_tile(B)
    Bp = _round_up(B, batch_tile)
    if chunk is None:
        chunk = _pick_chunk(T, batch_tile, Din, Hp, Op, compute_dtype)
    Tp = _round_up(T, chunk)      # pad time instead of shrinking the chunk

    # Time-major, padded layout shared by all layer kernels. Padded time steps
    # are appended (LSTM is causal -> outputs for t < T are unaffected).
    h = jnp.transpose(x, (1, 0, 2)).astype(jnp.float32)
    h = jnp.pad(h, ((0, Tp - T), (0, Bp - B), (0, 0)))             # (Tp,Bp,D)

    inter_dtype = jnp.dtype(compute_dtype)       # inter-layer HBM slabs
    wfc, bfc = _prep_fc_weights(params["fc_w"], params["fc_b"],
                                H, Hp, O, Op, compute_dtype)
    n_layers = len(params["lstm"])
    for li, layer in enumerate(params["lstm"]):
        in_pad = h.shape[2]                      # Din for layer 0, Hp after
        wih, whh, bias = _prep_lstm_weights(layer, H, Hp, in_pad, compute_dtype)
        last = li == n_layers - 1
        h = _lstm_layer_call(
            h, wih, whh, bias, chunk=chunk, batch_tile=batch_tile,
            fuse_fc=last, wfc=wfc if last else None,
            bfc=bfc if last else None, compute_dtype=compute_dtype,
            out_dtype=jnp.float32 if last else inter_dtype)
    # (Tp, Bp, Op) time-major, padded -> (B, T, O) batch-first, trimmed.
    return jnp.transpose(h, (1, 0, 2))[:B, :T, :O]


forward_jit = jax.jit(multi_output_lstm_forward,
                      static_argnames=("compute_dtype", "chunk"))


# ----------------------------------------------------------------------------
# params init (PyTorch-style shapes) + pure-JAX reference
# ----------------------------------------------------------------------------
def init_params(key, input_size, hidden_size, num_layers, output_size):
    params = {"lstm": []}
    k = 1.0 / jnp.sqrt(hidden_size)
    for l in range(num_layers):
        d_in = input_size if l == 0 else hidden_size
        key, k1, k2, k3, k4 = jax.random.split(key, 5)
        params["lstm"].append({
            "w_ih": jax.random.uniform(k1, (4 * hidden_size, d_in),
                                       jnp.float32, -k, k),
            "w_hh": jax.random.uniform(k2, (4 * hidden_size, hidden_size),
                                       jnp.float32, -k, k),
            "b_ih": jax.random.uniform(k3, (4 * hidden_size,),
                                       jnp.float32, -k, k),
            "b_hh": jax.random.uniform(k4, (4 * hidden_size,),
                                       jnp.float32, -k, k),
        })
    key, k1, k2 = jax.random.split(key, 3)
    params["fc_w"] = jax.random.uniform(k1, (output_size, hidden_size),
                                        jnp.float32, -k, k)
    params["fc_b"] = jax.random.uniform(k2, (output_size,),
                                        jnp.float32, -k, k)
    return params


def _reference_forward(x, params):
    h_seq = jnp.transpose(x, (1, 0, 2)).astype(jnp.float32)       # (T, B, D)
    for layer in params["lstm"]:
        T, B, _ = h_seq.shape
        H = layer["w_hh"].shape[1]
        wih_t, whh_t = layer["w_ih"].T, layer["w_hh"].T
        bias = layer["b_ih"] + layer["b_hh"]

        def step(carry, x_t):
            h, c = carry
            g = x_t @ wih_t + h @ whh_t + bias
            i = jax.nn.sigmoid(g[:, 0 * H:1 * H])
            f = jax.nn.sigmoid(g[:, 1 * H:2 * H])
            gg = jnp.tanh(g[:, 2 * H:3 * H])
            o = jax.nn.sigmoid(g[:, 3 * H:4 * H])
            c = f * c + i * gg
            h = o * jnp.tanh(c)
            return (h, c), h

        init = (jnp.zeros((B, H), jnp.float32), jnp.zeros((B, H), jnp.float32))
        _, h_seq = jax.lax.scan(step, init, h_seq)
    out = h_seq @ params["fc_w"].T + params["fc_b"]
    return jnp.transpose(out, (1, 0, 2))


if __name__ == "__main__":
    input_size, hidden_size, num_layers, output_size = 8, 32, 2, 4
    batch, seq = 2, 8

    key = jax.random.PRNGKey(0)
    key, kx = jax.random.split(key)
    x = jax.random.normal(kx, (batch, seq, input_size), jnp.float32)
    params = init_params(key, input_size, hidden_size, num_layers, output_size)

    ref = jax.block_until_ready(_reference_forward(x, params))

    # f32 MXU-input path.  Tolerance covers the reference's default (non
    # "highest") XLA f32 matmul precision on TPU; a wiring bug would show up
    # as O(0.1..1) error or NaN.
    out_f32 = jax.block_until_ready(
        forward_jit(x, params, compute_dtype=jnp.float32))
    assert out_f32.shape == (batch, seq, output_size), out_f32.shape
    err = float(jnp.max(jnp.abs(out_f32 - ref)))
    assert err < 2e-2, err

    # Default bf16 MXU-input path (f32 accumulate / f32 state): loose check.
    out_bf16 = jax.block_until_ready(forward_jit(x, params))
    assert out_bf16.shape == (batch, seq, output_size), out_bf16.shape
    assert bool(jnp.all(jnp.isfinite(out_bf16)))
    err_bf16 = float(jnp.max(jnp.abs(out_bf16 - ref)))
    assert err_bf16 < 0.3, err_bf16

    print("KERNEL_OK")
</pallas_src>

<mosaic_0001>
module attributes {stable_mosaic.version = 11 : i64} {
  func.func @_lstm_chunk_kernel(%arg0: i32, %arg1: i32, %arg2: memref<8x8x128xf32, #tpu.memory_space<vmem>>, %arg3: memref<128x512xf32, #tpu.memory_space<vmem>>, %arg4: memref<128x512xf32, #tpu.memory_space<vmem>>, %arg5: memref<1x512xf32, #tpu.memory_space<vmem>>, %arg6: memref<128x128xf32, #tpu.memory_space<vmem>>, %arg7: memref<1x128xf32, #tpu.memory_space<vmem>>, %arg8: memref<8x8x128xf32, #tpu.memory_space<vmem>>, %arg9: memref<8x128xf32, #tpu.memory_space<vmem>>, %arg10: memref<8x128xf32, #tpu.memory_space<vmem>>, %arg11: memref<8x8x512xf32, #tpu.memory_space<vmem>>, %arg12: memref<8x8x128xf32, #tpu.memory_space<vmem>>) attributes {dimension_semantics = [#tpu.dimension_semantics<parallel>, #tpu.dimension_semantics<arbitrary>], iteration_bounds = array<i64: 1, 1>, scalar_prefetch = 0 : i64, scratch_operands = 4 : i64, tpu.core_type = #tpu.core_type<tc>, window_params = [{transform_indices = @transform_0, window_bounds = array<i64: 8, 8, 128>}, {pipeline_mode = #tpu.pipeline_mode<synchronous>, transform_indices = @transform_1, window_bounds = array<i64: 128, 512>}, {pipeline_mode = #tpu.pipeline_mode<synchronous>, transform_indices = @transform_2, window_bounds = array<i64: 128, 512>}, {pipeline_mode = #tpu.pipeline_mode<synchronous>, transform_indices = @transform_3, window_bounds = array<i64: 1, 512>}, {pipeline_mode = #tpu.pipeline_mode<synchronous>, transform_indices = @transform_4, window_bounds = array<i64: 128, 128>}, {pipeline_mode = #tpu.pipeline_mode<synchronous>, transform_indices = @transform_5, window_bounds = array<i64: 1, 128>}, {transform_indices = @transform_6, window_bounds = array<i64: 8, 8, 128>}]} {
    %c0_i32 = arith.constant 0 : i32
    %0 = arith.cmpi eq, %arg1, %c0_i32 : i32
    %1 = arith.extui %0 : i1 to i32
    %c0_i32_0 = arith.constant 0 : i32
    %2 = arith.cmpi ne, %1, %c0_i32_0 : i32
    scf.if %2 {
      %cst_144 = arith.constant 0.000000e+00 : f32
      %346 = vector.broadcast %cst_144 : f32 to vector<8x128xf32>
      %c0_145 = arith.constant 0 : index
      %c0_146 = arith.constant 0 : index
      %347 = vector.load %arg9[%c0_145, %c0_146] : memref<8x128xf32, #tpu.memory_space<vmem>>, vector<8x128xf32>
      tpu.vector_store %arg9[%c0_145, %c0_146], %346 {strides = array<i32>} : memref<8x128xf32, #tpu.memory_space<vmem>>, vector<8x128xf32>,
      %cst_147 = arith.constant 0.000000e+00 : f32
      %348 = vector.broadcast %cst_147 : f32 to vector<8x128xf32>
      %c0_148 = arith.constant 0 : index
      %c0_149 = arith.constant 0 : index
      %349 = vector.load %arg10[%c0_148, %c0_149] : memref<8x128xf32, #tpu.memory_space<vmem>>, vector<8x128xf32>
      tpu.vector_store %arg10[%c0_148, %c0_149], %348 {strides = array<i32>} : memref<8x128xf32, #tpu.memory_space<vmem>>, vector<8x128xf32>,
    } else {
    }
    %c0 = arith.constant 0 : index
    %c0_1 = arith.constant 0 : index
    %c0_2 = arith.constant 0 : index
    %3 = vector.load %arg2[%c0, %c0_1, %c0_2] : memref<8x8x128xf32, #tpu.memory_space<vmem>>, vector<8x8x128xf32>
    %4 = vector.shape_cast %3 : vector<8x8x128xf32> to vector<64x128xf32>
    %c0_3 = arith.constant 0 : index
    %c0_4 = arith.constant 0 : index
    %5 = vector.load %arg3[%c0_3, %c0_4] : memref<128x512xf32, #tpu.memory_space<vmem>>, vector<128x512xf32>
    %cst = arith.constant dense<0.000000e+00> : vector<64x512xf32>
    %6 = tpu.matmul %4, %5, %cst {dimension_numbers = #tpu.dot_dimension_numbers<[1], [0], [0], [1], [0, 0, 1, 1], [], []>} : vector<64x128xf32>, vector<128x512xf32>, vector<64x512xf32> -> vector<64x512xf32>
    %c0_5 = arith.constant 0 : index
    %c0_6 = arith.constant 0 : index
    %7 = vector.load %arg5[%c0_5, %c0_6] : memref<1x512xf32, #tpu.memory_space<vmem>>, vector<1x512xf32>
    %8 = vector.broadcast %7 : vector<1x512xf32> to vector<64x512xf32>
    %9 = arith.addf %6, %8 : vector<64x512xf32>
    %10 = vector.shape_cast %9 : vector<64x512xf32> to vector<8x8x512xf32>
    %c0_7 = arith.constant 0 : index
    %c0_8 = arith.constant 0 : index
    %c0_9 = arith.constant 0 : index
    %11 = vector.load %arg11[%c0_7, %c0_8, %c0_9] : memref<8x8x512xf32, #tpu.memory_space<vmem>>, vector<8x8x512xf32>
    tpu.vector_store %arg11[%c0_7, %c0_8, %c0_9], %10 {strides = array<i32>} : memref<8x8x512xf32, #tpu.memory_space<vmem>>, vector<8x8x512xf32>,
    %c0_10 = arith.constant 0 : index
    %c0_11 = arith.constant 0 : index
    %12 = vector.load %arg4[%c0_10, %c0_11] : memref<128x512xf32, #tpu.memory_space<vmem>>, vector<128x512xf32>
    %c0_12 = arith.constant 0 : index
    %c0_13 = arith.constant 0 : index
    %13 = vector.load %arg9[%c0_12, %c0_13] : memref<8x128xf32, #tpu.memory_space<vmem>>, vector<8x128xf32>
    %c0_14 = arith.constant 0 : index
    %c0_15 = arith.constant 0 : index
    %14 = vector.load %arg10[%c0_14, %c0_15] : memref<8x128xf32, #tpu.memory_space<vmem>>, vector<8x128xf32>
    %c0_i32_16 = arith.constant 0 : i32
    %15 = arith.index_cast %c0_i32_16 : i32 to index
    %c0_17 = arith.constant 0 : index
    %c0_18 = arith.constant 0 : index
    %16 = vector.load %arg11[%15, %c0_17, %c0_18] : memref<8x8x512xf32, #tpu.memory_space<vmem>>, vector<1x8x512xf32>
    %17 = vector.shape_cast %16 : vector<1x8x512xf32> to vector<8x512xf32>
    %cst_19 = arith.constant dense<0.000000e+00> : vector<8x512xf32>
    %18 = tpu.matmul %13, %12, %cst_19 {dimension_numbers = #tpu.dot_dimension_numbers<[1], [0], [0], [1], [0, 0, 1, 1], [], []>} : vector<8x128xf32>, vector<128x512xf32>, vector<8x512xf32> -> vector<8x512xf32>
    %19 = arith.addf %17, %18 : vector<8x512xf32>
    %20 = vector.extract_strided_slice %19 {offsets = [0, 0], sizes = [8, 128], strides = [1, 1]} : vector<8x512xf32> to vector<8x128xf32>
    %cst_20 = arith.constant 5.000000e-01 : f32
    %21 = vector.broadcast %cst_20 : f32 to vector<8x128xf32>
    %22 = arith.mulf %21, %20 : vector<8x128xf32>
    %23 = math.tanh %22 : vector<8x128xf32>
    %cst_21 = arith.constant 5.000000e-01 : f32
    %24 = vector.broadcast %cst_21 : f32 to vector<8x128xf32>
    %25 = arith.mulf %24, %23 : vector<8x128xf32>
    %cst_22 = arith.constant 5.000000e-01 : f32
    %26 = vector.broadcast %cst_22 : f32 to vector<8x128xf32>
    %27 = arith.addf %25, %26 : vector<8x128xf32>
    %28 = vector.extract_strided_slice %19 {offsets = [0, 128], sizes = [8, 128], strides = [1, 1]} : vector<8x512xf32> to vector<8x128xf32>
    %cst_23 = arith.constant 5.000000e-01 : f32
    %29 = vector.broadcast %cst_23 : f32 to vector<8x128xf32>
    %30 = arith.mulf %29, %28 : vector<8x128xf32>
    %31 = math.tanh %30 : vector<8x128xf32>
    %cst_24 = arith.constant 5.000000e-01 : f32
    %32 = vector.broadcast %cst_24 : f32 to vector<8x128xf32>
    %33 = arith.mulf %32, %31 : vector<8x128xf32>
    %cst_25 = arith.constant 5.000000e-01 : f32
    %34 = vector.broadcast %cst_25 : f32 to vector<8x128xf32>
    %35 = arith.addf %33, %34 : vector<8x128xf32>
    %36 = vector.extract_strided_slice %19 {offsets = [0, 256], sizes = [8, 128], strides = [1, 1]} : vector<8x512xf32> to vector<8x128xf32>
    %37 = math.tanh %36 : vector<8x128xf32>
    %38 = vector.extract_strided_slice %19 {offsets = [0, 384], sizes = [8, 128], strides = [1, 1]} : vector<8x512xf32> to vector<8x128xf32>
    %cst_26 = arith.constant 5.000000e-01 : f32
    %39 = vector.broadcast %cst_26 : f32 to vector<8x128xf32>
    %40 = arith.mulf %39, %38 : vector<8x128xf32>
    %41 = math.tanh %40 : vector<8x128xf32>
    %cst_27 = arith.constant 5.000000e-01 : f32
    %42 = vector.broadcast %cst_27 : f32 to vector<8x128xf32>
    %43 = arith.mulf %42, %41 : vector<8x128xf32>
    %cst_28 = arith.constant 5.000000e-01 : f32
    %44 = vector.broadcast %cst_28 : f32 to vector<8x128xf32>
    %45 = arith.addf %43, %44 : vector<8x128xf32>
    %46 = arith.mulf %35, %14 : vector<8x128xf32>
    %47 = arith.mulf %27, %37 : vector<8x128xf32>
    %48 = arith.addf %46, %47 : vector<8x128xf32>
    %49 = math.tanh %48 : vector<8x128xf32>
    %50 = arith.mulf %45, %49 : vector<8x128xf32>
    %51 = arith.index_cast %c0_i32_16 : i32 to index
    %c0_29 = arith.constant 0 : index
    %c0_30 = arith.constant 0 : index
    %52 = vector.load %arg12[%51, %c0_29, %c0_30] : memref<8x8x128xf32, #tpu.memory_space<vmem>>, vector<1x8x128xf32>
    %53 = vector.shape_cast %52 : vector<1x8x128xf32> to vector<8x128xf32>
    %54 = vector.shape_cast %50 : vector<8x128xf32> to vector<1x8x128xf32>
    tpu.vector_store %arg12[%51, %c0_29, %c0_30], %54 {strides = array<i32>} : memref<8x8x128xf32, #tpu.memory_space<vmem>>, vector<1x8x128xf32>,
    %c1_i32 = arith.constant 1 : i32
    %55 = arith.index_cast %c1_i32 : i32 to index
    %c0_31 = arith.constant 0 : index
    %c0_32 = arith.constant 0 : index
    %56 = vector.load %arg11[%55, %c0_31, %c0_32] : memref<8x8x512xf32, #tpu.memory_space<vmem>>, vector<1x8x512xf32>
    %57 = vector.shape_cast %56 : vector<1x8x512xf32> to vector<8x512xf32>
    %cst_33 = arith.constant dense<0.000000e+00> : vector<8x512xf32>
    %58 = tpu.matmul %50, %12, %cst_33 {dimension_numbers = #tpu.dot_dimension_numbers<[1], [0], [0], [1], [0, 0, 1, 1], [], []>} : vector<8x128xf32>, vector<128x512xf32>, vector<8x512xf32> -> vector<8x512xf32>
    %59 = arith.addf %57, %58 : vector<8x512xf32>
    %60 = vector.extract_strided_slice %59 {offsets = [0, 0], sizes = [8, 128], strides = [1, 1]} : vector<8x512xf32> to vector<8x128xf32>
    %cst_34 = arith.constant 5.000000e-01 : f32
    %61 = vector.broadcast %cst_34 : f32 to vector<8x128xf32>
    %62 = arith.mulf %61, %60 : vector<8x128xf32>
    %63 = math.tanh %62 : vector<8x128xf32>
    %cst_35 = arith.constant 5.000000e-01 : f32
    %64 = vector.broadcast %cst_35 : f32 to vector<8x128xf32>
    %65 = arith.mulf %64, %63 : vector<8x128xf32>
    %cst_36 = arith.constant 5.000000e-01 : f32
    %66 = vector.broadcast %cst_36 : f32 to vector<8x128xf32>
    %67 = arith.addf %65, %66 : vector<8x128xf32>
    %68 = vector.extract_strided_slice %59 {offsets = [0, 128], sizes = [8, 128], strides = [1, 1]} : vector<8x512xf32> to vector<8x128xf32>
    %cst_37 = arith.constant 5.000000e-01 : f32
    %69 = vector.broadcast %cst_37 : f32 to vector<8x128xf32>
    %70 = arith.mulf %69, %68 : vector<8x128xf32>
    %71 = math.tanh %70 : vector<8x128xf32>
    %cst_38 = arith.constant 5.000000e-01 : f32
    %72 = vector.broadcast %cst_38 : f32 to vector<8x128xf32>
    %73 = arith.mulf %72, %71 : vector<8x128xf32>
    %cst_39 = arith.constant 5.000000e-01 : f32
    %74 = vector.broadcast %cst_39 : f32 to vector<8x128xf32>
    %75 = arith.addf %73, %74 : vector<8x128xf32>
    %76 = vector.extract_strided_slice %59 {offsets = [0, 256], sizes = [8, 128], strides = [1, 1]} : vector<8x512xf32> to vector<8x128xf32>
    %77 = math.tanh %76 : vector<8x128xf32>
    %78 = vector.extract_strided_slice %59 {offsets = [0, 384], sizes = [8, 128], strides = [1, 1]} : vector<8x512xf32> to vector<8x128xf32>
    %cst_40 = arith.constant 5.000000e-01 : f32
    %79 = vector.broadcast %cst_40 : f32 to vector<8x128xf32>
    %80 = arith.mulf %79, %78 : vector<8x128xf32>
    %81 = math.tanh %80 : vector<8x128xf32>
    %cst_41 = arith.constant 5.000000e-01 : f32
    %82 = vector.broadcast %cst_41 : f32 to vector<8x128xf32>
    %83 = arith.mulf %82, %81 : vector<8x128xf32>
    %cst_42 = arith.constant 5.000000e-01 : f32
    %84 = vector.broadcast %cst_42 : f32 to vector<8x128xf32>
    %85 = arith.addf %83, %84 : vector<8x128xf32>
    %86 = arith.mulf %75, %48 : vector<8x128xf32>
    %87 = arith.mulf %67, %77 : vector<8x128xf32>
    %88 = arith.addf %86, %87 : vector<8x128xf32>
    %89 = math.tanh %88 : vector<8x128xf32>
    %90 = arith.mulf %85, %89 : vector<8x128xf32>
    %91 = arith.index_cast %c1_i32 : i32 to index
    %c0_43 = arith.constant 0 : index
    %c0_44 = arith.constant 0 : index
    %92 = vector.load %arg12[%91, %c0_43, %c0_44] : memref<8x8x128xf32, #tpu.memory_space<vmem>>, vector<1x8x128xf32>
    %93 = vector.shape_cast %92 : vector<1x8x128xf32> to vector<8x128xf32>
    %94 = vector.shape_cast %90 : vector<8x128xf32> to vector<1x8x128xf32>
    tpu.vector_store %arg12[%91, %c0_43, %c0_44], %94 {strides = array<i32>} : memref<8x8x128xf32, #tpu.memory_space<vmem>>, vector<1x8x128xf32>,
    %c2_i32 = arith.constant 2 : i32
    %95 = arith.index_cast %c2_i32 : i32 to index
    %c0_45 = arith.constant 0 : index
    %c0_46 = arith.constant 0 : index
    %96 = vector.load %arg11[%95, %c0_45, %c0_46] : memref<8x8x512xf32, #tpu.memory_space<vmem>>, vector<1x8x512xf32>
    %97 = vector.shape_cast %96 : vector<1x8x512xf32> to vector<8x512xf32>
    %cst_47 = arith.constant dense<0.000000e+00> : vector<8x512xf32>
    %98 = tpu.matmul %90, %12, %cst_47 {dimension_numbers = #tpu.dot_dimension_numbers<[1], [0], [0], [1], [0, 0, 1, 1], [], []>} : vector<8x128xf32>, vector<128x512xf32>, vector<8x512xf32> -> vector<8x512xf32>
    %99 = arith.addf %97, %98 : vector<8x512xf32>
    %100 = vector.extract_strided_slice %99 {offsets = [0, 0], sizes = [8, 128], strides = [1, 1]} : vector<8x512xf32> to vector<8x128xf32>
    %cst_48 = arith.constant 5.000000e-01 : f32
    %101 = vector.broadcast %cst_48 : f32 to vector<8x128xf32>
    %102 = arith.mulf %101, %100 : vector<8x128xf32>
    %103 = math.tanh %102 : vector<8x128xf32>
    %cst_49 = arith.constant 5.000000e-01 : f32
    %104 = vector.broadcast %cst_49 : f32 to vector<8x128xf32>
    %105 = arith.mulf %104, %103 : vector<8x128xf32>
    %cst_50 = arith.constant 5.000000e-01 : f32
    %106 = vector.broadcast %cst_50 : f32 to vector<8x128xf32>
    %107 = arith.addf %105, %106 : vector<8x128xf32>
    %108 = vector.extract_strided_slice %99 {offsets = [0, 128], sizes = [8, 128], strides = [1, 1]} : vector<8x512xf32> to vector<8x128xf32>
    %cst_51 = arith.constant 5.000000e-01 : f32
    %109 = vector.broadcast %cst_51 : f32 to vector<8x128xf32>
    %110 = arith.mulf %109, %108 : vector<8x128xf32>
    %111 = math.tanh %110 : vector<8x128xf32>
    %cst_52 = arith.constant 5.000000e-01 : f32
    %112 = vector.broadcast %cst_52 : f32 to vector<8x128xf32>
    %113 = arith.mulf %112, %111 : vector<8x128xf32>
    %cst_53 = arith.constant 5.000000e-01 : f32
    %114 = vector.broadcast %cst_53 : f32 to vector<8x128xf32>
    %115 = arith.addf %113, %114 : vector<8x128xf32>
    %116 = vector.extract_strided_slice %99 {offsets = [0, 256], sizes = [8, 128], strides = [1, 1]} : vector<8x512xf32> to vector<8x128xf32>
    %117 = math.tanh %116 : vector<8x128xf32>
    %118 = vector.extract_strided_slice %99 {offsets = [0, 384], sizes = [8, 128], strides = [1, 1]} : vector<8x512xf32> to vector<8x128xf32>
    %cst_54 = arith.constant 5.000000e-01 : f32
    %119 = vector.broadcast %cst_54 : f32 to vector<8x128xf32>
    %120 = arith.mulf %119, %118 : vector<8x128xf32>
    %121 = math.tanh %120 : vector<8x128xf32>
    %cst_55 = arith.constant 5.000000e-01 : f32
    %122 = vector.broadcast %cst_55 : f32 to vector<8x128xf32>
    %123 = arith.mulf %122, %121 : vector<8x128xf32>
    %cst_56 = arith.constant 5.000000e-01 : f32
    %124 = vector.broadcast %cst_56 : f32 to vector<8x128xf32>
    %125 = arith.addf %123, %124 : vector<8x128xf32>
    %126 = arith.mulf %115, %88 : vector<8x128xf32>
    %127 = arith.mulf %107, %117 : vector<8x128xf32>
    %128 = arith.addf %126, %127 : vector<8x128xf32>
    %129 = math.tanh %128 : vector<8x128xf32>
    %130 = arith.mulf %125, %129 : vector<8x128xf32>
    %131 = arith.index_cast %c2_i32 : i32 to index
    %c0_57 = arith.constant 0 : index
    %c0_58 = arith.constant 0 : index
    %132 = vector.load %arg12[%131, %c0_57, %c0_58] : memref<8x8x128xf32, #tpu.memory_space<vmem>>, vector<1x8x128xf32>
    %133 = vector.shape_cast %132 : vector<1x8x128xf32> to vector<8x128xf32>
    %134 = vector.shape_cast %130 : vector<8x128xf32> to vector<1x8x128xf32>
    tpu.vector_store %arg12[%131, %c0_57, %c0_58], %134 {strides = array<i32>} : memref<8x8x128xf32, #tpu.memory_space<vmem>>, vector<1x8x128xf32>,
    %c3_i32 = arith.constant 3 : i32
    %135 = arith.index_cast %c3_i32 : i32 to index
    %c0_59 = arith.constant 0 : index
    %c0_60 = arith.constant 0 : index
    %136 = vector.load %arg11[%135, %c0_59, %c0_60] : memref<8x8x512xf32, #tpu.memory_space<vmem>>, vector<1x8x512xf32>
    %137 = vector.shape_cast %136 : vector<1x8x512xf32> to vector<8x512xf32>
    %cst_61 = arith.constant dense<0.000000e+00> : vector<8x512xf32>
    %138 = tpu.matmul %130, %12, %cst_61 {dimension_numbers = #tpu.dot_dimension_numbers<[1], [0], [0], [1], [0, 0, 1, 1], [], []>} : vector<8x128xf32>, vector<128x512xf32>, vector<8x512xf32> -> vector<8x512xf32>
    %139 = arith.addf %137, %138 : vector<8x512xf32>
    %140 = vector.extract_strided_slice %139 {offsets = [0, 0], sizes = [8, 128], strides = [1, 1]} : vector<8x512xf32> to vector<8x128xf32>
    %cst_62 = arith.constant 5.000000e-01 : f32
    %141 = vector.broadcast %cst_62 : f32 to vector<8x128xf32>
    %142 = arith.mulf %141, %140 : vector<8x128xf32>
    %143 = math.tanh %142 : vector<8x128xf32>
    %cst_63 = arith.constant 5.000000e-01 : f32
    %144 = vector.broadcast %cst_63 : f32 to vector<8x128xf32>
    %145 = arith.mulf %144, %143 : vector<8x128xf32>
    %cst_64 = arith.constant 5.000000e-01 : f32
    %146 = vector.broadcast %cst_64 : f32 to vector<8x128xf32>
    %147 = arith.addf %145, %146 : vector<8x128xf32>
    %148 = vector.extract_strided_slice %139 {offsets = [0, 128], sizes = [8, 128], strides = [1, 1]} : vector<8x512xf32> to vector<8x128xf32>
    %cst_65 = arith.constant 5.000000e-01 : f32
    %149 = vector.broadcast %cst_65 : f32 to vector<8x128xf32>
    %150 = arith.mulf %149, %148 : vector<8x128xf32>
    %151 = math.tanh %150 : vector<8x128xf32>
    %cst_66 = arith.constant 5.000000e-01 : f32
    %152 = vector.broadcast %cst_66 : f32 to vector<8x128xf32>
    %153 = arith.mulf %152, %151 : vector<8x128xf32>
    %cst_67 = arith.constant 5.000000e-01 : f32
    %154 = vector.broadcast %cst_67 : f32 to vector<8x128xf32>
    %155 = arith.addf %153, %154 : vector<8x128xf32>
    %156 = vector.extract_strided_slice %139 {offsets = [0, 256], sizes = [8, 128], strides = [1, 1]} : vector<8x512xf32> to vector<8x128xf32>
    %157 = math.tanh %156 : vector<8x128xf32>
    %158 = vector.extract_strided_slice %139 {offsets = [0, 384], sizes = [8, 128], strides = [1, 1]} : vector<8x512xf32> to vector<8x128xf32>
    %cst_68 = arith.constant 5.000000e-01 : f32
    %159 = vector.broadcast %cst_68 : f32 to vector<8x128xf32>
    %160 = arith.mulf %159, %158 : vector<8x128xf32>
    %161 = math.tanh %160 : vector<8x128xf32>
    %cst_69 = arith.constant 5.000000e-01 : f32
    %162 = vector.broadcast %cst_69 : f32 to vector<8x128xf32>
    %163 = arith.mulf %162, %161 : vector<8x128xf32>
    %cst_70 = arith.constant 5.000000e-01 : f32
    %164 = vector.broadcast %cst_70 : f32 to vector<8x128xf32>
    %165 = arith.addf %163, %164 : vector<8x128xf32>
    %166 = arith.mulf %155, %128 : vector<8x128xf32>
    %167 = arith.mulf %147, %157 : vector<8x128xf32>
    %168 = arith.addf %166, %167 : vector<8x128xf32>
    %169 = math.tanh %168 : vector<8x128xf32>
    %170 = arith.mulf %165, %169 : vector<8x128xf32>
    %171 = arith.index_cast %c3_i32 : i32 to index
    %c0_71 = arith.constant 0 : index
    %c0_72 = arith.constant 0 : index
    %172 = vector.load %arg12[%171, %c0_71, %c0_72] : memref<8x8x128xf32, #tpu.memory_space<vmem>>, vector<1x8x128xf32>
    %173 = vector.shape_cast %172 : vector<1x8x128xf32> to vector<8x128xf32>
    %174 = vector.shape_cast %170 : vector<8x128xf32> to vector<1x8x128xf32>
    tpu.vector_store %arg12[%171, %c0_71, %c0_72], %174 {strides = array<i32>} : memref<8x8x128xf32, #tpu.memory_space<vmem>>, vector<1x8x128xf32>,
    %c4_i32 = arith.constant 4 : i32
    %175 = arith.index_cast %c4_i32 : i32 to index
    %c0_73 = arith.constant 0 : index
    %c0_74 = arith.constant 0 : index
    %176 = vector.load %arg11[%175, %c0_73, %c0_74] : memref<8x8x512xf32, #tpu.memory_space<vmem>>, vector<1x8x512xf32>
    %177 = vector.shape_cast %176 : vector<1x8x512xf32> to vector<8x512xf32>
    %cst_75 = arith.constant dense<0.000000e+00> : vector<8x512xf32>
    %178 = tpu.matmul %170, %12, %cst_75 {dimension_numbers = #tpu.dot_dimension_numbers<[1], [0], [0], [1], [0, 0, 1, 1], [], []>} : vector<8x128xf32>, vector<128x512xf32>, vector<8x512xf32> -> vector<8x512xf32>
    %179 = arith.addf %177, %178 : vector<8x512xf32>
    %180 = vector.extract_strided_slice %179 {offsets = [0, 0], sizes = [8, 128], strides = [1, 1]} : vector<8x512xf32> to vector<8x128xf32>
    %cst_76 = arith.constant 5.000000e-01 : f32
    %181 = vector.broadcast %cst_76 : f32 to vector<8x128xf32>
    %182 = arith.mulf %181, %180 : vector<8x128xf32>
    %183 = math.tanh %182 : vector<8x128xf32>
    %cst_77 = arith.constant 5.000000e-01 : f32
    %184 = vector.broadcast %cst_77 : f32 to vector<8x128xf32>
    %185 = arith.mulf %184, %183 : vector<8x128xf32>
    %cst_78 = arith.constant 5.000000e-01 : f32
    %186 = vector.broadcast %cst_78 : f32 to vector<8x128xf32>
    %187 = arith.addf %185, %186 : vector<8x128xf32>
    %188 = vector.extract_strided_slice %179 {offsets = [0, 128], sizes = [8, 128], strides = [1, 1]} : vector<8x512xf32> to vector<8x128xf32>
    %cst_79 = arith.constant 5.000000e-01 : f32
    %189 = vector.broadcast %cst_79 : f32 to vector<8x128xf32>
    %190 = arith.mulf %189, %188 : vector<8x128xf32>
    %191 = math.tanh %190 : vector<8x128xf32>
    %cst_80 = arith.constant 5.000000e-01 : f32
    %192 = vector.broadcast %cst_80 : f32 to vector<8x128xf32>
    %193 = arith.mulf %192, %191 : vector<8x128xf32>
    %cst_81 = arith.constant 5.000000e-01 : f32
    %194 = vector.broadcast %cst_81 : f32 to vector<8x128xf32>
    %195 = arith.addf %193, %194 : vector<8x128xf32>
    %196 = vector.extract_strided_slice %179 {offsets = [0, 256], sizes = [8, 128], strides = [1, 1]} : vector<8x512xf32> to vector<8x128xf32>
    %197 = math.tanh %196 : vector<8x128xf32>
    %198 = vector.extract_strided_slice %179 {offsets = [0, 384], sizes = [8, 128], strides = [1, 1]} : vector<8x512xf32> to vector<8x128xf32>
    %cst_82 = arith.constant 5.000000e-01 : f32
    %199 = vector.broadcast %cst_82 : f32 to vector<8x128xf32>
    %200 = arith.mulf %199, %198 : vector<8x128xf32>
    %201 = math.tanh %200 : vector<8x128xf32>
    %cst_83 = arith.constant 5.000000e-01 : f32
    %202 = vector.broadcast %cst_83 : f32 to vector<8x128xf32>
    %203 = arith.mulf %202, %201 : vector<8x128xf32>
    %cst_84 = arith.constant 5.000000e-01 : f32
    %204 = vector.broadcast %cst_84 : f32 to vector<8x128xf32>
    %205 = arith.addf %203, %204 : vector<8x128xf32>
    %206 = arith.mulf %195, %168 : vector<8x128xf32>
    %207 = arith.mulf %187, %197 : vector<8x128xf32>
    %208 = arith.addf %206, %207 : vector<8x128xf32>
    %209 = math.tanh %208 : vector<8x128xf32>
    %210 = arith.mulf %205, %209 : vector<8x128xf32>
    %211 = arith.index_cast %c4_i32 : i32 to index
    %c0_85 = arith.constant 0 : index
    %c0_86 = arith.constant 0 : index
    %212 = vector.load %arg12[%211, %c0_85, %c0_86] : memref<8x8x128xf32, #tpu.memory_space<vmem>>, vector<1x8x128xf32>
    %213 = vector.shape_cast %212 : vector<1x8x128xf32> to vector<8x128xf32>
    %214 = vector.shape_cast %210 : vector<8x128xf32> to vector<1x8x128xf32>
    tpu.vector_store %arg12[%211, %c0_85, %c0_86], %214 {strides = array<i32>} : memref<8x8x128xf32, #tpu.memory_space<vmem>>, vector<1x8x128xf32>,
    %c5_i32 = arith.constant 5 : i32
    %215 = arith.index_cast %c5_i32 : i32 to index
    %c0_87 = arith.constant 0 : index
    %c0_88 = arith.constant 0 : index
    %216 = vector.load %arg11[%215, %c0_87, %c0_88] : memref<8x8x512xf32, #tpu.memory_space<vmem>>, vector<1x8x512xf32>
    %217 = vector.shape_cast %216 : vector<1x8x512xf32> to vector<8x512xf32>
    %cst_89 = arith.constant dense<0.000000e+00> : vector<8x512xf32>
    %218 = tpu.matmul %210, %12, %cst_89 {dimension_numbers = #tpu.dot_dimension_numbers<[1], [0], [0], [1], [0, 0, 1, 1], [], []>} : vector<8x128xf32>, vector<128x512xf32>, vector<8x512xf32> -> vector<8x512xf32>
    %219 = arith.addf %217, %218 : vector<8x512xf32>
    %220 = vector.extract_strided_slice %219 {offsets = [0, 0], sizes = [8, 128], strides = [1, 1]} : vector<8x512xf32> to vector<8x128xf32>
    %cst_90 = arith.constant 5.000000e-01 : f32
    %221 = vector.broadcast %cst_90 : f32 to vector<8x128xf32>
    %222 = arith.mulf %221, %220 : vector<8x128xf32>
    %223 = math.tanh %222 : vector<8x128xf32>
    %cst_91 = arith.constant 5.000000e-01 : f32
    %224 = vector.broadcast %cst_91 : f32 to vector<8x128xf32>
    %225 = arith.mulf %224, %223 : vector<8x128xf32>
    %cst_92 = arith.constant 5.000000e-01 : f32
    %226 = vector.broadcast %cst_92 : f32 to vector<8x128xf32>
    %227 = arith.addf %225, %226 : vector<8x128xf32>
    %228 = vector.extract_strided_slice %219 {offsets = [0, 128], sizes = [8, 128], strides = [1, 1]} : vector<8x512xf32> to vector<8x128xf32>
    %cst_93 = arith.constant 5.000000e-01 : f32
    %229 = vector.broadcast %cst_93 : f32 to vector<8x128xf32>
    %230 = arith.mulf %229, %228 : vector<8x128xf32>
    %231 = math.tanh %230 : vector<8x128xf32>
    %cst_94 = arith.constant 5.000000e-01 : f32
    %232 = vector.broadcast %cst_94 : f32 to vector<8x128xf32>
    %233 = arith.mulf %232, %231 : vector<8x128xf32>
    %cst_95 = arith.constant 5.000000e-01 : f32
    %234 = vector.broadcast %cst_95 : f32 to vector<8x128xf32>
    %235 = arith.addf %233, %234 : vector<8x128xf32>
    %236 = vector.extract_strided_slice %219 {offsets = [0, 256], sizes = [8, 128], strides = [1, 1]} : vector<8x512xf32> to vector<8x128xf32>
    %237 = math.tanh %236 : vector<8x128xf32>
    %238 = vector.extract_strided_slice %219 {offsets = [0, 384], sizes = [8, 128], strides = [1, 1]} : vector<8x512xf32> to vector<8x128xf32>
    %cst_96 = arith.constant 5.000000e-01 : f32
    %239 = vector.broadcast %cst_96 : f32 to vector<8x128xf32>
    %240 = arith.mulf %239, %238 : vector<8x128xf32>
    %241 = math.tanh %240 : vector<8x128xf32>
    %cst_97 = arith.constant 5.000000e-01 : f32
    %242 = vector.broadcast %cst_97 : f32 to vector<8x128xf32>
    %243 = arith.mulf %242, %241 : vector<8x128xf32>
    %cst_98 = arith.constant 5.000000e-01 : f32
    %244 = vector.broadcast %cst_98 : f32 to vector<8x128xf32>
    %245 = arith.addf %243, %244 : vector<8x128xf32>
    %246 = arith.mulf %235, %208 : vector<8x128xf32>
    %247 = arith.mulf %227, %237 : vector<8x128xf32>
    %248 = arith.addf %246, %247 : vector<8x128xf32>
    %249 = math.tanh %248 : vector<8x128xf32>
    %250 = arith.mulf %245, %249 : vector<8x128xf32>
    %251 = arith.index_cast %c5_i32 : i32 to index
    %c0_99 = arith.constant 0 : index
    %c0_100 = arith.constant 0 : index
    %252 = vector.load %arg12[%251, %c0_99, %c0_100] : memref<8x8x128xf32, #tpu.memory_space<vmem>>, vector<1x8x128xf32>
    %253 = vector.shape_cast %252 : vector<1x8x128xf32> to vector<8x128xf32>
    %254 = vector.shape_cast %250 : vector<8x128xf32> to vector<1x8x128xf32>
    tpu.vector_store %arg12[%251, %c0_99, %c0_100], %254 {strides = array<i32>} : memref<8x8x128xf32, #tpu.memory_space<vmem>>, vector<1x8x128xf32>,
    %c6_i32 = arith.constant 6 : i32
    %255 = arith.index_cast %c6_i32 : i32 to index
    %c0_101 = arith.constant 0 : index
    %c0_102 = arith.constant 0 : index
    %256 = vector.load %arg11[%255, %c0_101, %c0_102] : memref<8x8x512xf32, #tpu.memory_space<vmem>>, vector<1x8x512xf32>
    %257 = vector.shape_cast %256 : vector<1x8x512xf32> to vector<8x512xf32>
    %cst_103 = arith.constant dense<0.000000e+00> : vector<8x512xf32>
    %258 = tpu.matmul %250, %12, %cst_103 {dimension_numbers = #tpu.dot_dimension_numbers<[1], [0], [0], [1], [0, 0, 1, 1], [], []>} : vector<8x128xf32>, vector<128x512xf32>, vector<8x512xf32> -> vector<8x512xf32>
    %259 = arith.addf %257, %258 : vector<8x512xf32>
    %260 = vector.extract_strided_slice %259 {offsets = [0, 0], sizes = [8, 128], strides = [1, 1]} : vector<8x512xf32> to vector<8x128xf32>
    %cst_104 = arith.constant 5.000000e-01 : f32
    %261 = vector.broadcast %cst_104 : f32 to vector<8x128xf32>
    %262 = arith.mulf %261, %260 : vector<8x128xf32>
    %263 = math.tanh %262 : vector<8x128xf32>
    %cst_105 = arith.constant 5.000000e-01 : f32
    %264 = vector.broadcast %cst_105 : f32 to vector<8x128xf32>
    %265 = arith.mulf %264, %263 : vector<8x128xf32>
    %cst_106 = arith.constant 5.000000e-01 : f32
    %266 = vector.broadcast %cst_106 : f32 to vector<8x128xf32>
    %267 = arith.addf %265, %266 : vector<8x128xf32>
    %268 = vector.extract_strided_slice %259 {offsets = [0, 128], sizes = [8, 128], strides = [1, 1]} : vector<8x512xf32> to vector<8x128xf32>
    %cst_107 = arith.constant 5.000000e-01 : f32
    %269 = vector.broadcast %cst_107 : f32 to vector<8x128xf32>
    %270 = arith.mulf %269, %268 : vector<8x128xf32>
    %271 = math.tanh %270 : vector<8x128xf32>
    %cst_108 = arith.constant 5.000000e-01 : f32
    %272 = vector.broadcast %cst_108 : f32 to vector<8x128xf32>
    %273 = arith.mulf %272, %271 : vector<8x128xf32>
    %cst_109 = arith.constant 5.000000e-01 : f32
    %274 = vector.broadcast %cst_109 : f32 to vector<8x128xf32>
    %275 = arith.addf %273, %274 : vector<8x128xf32>
    %276 = vector.extract_strided_slice %259 {offsets = [0, 256], sizes = [8, 128], strides = [1, 1]} : vector<8x512xf32> to vector<8x128xf32>
    %277 = math.tanh %276 : vector<8x128xf32>
    %278 = vector.extract_strided_slice %259 {offsets = [0, 384], sizes = [8, 128], strides = [1, 1]} : vector<8x512xf32> to vector<8x128xf32>
    %cst_110 = arith.constant 5.000000e-01 : f32
    %279 = vector.broadcast %cst_110 : f32 to vector<8x128xf32>
    %280 = arith.mulf %279, %278 : vector<8x128xf32>
    %281 = math.tanh %280 : vector<8x128xf32>
    %cst_111 = arith.constant 5.000000e-01 : f32
    %282 = vector.broadcast %cst_111 : f32 to vector<8x128xf32>
    %283 = arith.mulf %282, %281 : vector<8x128xf32>
    %cst_112 = arith.constant 5.000000e-01 : f32
    %284 = vector.broadcast %cst_112 : f32 to vector<8x128xf32>
    %285 = arith.addf %283, %284 : vector<8x128xf32>
    %286 = arith.mulf %275, %248 : vector<8x128xf32>
    %287 = arith.mulf %267, %277 : vector<8x128xf32>
    %288 = arith.addf %286, %287 : vector<8x128xf32>
    %289 = math.tanh %288 : vector<8x128xf32>
    %290 = arith.mulf %285, %289 : vector<8x128xf32>
    %291 = arith.index_cast %c6_i32 : i32 to index
    %c0_113 = arith.constant 0 : index
    %c0_114 = arith.constant 0 : index
    %292 = vector.load %arg12[%291, %c0_113, %c0_114] : memref<8x8x128xf32, #tpu.memory_space<vmem>>, vector<1x8x128xf32>
    %293 = vector.shape_cast %292 : vector<1x8x128xf32> to vector<8x128xf32>
    %294 = vector.shape_cast %290 : vector<8x128xf32> to vector<1x8x128xf32>
    tpu.vector_store %arg12[%291, %c0_113, %c0_114], %294 {strides = array<i32>} : memref<8x8x128xf32, #tpu.memory_space<vmem>>, vector<1x8x128xf32>,
    %c7_i32 = arith.constant 7 : i32
    %295 = arith.index_cast %c7_i32 : i32 to index
    %c0_115 = arith.constant 0 : index
    %c0_116 = arith.constant 0 : index
    %296 = vector.load %arg11[%295, %c0_115, %c0_116] : memref<8x8x512xf32, #tpu.memory_space<vmem>>, vector<1x8x512xf32>
    %297 = vector.shape_cast %296 : vector<1x8x512xf32> to vector<8x512xf32>
    %cst_117 = arith.constant dense<0.000000e+00> : vector<8x512xf32>
    %298 = tpu.matmul %290, %12, %cst_117 {dimension_numbers = #tpu.dot_dimension_numbers<[1], [0], [0], [1], [0, 0, 1, 1], [], []>} : vector<8x128xf32>, vector<128x512xf32>, vector<8x512xf32> -> vector<8x512xf32>
    %299 = arith.addf %297, %298 : vector<8x512xf32>
    %300 = vector.extract_strided_slice %299 {offsets = [0, 0], sizes = [8, 128], strides = [1, 1]} : vector<8x512xf32> to vector<8x128xf32>
    %cst_118 = arith.constant 5.000000e-01 : f32
    %301 = vector.broadcast %cst_118 : f32 to vector<8x128xf32>
    %302 = arith.mulf %301, %300 : vector<8x128xf32>
    %303 = math.tanh %302 : vector<8x128xf32>
    %cst_119 = arith.constant 5.000000e-01 : f32
    %304 = vector.broadcast %cst_119 : f32 to vector<8x128xf32>
    %305 = arith.mulf %304, %303 : vector<8x128xf32>
    %cst_120 = arith.constant 5.000000e-01 : f32
    %306 = vector.broadcast %cst_120 : f32 to vector<8x128xf32>
    %307 = arith.addf %305, %306 : vector<8x128xf32>
    %308 = vector.extract_strided_slice %299 {offsets = [0, 128], sizes = [8, 128], strides = [1, 1]} : vector<8x512xf32> to vector<8x128xf32>
    %cst_121 = arith.constant 5.000000e-01 : f32
    %309 = vector.broadcast %cst_121 : f32 to vector<8x128xf32>
    %310 = arith.mulf %309, %308 : vector<8x128xf32>
    %311 = math.tanh %310 : vector<8x128xf32>
    %cst_122 = arith.constant 5.000000e-01 : f32
    %312 = vector.broadcast %cst_122 : f32 to vector<8x128xf32>
    %313 = arith.mulf %312, %311 : vector<8x128xf32>
    %cst_123 = arith.constant 5.000000e-01 : f32
    %314 = vector.broadcast %cst_123 : f32 to vector<8x128xf32>
    %315 = arith.addf %313, %314 : vector<8x128xf32>
    %316 = vector.extract_strided_slice %299 {offsets = [0, 256], sizes = [8, 128], strides = [1, 1]} : vector<8x512xf32> to vector<8x128xf32>
    %317 = math.tanh %316 : vector<8x128xf32>
    %318 = vector.extract_strided_slice %299 {offsets = [0, 384], sizes = [8, 128], strides = [1, 1]} : vector<8x512xf32> to vector<8x128xf32>
    %cst_124 = arith.constant 5.000000e-01 : f32
    %319 = vector.broadcast %cst_124 : f32 to vector<8x128xf32>
    %320 = arith.mulf %319, %318 : vector<8x128xf32>
    %321 = math.tanh %320 : vector<8x128xf32>
    %cst_125 = arith.constant 5.000000e-01 : f32
    %322 = vector.broadcast %cst_125 : f32 to vector<8x128xf32>
    %323 = arith.mulf %322, %321 : vector<8x128xf32>
    %cst_126 = arith.constant 5.000000e-01 : f32
    %324 = vector.broadcast %cst_126 : f32 to vector<8x128xf32>
    %325 = arith.addf %323, %324 : vector<8x128xf32>
    %326 = arith.mulf %315, %288 : vector<8x128xf32>
    %327 = arith.mulf %307, %317 : vector<8x128xf32>
    %328 = arith.addf %326, %327 : vector<8x128xf32>
    %329 = math.tanh %328 : vector<8x128xf32>
    %330 = arith.mulf %325, %329 : vector<8x128xf32>
    %331 = arith.index_cast %c7_i32 : i32 to index
    %c0_127 = arith.constant 0 : index
    %c0_128 = arith.constant 0 : index
    %332 = vector.load %arg12[%331, %c0_127, %c0_128] : memref<8x8x128xf32, #tpu.memory_space<vmem>>, vector<1x8x128xf32>
    %333 = vector.shape_cast %332 : vector<1x8x128xf32> to vector<8x128xf32>
    %334 = vector.shape_cast %330 : vector<8x128xf32> to vector<1x8x128xf32>
    tpu.vector_store %arg12[%331, %c0_127, %c0_128], %334 {strides = array<i32>} : memref<8x8x128xf32, #tpu.memory_space<vmem>>, vector<1x8x128xf32>,
    %c8_i32 = arith.constant 8 : i32
    %c0_129 = arith.constant 0 : index
    %c0_130 = arith.constant 0 : index
    %335 = vector.load %arg9[%c0_129, %c0_130] : memref<8x128xf32, #tpu.memory_space<vmem>>, vector<8x128xf32>
    tpu.vector_store %arg9[%c0_129, %c0_130], %330 {strides = array<i32>} : memref<8x128xf32, #tpu.memory_space<vmem>>, vector<8x128xf32>,
    %c0_131 = arith.constant 0 : index
    %c0_132 = arith.constant 0 : index
    %336 = vector.load %arg10[%c0_131, %c0_132] : memref<8x128xf32, #tpu.memory_space<vmem>>, vector<8x128xf32>
    tpu.vector_store %arg10[%c0_131, %c0_132], %328 {strides = array<i32>} : memref<8x128xf32, #tpu.memory_space<vmem>>, vector<8x128xf32>,
    %c0_133 = arith.constant 0 : index
    %c0_134 = arith.constant 0 : index
    %c0_135 = arith.constant 0 : index
    %337 = vector.load %arg12[%c0_133, %c0_134, %c0_135] : memref<8x8x128xf32, #tpu.memory_space<vmem>>, vector<8x8x128xf32>
    %338 = vector.shape_cast %337 : vector<8x8x128xf32> to vector<64x128xf32>
    %c0_136 = arith.constant 0 : index
    %c0_137 = arith.constant 0 : index
    %339 = vector.load %arg6[%c0_136, %c0_137] : memref<128x128xf32, #tpu.memory_space<vmem>>, vector<128x128xf32>
    %cst_138 = arith.constant dense<0.000000e+00> : vector<64x128xf32>
    %340 = tpu.matmul %338, %339, %cst_138 {dimension_numbers = #tpu.dot_dimension_numbers<[1], [0], [0], [1], [0, 0, 1, 1], [], []>} : vector<64x128xf32>, vector<128x128xf32>, vector<64x128xf32> -> vector<64x128xf32>
    %c0_139 = arith.constant 0 : index
    %c0_140 = arith.constant 0 : index
    %341 = vector.load %arg7[%c0_139, %c0_140] : memref<1x128xf32, #tpu.memory_space<vmem>>, vector<1x128xf32>
    %342 = vector.broadcast %341 : vector<1x128xf32> to vector<64x128xf32>
    %343 = arith.addf %340, %342 : vector<64x128xf32>
    %344 = vector.shape_cast %343 : vector<64x128xf32> to vector<8x8x128xf32>
    %c0_141 = arith.constant 0 : index
    %c0_142 = arith.constant 0 : index
    %c0_143 = arith.constant 0 : index
    %345 = vector.load %arg8[%c0_141, %c0_142, %c0_143] : memref<8x8x128xf32, #tpu.memory_space<vmem>>, vector<8x8x128xf32>
    tpu.vector_store %arg8[%c0_141, %c0_142, %c0_143], %344 {strides = array<i32>} : memref<8x8x128xf32, #tpu.memory_space<vmem>>, vector<8x8x128xf32>,
    return
  }
  func.func @transform_0(%arg0: i32, %arg1: i32) -> (i32, i32, i32) {
    %c0_i32 = arith.constant 0 : i32
    %c0_i32_0 = arith.constant 0 : i32
    return %arg1, %arg0, %c0_i32 : i32, i32, i32
  }
  func.func @transform_1(%arg0: i32, %arg1: i32) -> (i32, i32) {
    %c0_i32 = arith.constant 0 : i32
    %c0_i32_0 = arith.constant 0 : i32
    %c0_i32_1 = arith.constant 0 : i32
    return %c0_i32, %c0_i32_0 : i32, i32
  }
  func.func @transform_2(%arg0: i32, %arg1: i32) -> (i32, i32) {
    %c0_i32 = arith.constant 0 : i32
    %c0_i32_0 = arith.constant 0 : i32
    %c0_i32_1 = arith.constant 0 : i32
    return %c0_i32, %c0_i32_0 : i32, i32
  }
  func.func @transform_3(%arg0: i32, %arg1: i32) -> (i32, i32) {
    %c0_i32 = arith.constant 0 : i32
    %c0_i32_0 = arith.constant 0 : i32
    %c0_i32_1 = arith.constant 0 : i32
    return %c0_i32, %c0_i32_0 : i32, i32
  }
  func.func @transform_4(%arg0: i32, %arg1: i32) -> (i32, i32) {
    %c0_i32 = arith.constant 0 : i32
    %c0_i32_0 = arith.constant 0 : i32
    %c0_i32_1 = arith.constant 0 : i32
    return %c0_i32, %c0_i32_0 : i32, i32
  }
  func.func @transform_5(%arg0: i32, %arg1: i32) -> (i32, i32) {
    %c0_i32 = arith.constant 0 : i32
    %c0_i32_0 = arith.constant 0 : i32
    %c0_i32_1 = arith.constant 0 : i32
    return %c0_i32, %c0_i32_0 : i32, i32
  }
  func.func @transform_6(%arg0: i32, %arg1: i32) -> (i32, i32, i32) {
    %c0_i32 = arith.constant 0 : i32
    %c0_i32_0 = arith.constant 0 : i32
    return %arg1, %arg0, %c0_i32 : i32, i32, i32
  }
}

module attributes {stable_mosaic.version = 11 : i64} {
  func.func @_lstm_chunk_kernel(%arg0: i32, %arg1: i32, %arg2: memref<8x8x8xf32, #tpu.memory_space<vmem>>, %arg3: memref<8x512xf32, #tpu.memory_space<vmem>>, %arg4: memref<128x512xf32, #tpu.memory_space<vmem>>, %arg5: memref<1x512xf32, #tpu.memory_space<vmem>>, %arg6: memref<8x8x128xf32, #tpu.memory_space<vmem>>, %arg7: memref<8x128xf32, #tpu.memory_space<vmem>>, %arg8: memref<8x128xf32, #tpu.memory_space<vmem>>, %arg9: memref<8x8x512xf32, #tpu.memory_space<vmem>>) attributes {dimension_semantics = [#tpu.dimension_semantics<parallel>, #tpu.dimension_semantics<arbitrary>], iteration_bounds = array<i64: 1, 1>, scalar_prefetch = 0 : i64, scratch_operands = 3 : i64, tpu.core_type = #tpu.core_type<tc>, window_params = [{transform_indices = @transform_0, window_bounds = array<i64: 8, 8, 8>}, {pipeline_mode = #tpu.pipeline_mode<synchronous>, transform_indices = @transform_1, window_bounds = array<i64: 8, 512>}, {pipeline_mode = #tpu.pipeline_mode<synchronous>, transform_indices = @transform_2, window_bounds = array<i64: 128, 512>}, {pipeline_mode = #tpu.pipeline_mode<synchronous>, transform_indices = @transform_3, window_bounds = array<i64: 1, 512>}, {transform_indices = @transform_4, window_bounds = array<i64: 8, 8, 128>}]} {
    %c0_i32 = arith.constant 0 : i32
    %0 = arith.cmpi eq, %arg1, %c0_i32 : i32
    %1 = arith.extui %0 : i1 to i32
    %c0_i32_0 = arith.constant 0 : i32
    %2 = arith.cmpi ne, %1, %c0_i32_0 : i32
    scf.if %2 {
      %cst_133 = arith.constant 0.000000e+00 : f32
      %337 = vector.broadcast %cst_133 : f32 to vector<8x128xf32>
      %c0_134 = arith.constant 0 : index
      %c0_135 = arith.constant 0 : index
      %338 = vector.load %arg7[%c0_134, %c0_135] : memref<8x128xf32, #tpu.memory_space<vmem>>, vector<8x128xf32>
      tpu.vector_store %arg7[%c0_134, %c0_135], %337 {strides = array<i32>} : memref<8x128xf32, #tpu.memory_space<vmem>>, vector<8x128xf32>,
      %cst_136 = arith.constant 0.000000e+00 : f32
      %339 = vector.broadcast %cst_136 : f32 to vector<8x128xf32>
      %c0_137 = arith.constant 0 : index
      %c0_138 = arith.constant 0 : index
      %340 = vector.load %arg8[%c0_137, %c0_138] : memref<8x128xf32, #tpu.memory_space<vmem>>, vector<8x128xf32>
      tpu.vector_store %arg8[%c0_137, %c0_138], %339 {strides = array<i32>} : memref<8x128xf32, #tpu.memory_space<vmem>>, vector<8x128xf32>,
    } else {
    }
    %c0 = arith.constant 0 : index
    %c0_1 = arith.constant 0 : index
    %c0_2 = arith.constant 0 : index
    %3 = vector.load %arg2[%c0, %c0_1, %c0_2] : memref<8x8x8xf32, #tpu.memory_space<vmem>>, vector<8x8x8xf32>
    %4 = vector.shape_cast %3 : vector<8x8x8xf32> to vector<64x8xf32>
    %c0_3 = arith.constant 0 : index
    %c0_4 = arith.constant 0 : index
    %5 = vector.load %arg3[%c0_3, %c0_4] : memref<8x512xf32, #tpu.memory_space<vmem>>, vector<8x512xf32>
    %cst = arith.constant dense<0.000000e+00> : vector<64x512xf32>
    %6 = tpu.matmul %4, %5, %cst {dimension_numbers = #tpu.dot_dimension_numbers<[1], [0], [0], [1], [0, 0, 1, 1], [], []>} : vector<64x8xf32>, vector<8x512xf32>, vector<64x512xf32> -> vector<64x512xf32>
    %c0_5 = arith.constant 0 : index
    %c0_6 = arith.constant 0 : index
    %7 = vector.load %arg5[%c0_5, %c0_6] : memref<1x512xf32, #tpu.memory_space<vmem>>, vector<1x512xf32>
    %8 = vector.broadcast %7 : vector<1x512xf32> to vector<64x512xf32>
    %9 = arith.addf %6, %8 : vector<64x512xf32>
    %10 = vector.shape_cast %9 : vector<64x512xf32> to vector<8x8x512xf32>
    %c0_7 = arith.constant 0 : index
    %c0_8 = arith.constant 0 : index
    %c0_9 = arith.constant 0 : index
    %11 = vector.load %arg9[%c0_7, %c0_8, %c0_9] : memref<8x8x512xf32, #tpu.memory_space<vmem>>, vector<8x8x512xf32>
    tpu.vector_store %arg9[%c0_7, %c0_8, %c0_9], %10 {strides = array<i32>} : memref<8x8x512xf32, #tpu.memory_space<vmem>>, vector<8x8x512xf32>,
    %c0_10 = arith.constant 0 : index
    %c0_11 = arith.constant 0 : index
    %12 = vector.load %arg4[%c0_10, %c0_11] : memref<128x512xf32, #tpu.memory_space<vmem>>, vector<128x512xf32>
    %c0_12 = arith.constant 0 : index
    %c0_13 = arith.constant 0 : index
    %13 = vector.load %arg7[%c0_12, %c0_13] : memref<8x128xf32, #tpu.memory_space<vmem>>, vector<8x128xf32>
    %c0_14 = arith.constant 0 : index
    %c0_15 = arith.constant 0 : index
    %14 = vector.load %arg8[%c0_14, %c0_15] : memref<8x128xf32, #tpu.memory_space<vmem>>, vector<8x128xf32>
    %c0_i32_16 = arith.constant 0 : i32
    %15 = arith.index_cast %c0_i32_16 : i32 to index
    %c0_17 = arith.constant 0 : index
    %c0_18 = arith.constant 0 : index
    %16 = vector.load %arg9[%15, %c0_17, %c0_18] : memref<8x8x512xf32, #tpu.memory_space<vmem>>, vector<1x8x512xf32>
    %17 = vector.shape_cast %16 : vector<1x8x512xf32> to vector<8x512xf32>
    %cst_19 = arith.constant dense<0.000000e+00> : vector<8x512xf32>
    %18 = tpu.matmul %13, %12, %cst_19 {dimension_numbers = #tpu.dot_dimension_numbers<[1], [0], [0], [1], [0, 0, 1, 1], [], []>} : vector<8x128xf32>, vector<128x512xf32>, vector<8x512xf32> -> vector<8x512xf32>
    %19 = arith.addf %17, %18 : vector<8x512xf32>
    %20 = vector.extract_strided_slice %19 {offsets = [0, 0], sizes = [8, 128], strides = [1, 1]} : vector<8x512xf32> to vector<8x128xf32>
    %cst_20 = arith.constant 5.000000e-01 : f32
    %21 = vector.broadcast %cst_20 : f32 to vector<8x128xf32>
    %22 = arith.mulf %21, %20 : vector<8x128xf32>
    %23 = math.tanh %22 : vector<8x128xf32>
    %cst_21 = arith.constant 5.000000e-01 : f32
    %24 = vector.broadcast %cst_21 : f32 to vector<8x128xf32>
    %25 = arith.mulf %24, %23 : vector<8x128xf32>
    %cst_22 = arith.constant 5.000000e-01 : f32
    %26 = vector.broadcast %cst_22 : f32 to vector<8x128xf32>
    %27 = arith.addf %25, %26 : vector<8x128xf32>
    %28 = vector.extract_strided_slice %19 {offsets = [0, 128], sizes = [8, 128], strides = [1, 1]} : vector<8x512xf32> to vector<8x128xf32>
    %cst_23 = arith.constant 5.000000e-01 : f32
    %29 = vector.broadcast %cst_23 : f32 to vector<8x128xf32>
    %30 = arith.mulf %29, %28 : vector<8x128xf32>
    %31 = math.tanh %30 : vector<8x128xf32>
    %cst_24 = arith.constant 5.000000e-01 : f32
    %32 = vector.broadcast %cst_24 : f32 to vector<8x128xf32>
    %33 = arith.mulf %32, %31 : vector<8x128xf32>
    %cst_25 = arith.constant 5.000000e-01 : f32
    %34 = vector.broadcast %cst_25 : f32 to vector<8x128xf32>
    %35 = arith.addf %33, %34 : vector<8x128xf32>
    %36 = vector.extract_strided_slice %19 {offsets = [0, 256], sizes = [8, 128], strides = [1, 1]} : vector<8x512xf32> to vector<8x128xf32>
    %37 = math.tanh %36 : vector<8x128xf32>
    %38 = vector.extract_strided_slice %19 {offsets = [0, 384], sizes = [8, 128], strides = [1, 1]} : vector<8x512xf32> to vector<8x128xf32>
    %cst_26 = arith.constant 5.000000e-01 : f32
    %39 = vector.broadcast %cst_26 : f32 to vector<8x128xf32>
    %40 = arith.mulf %39, %38 : vector<8x128xf32>
    %41 = math.tanh %40 : vector<8x128xf32>
    %cst_27 = arith.constant 5.000000e-01 : f32
    %42 = vector.broadcast %cst_27 : f32 to vector<8x128xf32>
    %43 = arith.mulf %42, %41 : vector<8x128xf32>
    %cst_28 = arith.constant 5.000000e-01 : f32
    %44 = vector.broadcast %cst_28 : f32 to vector<8x128xf32>
    %45 = arith.addf %43, %44 : vector<8x128xf32>
    %46 = arith.mulf %35, %14 : vector<8x128xf32>
    %47 = arith.mulf %27, %37 : vector<8x128xf32>
    %48 = arith.addf %46, %47 : vector<8x128xf32>
    %49 = math.tanh %48 : vector<8x128xf32>
    %50 = arith.mulf %45, %49 : vector<8x128xf32>
    %51 = arith.index_cast %c0_i32_16 : i32 to index
    %c0_29 = arith.constant 0 : index
    %c0_30 = arith.constant 0 : index
    %52 = vector.load %arg6[%51, %c0_29, %c0_30] : memref<8x8x128xf32, #tpu.memory_space<vmem>>, vector<1x8x128xf32>
    %53 = vector.shape_cast %52 : vector<1x8x128xf32> to vector<8x128xf32>
    %54 = vector.shape_cast %50 : vector<8x128xf32> to vector<1x8x128xf32>
    tpu.vector_store %arg6[%51, %c0_29, %c0_30], %54 {strides = array<i32>} : memref<8x8x128xf32, #tpu.memory_space<vmem>>, vector<1x8x128xf32>,
    %c1_i32 = arith.constant 1 : i32
    %55 = arith.index_cast %c1_i32 : i32 to index
    %c0_31 = arith.constant 0 : index
    %c0_32 = arith.constant 0 : index
    %56 = vector.load %arg9[%55, %c0_31, %c0_32] : memref<8x8x512xf32, #tpu.memory_space<vmem>>, vector<1x8x512xf32>
    %57 = vector.shape_cast %56 : vector<1x8x512xf32> to vector<8x512xf32>
    %cst_33 = arith.constant dense<0.000000e+00> : vector<8x512xf32>
    %58 = tpu.matmul %50, %12, %cst_33 {dimension_numbers = #tpu.dot_dimension_numbers<[1], [0], [0], [1], [0, 0, 1, 1], [], []>} : vector<8x128xf32>, vector<128x512xf32>, vector<8x512xf32> -> vector<8x512xf32>
    %59 = arith.addf %57, %58 : vector<8x512xf32>
    %60 = vector.extract_strided_slice %59 {offsets = [0, 0], sizes = [8, 128], strides = [1, 1]} : vector<8x512xf32> to vector<8x128xf32>
    %cst_34 = arith.constant 5.000000e-01 : f32
    %61 = vector.broadcast %cst_34 : f32 to vector<8x128xf32>
    %62 = arith.mulf %61, %60 : vector<8x128xf32>
    %63 = math.tanh %62 : vector<8x128xf32>
    %cst_35 = arith.constant 5.000000e-01 : f32
    %64 = vector.broadcast %cst_35 : f32 to vector<8x128xf32>
    %65 = arith.mulf %64, %63 : vector<8x128xf32>
    %cst_36 = arith.constant 5.000000e-01 : f32
    %66 = vector.broadcast %cst_36 : f32 to vector<8x128xf32>
    %67 = arith.addf %65, %66 : vector<8x128xf32>
    %68 = vector.extract_strided_slice %59 {offsets = [0, 128], sizes = [8, 128], strides = [1, 1]} : vector<8x512xf32> to vector<8x128xf32>
    %cst_37 = arith.constant 5.000000e-01 : f32
    %69 = vector.broadcast %cst_37 : f32 to vector<8x128xf32>
    %70 = arith.mulf %69, %68 : vector<8x128xf32>
    %71 = math.tanh %70 : vector<8x128xf32>
    %cst_38 = arith.constant 5.000000e-01 : f32
    %72 = vector.broadcast %cst_38 : f32 to vector<8x128xf32>
    %73 = arith.mulf %72, %71 : vector<8x128xf32>
    %cst_39 = arith.constant 5.000000e-01 : f32
    %74 = vector.broadcast %cst_39 : f32 to vector<8x128xf32>
    %75 = arith.addf %73, %74 : vector<8x128xf32>
    %76 = vector.extract_strided_slice %59 {offsets = [0, 256], sizes = [8, 128], strides = [1, 1]} : vector<8x512xf32> to vector<8x128xf32>
    %77 = math.tanh %76 : vector<8x128xf32>
    %78 = vector.extract_strided_slice %59 {offsets = [0, 384], sizes = [8, 128], strides = [1, 1]} : vector<8x512xf32> to vector<8x128xf32>
    %cst_40 = arith.constant 5.000000e-01 : f32
    %79 = vector.broadcast %cst_40 : f32 to vector<8x128xf32>
    %80 = arith.mulf %79, %78 : vector<8x128xf32>
    %81 = math.tanh %80 : vector<8x128xf32>
    %cst_41 = arith.constant 5.000000e-01 : f32
    %82 = vector.broadcast %cst_41 : f32 to vector<8x128xf32>
    %83 = arith.mulf %82, %81 : vector<8x128xf32>
    %cst_42 = arith.constant 5.000000e-01 : f32
    %84 = vector.broadcast %cst_42 : f32 to vector<8x128xf32>
    %85 = arith.addf %83, %84 : vector<8x128xf32>
    %86 = arith.mulf %75, %48 : vector<8x128xf32>
    %87 = arith.mulf %67, %77 : vector<8x128xf32>
    %88 = arith.addf %86, %87 : vector<8x128xf32>
    %89 = math.tanh %88 : vector<8x128xf32>
    %90 = arith.mulf %85, %89 : vector<8x128xf32>
    %91 = arith.index_cast %c1_i32 : i32 to index
    %c0_43 = arith.constant 0 : index
    %c0_44 = arith.constant 0 : index
    %92 = vector.load %arg6[%91, %c0_43, %c0_44] : memref<8x8x128xf32, #tpu.memory_space<vmem>>, vector<1x8x128xf32>
    %93 = vector.shape_cast %92 : vector<1x8x128xf32> to vector<8x128xf32>
    %94 = vector.shape_cast %90 : vector<8x128xf32> to vector<1x8x128xf32>
    tpu.vector_store %arg6[%91, %c0_43, %c0_44], %94 {strides = array<i32>} : memref<8x8x128xf32, #tpu.memory_space<vmem>>, vector<1x8x128xf32>,
    %c2_i32 = arith.constant 2 : i32
    %95 = arith.index_cast %c2_i32 : i32 to index
    %c0_45 = arith.constant 0 : index
    %c0_46 = arith.constant 0 : index
    %96 = vector.load %arg9[%95, %c0_45, %c0_46] : memref<8x8x512xf32, #tpu.memory_space<vmem>>, vector<1x8x512xf32>
    %97 = vector.shape_cast %96 : vector<1x8x512xf32> to vector<8x512xf32>
    %cst_47 = arith.constant dense<0.000000e+00> : vector<8x512xf32>
    %98 = tpu.matmul %90, %12, %cst_47 {dimension_numbers = #tpu.dot_dimension_numbers<[1], [0], [0], [1], [0, 0, 1, 1], [], []>} : vector<8x128xf32>, vector<128x512xf32>, vector<8x512xf32> -> vector<8x512xf32>
    %99 = arith.addf %97, %98 : vector<8x512xf32>
    %100 = vector.extract_strided_slice %99 {offsets = [0, 0], sizes = [8, 128], strides = [1, 1]} : vector<8x512xf32> to vector<8x128xf32>
    %cst_48 = arith.constant 5.000000e-01 : f32
    %101 = vector.broadcast %cst_48 : f32 to vector<8x128xf32>
    %102 = arith.mulf %101, %100 : vector<8x128xf32>
    %103 = math.tanh %102 : vector<8x128xf32>
    %cst_49 = arith.constant 5.000000e-01 : f32
    %104 = vector.broadcast %cst_49 : f32 to vector<8x128xf32>
    %105 = arith.mulf %104, %103 : vector<8x128xf32>
    %cst_50 = arith.constant 5.000000e-01 : f32
    %106 = vector.broadcast %cst_50 : f32 to vector<8x128xf32>
    %107 = arith.addf %105, %106 : vector<8x128xf32>
    %108 = vector.extract_strided_slice %99 {offsets = [0, 128], sizes = [8, 128], strides = [1, 1]} : vector<8x512xf32> to vector<8x128xf32>
    %cst_51 = arith.constant 5.000000e-01 : f32
    %109 = vector.broadcast %cst_51 : f32 to vector<8x128xf32>
    %110 = arith.mulf %109, %108 : vector<8x128xf32>
    %111 = math.tanh %110 : vector<8x128xf32>
    %cst_52 = arith.constant 5.000000e-01 : f32
    %112 = vector.broadcast %cst_52 : f32 to vector<8x128xf32>
    %113 = arith.mulf %112, %111 : vector<8x128xf32>
    %cst_53 = arith.constant 5.000000e-01 : f32
    %114 = vector.broadcast %cst_53 : f32 to vector<8x128xf32>
    %115 = arith.addf %113, %114 : vector<8x128xf32>
    %116 = vector.extract_strided_slice %99 {offsets = [0, 256], sizes = [8, 128], strides = [1, 1]} : vector<8x512xf32> to vector<8x128xf32>
    %117 = math.tanh %116 : vector<8x128xf32>
    %118 = vector.extract_strided_slice %99 {offsets = [0, 384], sizes = [8, 128], strides = [1, 1]} : vector<8x512xf32> to vector<8x128xf32>
    %cst_54 = arith.constant 5.000000e-01 : f32
    %119 = vector.broadcast %cst_54 : f32 to vector<8x128xf32>
    %120 = arith.mulf %119, %118 : vector<8x128xf32>
    %121 = math.tanh %120 : vector<8x128xf32>
    %cst_55 = arith.constant 5.000000e-01 : f32
    %122 = vector.broadcast %cst_55 : f32 to vector<8x128xf32>
    %123 = arith.mulf %122, %121 : vector<8x128xf32>
    %cst_56 = arith.constant 5.000000e-01 : f32
    %124 = vector.broadcast %cst_56 : f32 to vector<8x128xf32>
    %125 = arith.addf %123, %124 : vector<8x128xf32>
    %126 = arith.mulf %115, %88 : vector<8x128xf32>
    %127 = arith.mulf %107, %117 : vector<8x128xf32>
    %128 = arith.addf %126, %127 : vector<8x128xf32>
    %129 = math.tanh %128 : vector<8x128xf32>
    %130 = arith.mulf %125, %129 : vector<8x128xf32>
    %131 = arith.index_cast %c2_i32 : i32 to index
    %c0_57 = arith.constant 0 : index
    %c0_58 = arith.constant 0 : index
    %132 = vector.load %arg6[%131, %c0_57, %c0_58] : memref<8x8x128xf32, #tpu.memory_space<vmem>>, vector<1x8x128xf32>
    %133 = vector.shape_cast %132 : vector<1x8x128xf32> to vector<8x128xf32>
    %134 = vector.shape_cast %130 : vector<8x128xf32> to vector<1x8x128xf32>
    tpu.vector_store %arg6[%131, %c0_57, %c0_58], %134 {strides = array<i32>} : memref<8x8x128xf32, #tpu.memory_space<vmem>>, vector<1x8x128xf32>,
    %c3_i32 = arith.constant 3 : i32
    %135 = arith.index_cast %c3_i32 : i32 to index
    %c0_59 = arith.constant 0 : index
    %c0_60 = arith.constant 0 : index
    %136 = vector.load %arg9[%135, %c0_59, %c0_60] : memref<8x8x512xf32, #tpu.memory_space<vmem>>, vector<1x8x512xf32>
    %137 = vector.shape_cast %136 : vector<1x8x512xf32> to vector<8x512xf32>
    %cst_61 = arith.constant dense<0.000000e+00> : vector<8x512xf32>
    %138 = tpu.matmul %130, %12, %cst_61 {dimension_numbers = #tpu.dot_dimension_numbers<[1], [0], [0], [1], [0, 0, 1, 1], [], []>} : vector<8x128xf32>, vector<128x512xf32>, vector<8x512xf32> -> vector<8x512xf32>
    %139 = arith.addf %137, %138 : vector<8x512xf32>
    %140 = vector.extract_strided_slice %139 {offsets = [0, 0], sizes = [8, 128], strides = [1, 1]} : vector<8x512xf32> to vector<8x128xf32>
    %cst_62 = arith.constant 5.000000e-01 : f32
    %141 = vector.broadcast %cst_62 : f32 to vector<8x128xf32>
    %142 = arith.mulf %141, %140 : vector<8x128xf32>
    %143 = math.tanh %142 : vector<8x128xf32>
    %cst_63 = arith.constant 5.000000e-01 : f32
    %144 = vector.broadcast %cst_63 : f32 to vector<8x128xf32>
    %145 = arith.mulf %144, %143 : vector<8x128xf32>
    %cst_64 = arith.constant 5.000000e-01 : f32
    %146 = vector.broadcast %cst_64 : f32 to vector<8x128xf32>
    %147 = arith.addf %145, %146 : vector<8x128xf32>
    %148 = vector.extract_strided_slice %139 {offsets = [0, 128], sizes = [8, 128], strides = [1, 1]} : vector<8x512xf32> to vector<8x128xf32>
    %cst_65 = arith.constant 5.000000e-01 : f32
    %149 = vector.broadcast %cst_65 : f32 to vector<8x128xf32>
    %150 = arith.mulf %149, %148 : vector<8x128xf32>
    %151 = math.tanh %150 : vector<8x128xf32>
    %cst_66 = arith.constant 5.000000e-01 : f32
    %152 = vector.broadcast %cst_66 : f32 to vector<8x128xf32>
    %153 = arith.mulf %152, %151 : vector<8x128xf32>
    %cst_67 = arith.constant 5.000000e-01 : f32
    %154 = vector.broadcast %cst_67 : f32 to vector<8x128xf32>
    %155 = arith.addf %153, %154 : vector<8x128xf32>
    %156 = vector.extract_strided_slice %139 {offsets = [0, 256], sizes = [8, 128], strides = [1, 1]} : vector<8x512xf32> to vector<8x128xf32>
    %157 = math.tanh %156 : vector<8x128xf32>
    %158 = vector.extract_strided_slice %139 {offsets = [0, 384], sizes = [8, 128], strides = [1, 1]} : vector<8x512xf32> to vector<8x128xf32>
    %cst_68 = arith.constant 5.000000e-01 : f32
    %159 = vector.broadcast %cst_68 : f32 to vector<8x128xf32>
    %160 = arith.mulf %159, %158 : vector<8x128xf32>
    %161 = math.tanh %160 : vector<8x128xf32>
    %cst_69 = arith.constant 5.000000e-01 : f32
    %162 = vector.broadcast %cst_69 : f32 to vector<8x128xf32>
    %163 = arith.mulf %162, %161 : vector<8x128xf32>
    %cst_70 = arith.constant 5.000000e-01 : f32
    %164 = vector.broadcast %cst_70 : f32 to vector<8x128xf32>
    %165 = arith.addf %163, %164 : vector<8x128xf32>
    %166 = arith.mulf %155, %128 : vector<8x128xf32>
    %167 = arith.mulf %147, %157 : vector<8x128xf32>
    %168 = arith.addf %166, %167 : vector<8x128xf32>
    %169 = math.tanh %168 : vector<8x128xf32>
    %170 = arith.mulf %165, %169 : vector<8x128xf32>
    %171 = arith.index_cast %c3_i32 : i32 to index
    %c0_71 = arith.constant 0 : index
    %c0_72 = arith.constant 0 : index
    %172 = vector.load %arg6[%171, %c0_71, %c0_72] : memref<8x8x128xf32, #tpu.memory_space<vmem>>, vector<1x8x128xf32>
    %173 = vector.shape_cast %172 : vector<1x8x128xf32> to vector<8x128xf32>
    %174 = vector.shape_cast %170 : vector<8x128xf32> to vector<1x8x128xf32>
    tpu.vector_store %arg6[%171, %c0_71, %c0_72], %174 {strides = array<i32>} : memref<8x8x128xf32, #tpu.memory_space<vmem>>, vector<1x8x128xf32>,
    %c4_i32 = arith.constant 4 : i32
    %175 = arith.index_cast %c4_i32 : i32 to index
    %c0_73 = arith.constant 0 : index
    %c0_74 = arith.constant 0 : index
    %176 = vector.load %arg9[%175, %c0_73, %c0_74] : memref<8x8x512xf32, #tpu.memory_space<vmem>>, vector<1x8x512xf32>
    %177 = vector.shape_cast %176 : vector<1x8x512xf32> to vector<8x512xf32>
    %cst_75 = arith.constant dense<0.000000e+00> : vector<8x512xf32>
    %178 = tpu.matmul %170, %12, %cst_75 {dimension_numbers = #tpu.dot_dimension_numbers<[1], [0], [0], [1], [0, 0, 1, 1], [], []>} : vector<8x128xf32>, vector<128x512xf32>, vector<8x512xf32> -> vector<8x512xf32>
    %179 = arith.addf %177, %178 : vector<8x512xf32>
    %180 = vector.extract_strided_slice %179 {offsets = [0, 0], sizes = [8, 128], strides = [1, 1]} : vector<8x512xf32> to vector<8x128xf32>
    %cst_76 = arith.constant 5.000000e-01 : f32
    %181 = vector.broadcast %cst_76 : f32 to vector<8x128xf32>
    %182 = arith.mulf %181, %180 : vector<8x128xf32>
    %183 = math.tanh %182 : vector<8x128xf32>
    %cst_77 = arith.constant 5.000000e-01 : f32
    %184 = vector.broadcast %cst_77 : f32 to vector<8x128xf32>
    %185 = arith.mulf %184, %183 : vector<8x128xf32>
    %cst_78 = arith.constant 5.000000e-01 : f32
    %186 = vector.broadcast %cst_78 : f32 to vector<8x128xf32>
    %187 = arith.addf %185, %186 : vector<8x128xf32>
    %188 = vector.extract_strided_slice %179 {offsets = [0, 128], sizes = [8, 128], strides = [1, 1]} : vector<8x512xf32> to vector<8x128xf32>
    %cst_79 = arith.constant 5.000000e-01 : f32
    %189 = vector.broadcast %cst_79 : f32 to vector<8x128xf32>
    %190 = arith.mulf %189, %188 : vector<8x128xf32>
    %191 = math.tanh %190 : vector<8x128xf32>
    %cst_80 = arith.constant 5.000000e-01 : f32
    %192 = vector.broadcast %cst_80 : f32 to vector<8x128xf32>
    %193 = arith.mulf %192, %191 : vector<8x128xf32>
    %cst_81 = arith.constant 5.000000e-01 : f32
    %194 = vector.broadcast %cst_81 : f32 to vector<8x128xf32>
    %195 = arith.addf %193, %194 : vector<8x128xf32>
    %196 = vector.extract_strided_slice %179 {offsets = [0, 256], sizes = [8, 128], strides = [1, 1]} : vector<8x512xf32> to vector<8x128xf32>
    %197 = math.tanh %196 : vector<8x128xf32>
    %198 = vector.extract_strided_slice %179 {offsets = [0, 384], sizes = [8, 128], strides = [1, 1]} : vector<8x512xf32> to vector<8x128xf32>
    %cst_82 = arith.constant 5.000000e-01 : f32
    %199 = vector.broadcast %cst_82 : f32 to vector<8x128xf32>
    %200 = arith.mulf %199, %198 : vector<8x128xf32>
    %201 = math.tanh %200 : vector<8x128xf32>
    %cst_83 = arith.constant 5.000000e-01 : f32
    %202 = vector.broadcast %cst_83 : f32 to vector<8x128xf32>
    %203 = arith.mulf %202, %201 : vector<8x128xf32>
    %cst_84 = arith.constant 5.000000e-01 : f32
    %204 = vector.broadcast %cst_84 : f32 to vector<8x128xf32>
    %205 = arith.addf %203, %204 : vector<8x128xf32>
    %206 = arith.mulf %195, %168 : vector<8x128xf32>
    %207 = arith.mulf %187, %197 : vector<8x128xf32>
    %208 = arith.addf %206, %207 : vector<8x128xf32>
    %209 = math.tanh %208 : vector<8x128xf32>
    %210 = arith.mulf %205, %209 : vector<8x128xf32>
    %211 = arith.index_cast %c4_i32 : i32 to index
    %c0_85 = arith.constant 0 : index
    %c0_86 = arith.constant 0 : index
    %212 = vector.load %arg6[%211, %c0_85, %c0_86] : memref<8x8x128xf32, #tpu.memory_space<vmem>>, vector<1x8x128xf32>
    %213 = vector.shape_cast %212 : vector<1x8x128xf32> to vector<8x128xf32>
    %214 = vector.shape_cast %210 : vector<8x128xf32> to vector<1x8x128xf32>
    tpu.vector_store %arg6[%211, %c0_85, %c0_86], %214 {strides = array<i32>} : memref<8x8x128xf32, #tpu.memory_space<vmem>>, vector<1x8x128xf32>,
    %c5_i32 = arith.constant 5 : i32
    %215 = arith.index_cast %c5_i32 : i32 to index
    %c0_87 = arith.constant 0 : index
    %c0_88 = arith.constant 0 : index
    %216 = vector.load %arg9[%215, %c0_87, %c0_88] : memref<8x8x512xf32, #tpu.memory_space<vmem>>, vector<1x8x512xf32>
    %217 = vector.shape_cast %216 : vector<1x8x512xf32> to vector<8x512xf32>
    %cst_89 = arith.constant dense<0.000000e+00> : vector<8x512xf32>
    %218 = tpu.matmul %210, %12, %cst_89 {dimension_numbers = #tpu.dot_dimension_numbers<[1], [0], [0], [1], [0, 0, 1, 1], [], []>} : vector<8x128xf32>, vector<128x512xf32>, vector<8x512xf32> -> vector<8x512xf32>
    %219 = arith.addf %217, %218 : vector<8x512xf32>
    %220 = vector.extract_strided_slice %219 {offsets = [0, 0], sizes = [8, 128], strides = [1, 1]} : vector<8x512xf32> to vector<8x128xf32>
    %cst_90 = arith.constant 5.000000e-01 : f32
    %221 = vector.broadcast %cst_90 : f32 to vector<8x128xf32>
    %222 = arith.mulf %221, %220 : vector<8x128xf32>
    %223 = math.tanh %222 : vector<8x128xf32>
    %cst_91 = arith.constant 5.000000e-01 : f32
    %224 = vector.broadcast %cst_91 : f32 to vector<8x128xf32>
    %225 = arith.mulf %224, %223 : vector<8x128xf32>
    %cst_92 = arith.constant 5.000000e-01 : f32
    %226 = vector.broadcast %cst_92 : f32 to vector<8x128xf32>
    %227 = arith.addf %225, %226 : vector<8x128xf32>
    %228 = vector.extract_strided_slice %219 {offsets = [0, 128], sizes = [8, 128], strides = [1, 1]} : vector<8x512xf32> to vector<8x128xf32>
    %cst_93 = arith.constant 5.000000e-01 : f32
    %229 = vector.broadcast %cst_93 : f32 to vector<8x128xf32>
    %230 = arith.mulf %229, %228 : vector<8x128xf32>
    %231 = math.tanh %230 : vector<8x128xf32>
    %cst_94 = arith.constant 5.000000e-01 : f32
    %232 = vector.broadcast %cst_94 : f32 to vector<8x128xf32>
    %233 = arith.mulf %232, %231 : vector<8x128xf32>
    %cst_95 = arith.constant 5.000000e-01 : f32
    %234 = vector.broadcast %cst_95 : f32 to vector<8x128xf32>
    %235 = arith.addf %233, %234 : vector<8x128xf32>
    %236 = vector.extract_strided_slice %219 {offsets = [0, 256], sizes = [8, 128], strides = [1, 1]} : vector<8x512xf32> to vector<8x128xf32>
    %237 = math.tanh %236 : vector<8x128xf32>
    %238 = vector.extract_strided_slice %219 {offsets = [0, 384], sizes = [8, 128], strides = [1, 1]} : vector<8x512xf32> to vector<8x128xf32>
    %cst_96 = arith.constant 5.000000e-01 : f32
    %239 = vector.broadcast %cst_96 : f32 to vector<8x128xf32>
    %240 = arith.mulf %239, %238 : vector<8x128xf32>
    %241 = math.tanh %240 : vector<8x128xf32>
    %cst_97 = arith.constant 5.000000e-01 : f32
    %242 = vector.broadcast %cst_97 : f32 to vector<8x128xf32>
    %243 = arith.mulf %242, %241 : vector<8x128xf32>
    %cst_98 = arith.constant 5.000000e-01 : f32
    %244 = vector.broadcast %cst_98 : f32 to vector<8x128xf32>
    %245 = arith.addf %243, %244 : vector<8x128xf32>
    %246 = arith.mulf %235, %208 : vector<8x128xf32>
    %247 = arith.mulf %227, %237 : vector<8x128xf32>
    %248 = arith.addf %246, %247 : vector<8x128xf32>
    %249 = math.tanh %248 : vector<8x128xf32>
    %250 = arith.mulf %245, %249 : vector<8x128xf32>
    %251 = arith.index_cast %c5_i32 : i32 to index
    %c0_99 = arith.constant 0 : index
    %c0_100 = arith.constant 0 : index
    %252 = vector.load %arg6[%251, %c0_99, %c0_100] : memref<8x8x128xf32, #tpu.memory_space<vmem>>, vector<1x8x128xf32>
    %253 = vector.shape_cast %252 : vector<1x8x128xf32> to vector<8x128xf32>
    %254 = vector.shape_cast %250 : vector<8x128xf32> to vector<1x8x128xf32>
    tpu.vector_store %arg6[%251, %c0_99, %c0_100], %254 {strides = array<i32>} : memref<8x8x128xf32, #tpu.memory_space<vmem>>, vector<1x8x128xf32>,
    %c6_i32 = arith.constant 6 : i32
    %255 = arith.index_cast %c6_i32 : i32 to index
    %c0_101 = arith.constant 0 : index
    %c0_102 = arith.constant 0 : index
    %256 = vector.load %arg9[%255, %c0_101, %c0_102] : memref<8x8x512xf32, #tpu.memory_space<vmem>>, vector<1x8x512xf32>
    %257 = vector.shape_cast %256 : vector<1x8x512xf32> to vector<8x512xf32>
    %cst_103 = arith.constant dense<0.000000e+00> : vector<8x512xf32>
    %258 = tpu.matmul %250, %12, %cst_103 {dimension_numbers = #tpu.dot_dimension_numbers<[1], [0], [0], [1], [0, 0, 1, 1], [], []>} : vector<8x128xf32>, vector<128x512xf32>, vector<8x512xf32> -> vector<8x512xf32>
    %259 = arith.addf %257, %258 : vector<8x512xf32>
    %260 = vector.extract_strided_slice %259 {offsets = [0, 0], sizes = [8, 128], strides = [1, 1]} : vector<8x512xf32> to vector<8x128xf32>
    %cst_104 = arith.constant 5.000000e-01 : f32
    %261 = vector.broadcast %cst_104 : f32 to vector<8x128xf32>
    %262 = arith.mulf %261, %260 : vector<8x128xf32>
    %263 = math.tanh %262 : vector<8x128xf32>
    %cst_105 = arith.constant 5.000000e-01 : f32
    %264 = vector.broadcast %cst_105 : f32 to vector<8x128xf32>
    %265 = arith.mulf %264, %263 : vector<8x128xf32>
    %cst_106 = arith.constant 5.000000e-01 : f32
    %266 = vector.broadcast %cst_106 : f32 to vector<8x128xf32>
    %267 = arith.addf %265, %266 : vector<8x128xf32>
    %268 = vector.extract_strided_slice %259 {offsets = [0, 128], sizes = [8, 128], strides = [1, 1]} : vector<8x512xf32> to vector<8x128xf32>
    %cst_107 = arith.constant 5.000000e-01 : f32
    %269 = vector.broadcast %cst_107 : f32 to vector<8x128xf32>
    %270 = arith.mulf %269, %268 : vector<8x128xf32>
    %271 = math.tanh %270 : vector<8x128xf32>
    %cst_108 = arith.constant 5.000000e-01 : f32
    %272 = vector.broadcast %cst_108 : f32 to vector<8x128xf32>
    %273 = arith.mulf %272, %271 : vector<8x128xf32>
    %cst_109 = arith.constant 5.000000e-01 : f32
    %274 = vector.broadcast %cst_109 : f32 to vector<8x128xf32>
    %275 = arith.addf %273, %274 : vector<8x128xf32>
    %276 = vector.extract_strided_slice %259 {offsets = [0, 256], sizes = [8, 128], strides = [1, 1]} : vector<8x512xf32> to vector<8x128xf32>
    %277 = math.tanh %276 : vector<8x128xf32>
    %278 = vector.extract_strided_slice %259 {offsets = [0, 384], sizes = [8, 128], strides = [1, 1]} : vector<8x512xf32> to vector<8x128xf32>
    %cst_110 = arith.constant 5.000000e-01 : f32
    %279 = vector.broadcast %cst_110 : f32 to vector<8x128xf32>
    %280 = arith.mulf %279, %278 : vector<8x128xf32>
    %281 = math.tanh %280 : vector<8x128xf32>
    %cst_111 = arith.constant 5.000000e-01 : f32
    %282 = vector.broadcast %cst_111 : f32 to vector<8x128xf32>
    %283 = arith.mulf %282, %281 : vector<8x128xf32>
    %cst_112 = arith.constant 5.000000e-01 : f32
    %284 = vector.broadcast %cst_112 : f32 to vector<8x128xf32>
    %285 = arith.addf %283, %284 : vector<8x128xf32>
    %286 = arith.mulf %275, %248 : vector<8x128xf32>
    %287 = arith.mulf %267, %277 : vector<8x128xf32>
    %288 = arith.addf %286, %287 : vector<8x128xf32>
    %289 = math.tanh %288 : vector<8x128xf32>
    %290 = arith.mulf %285, %289 : vector<8x128xf32>
    %291 = arith.index_cast %c6_i32 : i32 to index
    %c0_113 = arith.constant 0 : index
    %c0_114 = arith.constant 0 : index
    %292 = vector.load %arg6[%291, %c0_113, %c0_114] : memref<8x8x128xf32, #tpu.memory_space<vmem>>, vector<1x8x128xf32>
    %293 = vector.shape_cast %292 : vector<1x8x128xf32> to vector<8x128xf32>
    %294 = vector.shape_cast %290 : vector<8x128xf32> to vector<1x8x128xf32>
    tpu.vector_store %arg6[%291, %c0_113, %c0_114], %294 {strides = array<i32>} : memref<8x8x128xf32, #tpu.memory_space<vmem>>, vector<1x8x128xf32>,
    %c7_i32 = arith.constant 7 : i32
    %295 = arith.index_cast %c7_i32 : i32 to index
    %c0_115 = arith.constant 0 : index
    %c0_116 = arith.constant 0 : index
    %296 = vector.load %arg9[%295, %c0_115, %c0_116] : memref<8x8x512xf32, #tpu.memory_space<vmem>>, vector<1x8x512xf32>
    %297 = vector.shape_cast %296 : vector<1x8x512xf32> to vector<8x512xf32>
    %cst_117 = arith.constant dense<0.000000e+00> : vector<8x512xf32>
    %298 = tpu.matmul %290, %12, %cst_117 {dimension_numbers = #tpu.dot_dimension_numbers<[1], [0], [0], [1], [0, 0, 1, 1], [], []>} : vector<8x128xf32>, vector<128x512xf32>, vector<8x512xf32> -> vector<8x512xf32>
    %299 = arith.addf %297, %298 : vector<8x512xf32>
    %300 = vector.extract_strided_slice %299 {offsets = [0, 0], sizes = [8, 128], strides = [1, 1]} : vector<8x512xf32> to vector<8x128xf32>
    %cst_118 = arith.constant 5.000000e-01 : f32
    %301 = vector.broadcast %cst_118 : f32 to vector<8x128xf32>
    %302 = arith.mulf %301, %300 : vector<8x128xf32>
    %303 = math.tanh %302 : vector<8x128xf32>
    %cst_119 = arith.constant 5.000000e-01 : f32
    %304 = vector.broadcast %cst_119 : f32 to vector<8x128xf32>
    %305 = arith.mulf %304, %303 : vector<8x128xf32>
    %cst_120 = arith.constant 5.000000e-01 : f32
    %306 = vector.broadcast %cst_120 : f32 to vector<8x128xf32>
    %307 = arith.addf %305, %306 : vector<8x128xf32>
    %308 = vector.extract_strided_slice %299 {offsets = [0, 128], sizes = [8, 128], strides = [1, 1]} : vector<8x512xf32> to vector<8x128xf32>
    %cst_121 = arith.constant 5.000000e-01 : f32
    %309 = vector.broadcast %cst_121 : f32 to vector<8x128xf32>
    %310 = arith.mulf %309, %308 : vector<8x128xf32>
    %311 = math.tanh %310 : vector<8x128xf32>
    %cst_122 = arith.constant 5.000000e-01 : f32
    %312 = vector.broadcast %cst_122 : f32 to vector<8x128xf32>
    %313 = arith.mulf %312, %311 : vector<8x128xf32>
    %cst_123 = arith.constant 5.000000e-01 : f32
    %314 = vector.broadcast %cst_123 : f32 to vector<8x128xf32>
    %315 = arith.addf %313, %314 : vector<8x128xf32>
    %316 = vector.extract_strided_slice %299 {offsets = [0, 256], sizes = [8, 128], strides = [1, 1]} : vector<8x512xf32> to vector<8x128xf32>
    %317 = math.tanh %316 : vector<8x128xf32>
    %318 = vector.extract_strided_slice %299 {offsets = [0, 384], sizes = [8, 128], strides = [1, 1]} : vector<8x512xf32> to vector<8x128xf32>
    %cst_124 = arith.constant 5.000000e-01 : f32
    %319 = vector.broadcast %cst_124 : f32 to vector<8x128xf32>
    %320 = arith.mulf %319, %318 : vector<8x128xf32>
    %321 = math.tanh %320 : vector<8x128xf32>
    %cst_125 = arith.constant 5.000000e-01 : f32
    %322 = vector.broadcast %cst_125 : f32 to vector<8x128xf32>
    %323 = arith.mulf %322, %321 : vector<8x128xf32>
    %cst_126 = arith.constant 5.000000e-01 : f32
    %324 = vector.broadcast %cst_126 : f32 to vector<8x128xf32>
    %325 = arith.addf %323, %324 : vector<8x128xf32>
    %326 = arith.mulf %315, %288 : vector<8x128xf32>
    %327 = arith.mulf %307, %317 : vector<8x128xf32>
    %328 = arith.addf %326, %327 : vector<8x128xf32>
    %329 = math.tanh %328 : vector<8x128xf32>
    %330 = arith.mulf %325, %329 : vector<8x128xf32>
    %331 = arith.index_cast %c7_i32 : i32 to index
    %c0_127 = arith.constant 0 : index
    %c0_128 = arith.constant 0 : index
    %332 = vector.load %arg6[%331, %c0_127, %c0_128] : memref<8x8x128xf32, #tpu.memory_space<vmem>>, vector<1x8x128xf32>
    %333 = vector.shape_cast %332 : vector<1x8x128xf32> to vector<8x128xf32>
    %334 = vector.shape_cast %330 : vector<8x128xf32> to vector<1x8x128xf32>
    tpu.vector_store %arg6[%331, %c0_127, %c0_128], %334 {strides = array<i32>} : memref<8x8x128xf32, #tpu.memory_space<vmem>>, vector<1x8x128xf32>,
    %c8_i32 = arith.constant 8 : i32
    %c0_129 = arith.constant 0 : index
    %c0_130 = arith.constant 0 : index
    %335 = vector.load %arg7[%c0_129, %c0_130] : memref<8x128xf32, #tpu.memory_space<vmem>>, vector<8x128xf32>
    tpu.vector_store %arg7[%c0_129, %c0_130], %330 {strides = array<i32>} : memref<8x128xf32, #tpu.memory_space<vmem>>, vector<8x128xf32>,
    %c0_131 = arith.constant 0 : index
    %c0_132 = arith.constant 0 : index
    %336 = vector.load %arg8[%c0_131, %c0_132] : memref<8x128xf32, #tpu.memory_space<vmem>>, vector<8x128xf32>
    tpu.vector_store %arg8[%c0_131, %c0_132], %328 {strides = array<i32>} : memref<8x128xf32, #tpu.memory_space<vmem>>, vector<8x128xf32>,
    return
  }
  func.func @transform_0(%arg0: i32, %arg1: i32) -> (i32, i32, i32) {
    %c0_i32 = arith.constant 0 : i32
    %c0_i32_0 = arith.constant 0 : i32
    return %arg1, %arg0, %c0_i32 : i32, i32, i32
  }
  func.func @transform_1(%arg0: i32, %arg1: i32) -> (i32, i32) {
    %c0_i32 = arith.constant 0 : i32
    %c0_i32_0 = arith.constant 0 : i32
    %c0_i32_1 = arith.constant 0 : i32
    return %c0_i32, %c0_i32_0 : i32, i32
  }
  func.func @transform_2(%arg0: i32, %arg1: i32) -> (i32, i32) {
    %c0_i32 = arith.constant 0 : i32
    %c0_i32_0 = arith.constant 0 : i32
    %c0_i32_1 = arith.constant 0 : i32
    return %c0_i32, %c0_i32_0 : i32, i32
  }
  func.func @transform_3(%arg0: i32, %arg1: i32) -> (i32, i32) {
    %c0_i32 = arith.constant 0 : i32
    %c0_i32_0 = arith.constant 0 : i32
    %c0_i32_1 = arith.constant 0 : i32
    return %c0_i32, %c0_i32_0 : i32, i32
  }
  func.func @transform_4(%arg0: i32, %arg1: i32) -> (i32, i32, i32) {
    %c0_i32 = arith.constant 0 : i32
    %c0_i32_0 = arith.constant 0 : i32
    return %arg1, %arg0, %c0_i32 : i32, i32, i32
  }
}

</mosaic_0001>

<llo_original>
// kernel: multi_output_lstm_forward.3
$region0: #{multi_output_lstm_forward.3}
  #allocation0 [shape = 'u32[]', space=smem, size = 0x4, offset = 0x4, fixed_abs, tag = 'smem constant byte address 0x4 - core index']
  #allocation1 [shape = 'u32[144,128]{1,0:T(1,128)}', space=vmem, size = 0x12000, scoped, tag = 'internal scratch']
  #allocation2 [shape = 'f32[8,128]{1,0:T(8,128)}', space=vmem, size = 0x1000, scoped, tag = 'scratch operand']
  #allocation3 [shape = 'f32[8,128]{1,0:T(8,128)}', space=vmem, size = 0x1000, scoped, tag = 'scratch operand']
  #allocation4 [shape = 'f32[8,8,512]{2,1,0:T(8,128)}', space=vmem, size = 0x20000, scoped, tag = 'scratch operand']
  #allocation5 [shape = 'f32[8,8,128]{2,1,0:T(8,128)}', space=vmem, size = 0x8000, scoped, tag = 'scratch operand']
  %s0 = inlined_call_operand.vmem [shape: f32[8,8,128], index: 0, kind: input, shape index: {}]
  %s1 = inlined_call_operand.vmem [shape: f32[128,512], index: 1, kind: input, shape index: {}]
  %s2 = inlined_call_operand.vmem [shape: f32[128,512], index: 2, kind: input, shape index: {}]
  %s3 = inlined_call_operand.vmem [shape: f32[1,512], index: 3, kind: input, shape index: {}]
  %s4 = inlined_call_operand.vmem [shape: f32[128,128], index: 4, kind: input, shape index: {}]
  %s5 = inlined_call_operand.vmem [shape: f32[1,128], index: 5, kind: input, shape index: {}]
  %s6 = inlined_call_operand.vmem [shape: f32[8,8,128], index: 6, kind: output, shape index: {}]
  %s7 = sld [smem:[#allocation0]]
  $region38: #{multi_output_lstm_forward.3} parent=0
    _
  %s9 = ssub.s32 1, %s7
  %s10 = scalar_select 0, %s9, %s7
  // Predicated region
  $region2: #{multi_output_lstm_forward.3} parent=0 // pred_check
    _
  $region3: #{multi_output_lstm_forward.3} parent=0 // pred_check_branch
    %12 = sbr.rel (0) target = $region5
  $region4: #{multi_output_lstm_forward.3} parent=0 // pred_region
    _
  $region5: #{multi_output_lstm_forward.3} parent=0 // pred_fallthru
    _
  // Predicated region
  $region6: #{multi_output_lstm_forward.3} parent=0 // pred_check
    _
  $region7: #{multi_output_lstm_forward.3} parent=0 // pred_check_branch
    %14 = sbr.rel (0) target = $region9
  $region8: #{multi_output_lstm_forward.3} parent=0 // pred_region
    _
  $region9: #{multi_output_lstm_forward.3} parent=0 // pred_fallthru
    _
  // Predicated region
  $region10: #{multi_output_lstm_forward.3} parent=0 // pred_check
    _
  $region11: #{multi_output_lstm_forward.3} parent=0 // pred_check_branch
    %16 = sbr.rel (0) target = $region13
  $region12: #{multi_output_lstm_forward.3} parent=0 // pred_region
    _
  $region13: #{multi_output_lstm_forward.3} parent=0 // pred_fallthru
    _
  // Predicated region
  $region14: #{multi_output_lstm_forward.3} parent=0 // pred_check
    _
  $region15: #{multi_output_lstm_forward.3} parent=0 // pred_check_branch
    %18 = sbr.rel (0) target = $region17
  $region16: #{multi_output_lstm_forward.3} parent=0 // pred_region
    _
  $region17: #{multi_output_lstm_forward.3} parent=0 // pred_fallthru
    _
  // Predicated region
  $region18: #{multi_output_lstm_forward.3} parent=0 // pred_check
    _
  $region19: #{multi_output_lstm_forward.3} parent=0 // pred_check_branch
    %20 = sbr.rel (0) target = $region21
  $region20: #{multi_output_lstm_forward.3} parent=0 // pred_region
    _
  $region21: #{multi_output_lstm_forward.3} parent=0 // pred_fallthru
    _
  // Predicated region
  $region22: #{multi_output_lstm_forward.3} parent=0 // pred_check
    _
  $region23: #{multi_output_lstm_forward.3} parent=0 // pred_check_branch
    %22 = sbr.rel (0) target = $region25
  $region24: #{multi_output_lstm_forward.3} parent=0 // pred_region
    _
  $region25: #{multi_output_lstm_forward.3} parent=0 // pred_fallthru
    _
  %p23 = scmp.eq.s32.totalorder 0, 0
  // Predicated region
  $region26: #{multi_output_lstm_forward.3} parent=0 // pred_check
    %p24 = pneg %p23
  $region27: #{multi_output_lstm_forward.3} parent=0 // pred_check_branch
    %26 = sbr.rel (%p24) target = $region29
  $region28: #{multi_output_lstm_forward.3} parent=0 // pred_region
    %27 = vst [vmem:[#allocation2] sm:$0xff] 0.0
    %28 = vst [vmem:[#allocation3] sm:$0xff] 0.0
  $region29: #{multi_output_lstm_forward.3} parent=0 // pred_fallthru
    _
  %v29 = vld [vmem:[%s0] sm:$0xff]
  %v30 = vld [vmem:[%s0 + $0x8] sm:$0xff]
  %v31 = vld [vmem:[%s0 + $0x10] sm:$0xff]
  %v32 = vld [vmem:[%s0 + $0x18] sm:$0xff]
  %v33 = vld [vmem:[%s0 + $0x20] sm:$0xff]
  %v34 = vld [vmem:[%s0 + $0x28] sm:$0xff]
  %v35 = vld [vmem:[%s0 + $0x30] sm:$0xff]
  %v36 = vld [vmem:[%s0 + $0x38] sm:$0xff]
  %v37 = vld [vmem:[%s1] sm:$0xff]
  %v38 = vld [vmem:[%s1 + $0x8] sm:$0xff]
  %v39 = vld [vmem:[%s1 + $0x10] sm:$0xff]
  %v40 = vld [vmem:[%s1 + $0x18] sm:$0xff]
  %v41 = vld [vmem:[%s1 + $0x20] sm:$0xff]
  %v42 = vld [vmem:[%s1 + $0x28] sm:$0xff]
  %v43 = vld [vmem:[%s1 + $0x30] sm:$0xff]
  %v44 = vld [vmem:[%s1 + $0x38] sm:$0xff]
  %v45 = vld [vmem:[%s1 + $0x40] sm:$0xff]
  %v46 = vld [vmem:[%s1 + $0x48] sm:$0xff]
  %v47 = vld [vmem:[%s1 + $0x50] sm:$0xff]
  %v48 = vld [vmem:[%s1 + $0x58] sm:$0xff]
  %v49 = vld [vmem:[%s1 + $0x60] sm:$0xff]
  %v50 = vld [vmem:[%s1 + $0x68] sm:$0xff]
  %v51 = vld [vmem:[%s1 + $0x70] sm:$0xff]
  %v52 = vld [vmem:[%s1 + $0x78] sm:$0xff]
  %v53 = vld [vmem:[%s1 + $0x80] sm:$0xff]
  %v54 = vld [vmem:[%s1 + $0x88] sm:$0xff]
  %v55 = vld [vmem:[%s1 + $0x90] sm:$0xff]
  %v56 = vld [vmem:[%s1 + $0x98] sm:$0xff]
  %v57 = vld [vmem:[%s1 + $0xa0] sm:$0xff]
  %v58 = vld [vmem:[%s1 + $0xa8] sm:$0xff]
  %v59 = vld [vmem:[%s1 + $0xb0] sm:$0xff]
  %v60 = vld [vmem:[%s1 + $0xb8] sm:$0xff]
  %v61 = vld [vmem:[%s1 + $0xc0] sm:$0xff]
  %v62 = vld [vmem:[%s1 + $0xc8] sm:$0xff]
  %v63 = vld [vmem:[%s1 + $0xd0] sm:$0xff]
  %v64 = vld [vmem:[%s1 + $0xd8] sm:$0xff]
  %v65 = vld [vmem:[%s1 + $0xe0] sm:$0xff]
  %v66 = vld [vmem:[%s1 + $0xe8] sm:$0xff]
  %v67 = vld [vmem:[%s1 + $0xf0] sm:$0xff]
  %v68 = vld [vmem:[%s1 + $0xf8] sm:$0xff]
  %v69 = vld [vmem:[%s1 + $0x100] sm:$0xff]
  %v70 = vld [vmem:[%s1 + $0x108] sm:$0xff]
  %v71 = vld [vmem:[%s1 + $0x110] sm:$0xff]
  %v72 = vld [vmem:[%s1 + $0x118] sm:$0xff]
  %v73 = vld [vmem:[%s1 + $0x120] sm:$0xff]
  %v74 = vld [vmem:[%s1 + $0x128] sm:$0xff]
  %v75 = vld [vmem:[%s1 + $0x130] sm:$0xff]
  %v76 = vld [vmem:[%s1 + $0x138] sm:$0xff]
  %v77 = vld [vmem:[%s1 + $0x140] sm:$0xff]
  %v78 = vld [vmem:[%s1 + $0x148] sm:$0xff]
  %v79 = vld [vmem:[%s1 + $0x150] sm:$0xff]
  %v80 = vld [vmem:[%s1 + $0x158] sm:$0xff]
  %v81 = vld [vmem:[%s1 + $0x160] sm:$0xff]
  %v82 = vld [vmem:[%s1 + $0x168] sm:$0xff]
  %v83 = vld [vmem:[%s1 + $0x170] sm:$0xff]
  %v84 = vld [vmem:[%s1 + $0x178] sm:$0xff]
  %v85 = vld [vmem:[%s1 + $0x180] sm:$0xff]
  %v86 = vld [vmem:[%s1 + $0x188] sm:$0xff]
  %v87 = vld [vmem:[%s1 + $0x190] sm:$0xff]
  %v88 = vld [vmem:[%s1 + $0x198] sm:$0xff]
  %v89 = vld [vmem:[%s1 + $0x1a0] sm:$0xff]
  %v90 = vld [vmem:[%s1 + $0x1a8] sm:$0xff]
  %v91 = vld [vmem:[%s1 + $0x1b0] sm:$0xff]
  %v92 = vld [vmem:[%s1 + $0x1b8] sm:$0xff]
  %v93 = vld [vmem:[%s1 + $0x1c0] sm:$0xff]
  %v94 = vld [vmem:[%s1 + $0x1c8] sm:$0xff]
  %v95 = vld [vmem:[%s1 + $0x1d0] sm:$0xff]
  %v96 = vld [vmem:[%s1 + $0x1d8] sm:$0xff]
  %v97 = vld [vmem:[%s1 + $0x1e0] sm:$0xff]
  %v98 = vld [vmem:[%s1 + $0x1e8] sm:$0xff]
  %v99 = vld [vmem:[%s1 + $0x1f0] sm:$0xff]
  %v100 = vld [vmem:[%s1 + $0x1f8] sm:$0xff]
  %v101 = vld [vmem:[%s3] sm:$0xf]
  %v103 = vlaneseq
  %v104 = vshrl.u32 %v103, 7
  %v105 = vsub.s32 0, %v104
  %v106 = vrot.slane %v101, %v105
  %v107 = vlaneseq
  %v108 = vshrl.u32 %v107, 7
  %v109 = vsub.s32 1, %v108
  %v110 = vrot.slane %v101, %v109
  %v111 = vlaneseq
  %v112 = vshrl.u32 %v111, 7
  %v113 = vsub.s32 2, %v112
  %v114 = vrot.slane %v101, %v113
  %v115 = vlaneseq
  %v116 = vshrl.u32 %v115, 7
  %v117 = vsub.s32 3, %v116
  %v118 = vrot.slane %v101, %v117
  %123 = vmatprep.subr.mxu0 %v98
  %124 = vmatpush1.msra.mxu0 %v97
  %125 = vmatprep.subr.mxu0 %v94
  %126 = vmatpush1.msra.mxu0 %v93
  %127 = vmatprep.subr.mxu0 %v90
  %128 = vmatpush1.msra.mxu0 %v89
  %129 = vmatprep.subr.mxu0 %v86
  %130 = vmatpush1.msra.mxu0 %v85
  %131 = vmatprep.subr.mxu0 %v82
  %132 = vmatpush1.msra.mxu0 %v81
  %133 = vmatprep.subr.mxu0 %v78
  %134 = vmatpush1.msra.mxu0 %v77
  %135 = vmatprep.subr.mxu0 %v74
  %136 = vmatpush1.msra.mxu0 %v73
  %137 = vmatprep.subr.mxu0 %v70
  %138 = vmatpush1.msra.mxu0 %v69
  %139 = vmatprep.subr.mxu0 %v66
  %140 = vmatpush1.msra.mxu0 %v65
  %141 = vmatprep.subr.mxu0 %v62
  %142 = vmatpush1.msra.mxu0 %v61
  %143 = vmatprep.subr.mxu0 %v58
  %144 = vmatpush1.msra.mxu0 %v57
  %145 = vmatprep.subr.mxu0 %v54
  %146 = vmatpush1.msra.mxu0 %v53
  %147 = vmatprep.subr.mxu0 %v50
  %148 = vmatpush1.msra.mxu0 %v49
  %149 = vmatprep.subr.mxu0 %v46
  %150 = vmatpush1.msra.mxu0 %v45
  %151 = vmatprep.subr.mxu0 %v42
  %152 = vmatpush1.msra.mxu0 %v41
  %153 = vmatprep.subr.mxu0 %v38
  %154 = vmatpush1.msra.mxu0 %v37
  %155 = vmatprep.subr.mxu0 0.0
  %156 = vmatpush2.msra.mxu0 0.0
  %157 = vmatprep.subr.mxu0 0.0
  %158 = vmatpush2.msra.mxu0 0.0
  %159 = vmatprep.subr.mxu0 0.0
  %160 = vmatpush2.msra.mxu0 0.0
  %161 = vmatprep.subr.mxu0 0.0
  %162 = vmatpush2.msra.mxu0 0.0
  %163 = vmatprep.subr.mxu0 0.0
  %164 = vmatpush2.msra.mxu0 0.0
  %165 = vmatprep.subr.mxu0 0.0
  %166 = vmatpush2.msra.mxu0 0.0
  %167 = vmatprep.subr.mxu0 0.0
  %168 = vmatpush2.msra.mxu0 0.0
  %169 = vmatprep.subr.mxu0 0.0
  %170 = vmatpush2.msra.mxu0 0.0
  %171 = vmatprep.subr.mxu0 0.0
  %172 = vmatpush2.msra.mxu0 0.0
  %173 = vmatprep.subr.mxu0 0.0
  %174 = vmatpush2.msra.mxu0 0.0
  %175 = vmatprep.subr.mxu0 0.0
  %176 = vmatpush2.msra.mxu0 0.0
  %177 = vmatprep.subr.mxu0 0.0
  %178 = vmatpush2.msra.mxu0 0.0
  %179 = vmatprep.subr.mxu0 0.0
  %180 = vmatpush2.msra.mxu0 0.0
  %181 = vmatprep.subr.mxu0 0.0
  %182 = vmatpush2.msra.mxu0 0.0
  %183 = vmatprep.subr.mxu0 0.0
  %184 = vmatpush2.msra.mxu0 0.0
  %185 = vmatprep.subr.mxu0 0.0
  %186 = vmatpush2.msra.mxu0 0.0
  %187 = vmatprep.mubr.f32.mxu0 0.0
  %188 = vmatmul.mubr.f32.gmra.mxu0 %v29
  %v189 = vpop.f32.mrf.mxu0
  %v190 = vadd.f32 %v106, %v189
  %v191 = vpop.f32.mrf.mxu0
  %v192 = vadd.f32 %v110, %v191
  %193 = vmatprep.mubr.f32.mxu0 0.0
  %194 = vmatmul.mubr.f32.gmra.mxu0 %v30
  %v195 = vpop.f32.mrf.mxu0
  %v196 = vadd.f32 %v106, %v195
  %v197 = vpop.f32.mrf.mxu0
  %v198 = vadd.f32 %v110, %v197
  %199 = vmatprep.mubr.f32.mxu0 0.0
  %200 = vmatmul.mubr.f32.gmra.mxu0 %v31
  %v201 = vpop.f32.mrf.mxu0
  %v202 = vadd.f32 %v106, %v201
  %v203 = vpop.f32.mrf.mxu0
  %v204 = vadd.f32 %v110, %v203
  %205 = vmatprep.mubr.f32.mxu0 0.0
  %206 = vmatmul.mubr.f32.gmra.mxu0 %v32
  %v207 = vpop.f32.mrf.mxu0
  %v208 = vadd.f32 %v106, %v207
  %v209 = vpop.f32.mrf.mxu0
  %v210 = vadd.f32 %v110, %v209
  %211 = vmatprep.mubr.f32.mxu0 0.0
  %212 = vmatmul.mubr.f32.gmra.mxu0 %v33
  %v213 = vpop.f32.mrf.mxu0
  %v214 = vadd.f32 %v106, %v213
  %v215 = vpop.f32.mrf.mxu0
  %v216 = vadd.f32 %v110, %v215
  %217 = vmatprep.mubr.f32.mxu0 0.0
  %218 = vmatmul.mubr.f32.gmra.mxu0 %v34
  %v219 = vpop.f32.mrf.mxu0
  %v220 = vadd.f32 %v106, %v219
  %v221 = vpop.f32.mrf.mxu0
  %v222 = vadd.f32 %v110, %v221
  %223 = vmatprep.mubr.f32.mxu0 0.0
  %224 = vmatmul.mubr.f32.gmra.mxu0 %v35
  %v225 = vpop.f32.mrf.mxu0
  %v226 = vadd.f32 %v106, %v225
  %v227 = vpop.f32.mrf.mxu0
  %v228 = vadd.f32 %v110, %v227
  %229 = vmatprep.mubr.f32.mxu0 0.0
  %230 = vmatmul.mubr.f32.gmra.mxu0 %v36
  %v231 = vpop.f32.mrf.mxu0
  %v232 = vadd.f32 %v106, %v231
  %v233 = vpop.f32.mrf.mxu0
  %v234 = vadd.f32 %v110, %v233
  %235 = vdwg.mxu0
  %236 = vmatprep.subr.mxu0 %v100
  %237 = vmatpush1.msra.mxu0 %v99
  %238 = vmatprep.subr.mxu0 %v96
  %239 = vmatpush1.msra.mxu0 %v95
  %240 = vmatprep.subr.mxu0 %v92
  %241 = vmatpush1.msra.mxu0 %v91
  %242 = vmatprep.subr.mxu0 %v88
  %243 = vmatpush1.msra.mxu0 %v87
  %244 = vmatprep.subr.mxu0 %v84
  %245 = vmatpush1.msra.mxu0 %v83
  %246 = vmatprep.subr.mxu0 %v80
  %247 = vmatpush1.msra.mxu0 %v79
  %248 = vmatprep.subr.mxu0 %v76
  %249 = vmatpush1.msra.mxu0 %v75
  %250 = vmatprep.subr.mxu0 %v72
  %251 = vmatpush1.msra.mxu0 %v71
  %252 = vmatprep.subr.mxu0 %v68
  %253 = vmatpush1.msra.mxu0 %v67
  %254 = vmatprep.subr.mxu0 %v64
  %255 = vmatpush1.msra.mxu0 %v63
  %256 = vmatprep.subr.mxu0 %v60
  %257 = vmatpush1.msra.mxu0 %v59
  %258 = vmatprep.subr.mxu0 %v56
  %259 = vmatpush1.msra.mxu0 %v55
  %260 = vmatprep.subr.mxu0 %v52
  %261 = vmatpush1.msra.mxu0 %v51
  %262 = vmatprep.subr.mxu0 %v48
  %263 = vmatpush1.msra.mxu0 %v47
  %264 = vmatprep.subr.mxu0 %v44
  %265 = vmatpush1.msra.mxu0 %v43
  %266 = vmatprep.subr.mxu0 %v40
  %267 = vmatpush1.msra.mxu0 %v39
  %268 = vmatprep.subr.mxu0 0.0
  %269 = vmatpush2.msra.mxu0 0.0
  %270 = vmatprep.subr.mxu0 0.0
  %271 = vmatpush2.msra.mxu0 0.0
  %272 = vmatprep.subr.mxu0 0.0
  %273 = vmatpush2.msra.mxu0 0.0
  %274 = vmatprep.subr.mxu0 0.0
  %275 = vmatpush2.msra.mxu0 0.0
  %276 = vmatprep.subr.mxu0 0.0
  %277 = vmatpush2.msra.mxu0 0.0
  %278 = vmatprep.subr.mxu0 0.0
  %279 = vmatpush2.msra.mxu0 0.0
  %280 = vmatprep.subr.mxu0 0.0
  %281 = vmatpush2.msra.mxu0 0.0
  %282 = vmatprep.subr.mxu0 0.0
  %283 = vmatpush2.msra.mxu0 0.0
  %284 = vmatprep.subr.mxu0 0.0
  %285 = vmatpush2.msra.mxu0 0.0
  %286 = vmatprep.subr.mxu0 0.0
  %287 = vmatpush2.msra.mxu0 0.0
  %288 = vmatprep.subr.mxu0 0.0
  %289 = vmatpush2.msra.mxu0 0.0
  %290 = vmatprep.subr.mxu0 0.0
  %291 = vmatpush2.msra.mxu0 0.0
  %292 = vmatprep.subr.mxu0 0.0
  %293 = vmatpush2.msra.mxu0 0.0
  %294 = vmatprep.subr.mxu0 0.0
  %295 = vmatpush2.msra.mxu0 0.0
  %296 = vmatprep.subr.mxu0 0.0
  %297 = vmatpush2.msra.mxu0 0.0
  %298 = vmatprep.subr.mxu0 0.0
  %299 = vmatpush2.msra.mxu0 0.0
  %300 = vmatprep.mubr.f32.mxu0 0.0
  %301 = vmatmul.mubr.f32.gmra.mxu0 %v29
  %v302 = vpop.f32.mrf.mxu0
  %v303 = vadd.f32 %v114, %v302
  %v304 = vpop.f32.mrf.mxu0
  %v305 = vadd.f32 %v118, %v304
  %306 = vmatprep.mubr.f32.mxu0 0.0
  %307 = vmatmul.mubr.f32.gmra.mxu0 %v30
  %v308 = vpop.f32.mrf.mxu0
  %v309 = vadd.f32 %v114, %v308
  %v310 = vpop.f32.mrf.mxu0
  %v311 = vadd.f32 %v118, %v310
  %312 = vmatprep.mubr.f32.mxu0 0.0
  %313 = vmatmul.mubr.f32.gmra.mxu0 %v31
  %v314 = vpop.f32.mrf.mxu0
  %v315 = vadd.f32 %v114, %v314
  %v316 = vpop.f32.mrf.mxu0
  %v317 = vadd.f32 %v118, %v316
  %318 = vmatprep.mubr.f32.mxu0 0.0
  %319 = vmatmul.mubr.f32.gmra.mxu0 %v32
  %v320 = vpop.f32.mrf.mxu0
  %v321 = vadd.f32 %v114, %v320
  %v322 = vpop.f32.mrf.mxu0
  %v323 = vadd.f32 %v118, %v322
  %324 = vmatprep.mubr.f32.mxu0 0.0
  %325 = vmatmul.mubr.f32.gmra.mxu0 %v33
  %v326 = vpop.f32.mrf.mxu0
  %v327 = vadd.f32 %v114, %v326
  %v328 = vpop.f32.mrf.mxu0
  %v329 = vadd.f32 %v118, %v328
  %330 = vmatprep.mubr.f32.mxu0 0.0
  %331 = vmatmul.mubr.f32.gmra.mxu0 %v34
  %v332 = vpop.f32.mrf.mxu0
  %v333 = vadd.f32 %v114, %v332
  %v334 = vpop.f32.mrf.mxu0
  %v335 = vadd.f32 %v118, %v334
  %336 = vmatprep.mubr.f32.mxu0 0.0
  %337 = vmatmul.mubr.f32.gmra.mxu0 %v35
  %v338 = vpop.f32.mrf.mxu0
  %v339 = vadd.f32 %v114, %v338
  %v340 = vpop.f32.mrf.mxu0
  %v341 = vadd.f32 %v118, %v340
  %342 = vmatprep.mubr.f32.mxu0 0.0
  %343 = vmatmul.mubr.f32.gmra.mxu0 %v36
  %v344 = vpop.f32.mrf.mxu0
  %v345 = vadd.f32 %v114, %v344
  %v346 = vpop.f32.mrf.mxu0
  %v347 = vadd.f32 %v118, %v346
  %348 = vdwg.mxu0
  %349 = vst [vmem:[#allocation4] sm:$0xff] %v190
  %350 = vst [vmem:[#allocation4 + $0x8] sm:$0xff] %v192
  %351 = vst [vmem:[#allocation4 + $0x10] sm:$0xff] %v303
  %352 = vst [vmem:[#allocation4 + $0x18] sm:$0xff] %v305
  %353 = vst [vmem:[#allocation4 + $0x20] sm:$0xff] %v196
  %354 = vst [vmem:[#allocation4 + $0x28] sm:$0xff] %v198
  %355 = vst [vmem:[#allocation4 + $0x30] sm:$0xff] %v309
  %356 = vst [vmem:[#allocation4 + $0x38] sm:$0xff] %v311
  %357 = vst [vmem:[#allocation4 + $0x40] sm:$0xff] %v202
  %358 = vst [vmem:[#allocation4 + $0x48] sm:$0xff] %v204
  %359 = vst [vmem:[#allocation4 + $0x50] sm:$0xff] %v315
  %360 = vst [vmem:[#allocation4 + $0x58] sm:$0xff] %v317
  %361 = vst [vmem:[#allocation4 + $0x60] sm:$0xff] %v208
  %362 = vst [vmem:[#allocation4 + $0x68] sm:$0xff] %v210
  %363 = vst [vmem:[#allocation4 + $0x70] sm:$0xff] %v321
  %364 = vst [vmem:[#allocation4 + $0x78] sm:$0xff] %v323
  %365 = vst [vmem:[#allocation4 + $0x80] sm:$0xff] %v214
  %366 = vst [vmem:[#allocation4 + $0x88] sm:$0xff] %v216
  %367 = vst [vmem:[#allocation4 + $0x90] sm:$0xff] %v327
  %368 = vst [vmem:[#allocation4 + $0x98] sm:$0xff] %v329
  %369 = vst [vmem:[#allocation4 + $0xa0] sm:$0xff] %v220
  %370 = vst [vmem:[#allocation4 + $0xa8] sm:$0xff] %v222
  %371 = vst [vmem:[#allocation4 + $0xb0] sm:$0xff] %v333
  %372 = vst [vmem:[#allocation4 + $0xb8] sm:$0xff] %v335
  %373 = vst [vmem:[#allocation4 + $0xc0] sm:$0xff] %v226
  %374 = vst [vmem:[#allocation4 + $0xc8] sm:$0xff] %v228
  %375 = vst [vmem:[#allocation4 + $0xd0] sm:$0xff] %v339
  %376 = vst [vmem:[#allocation4 + $0xd8] sm:$0xff] %v341
  %377 = vst [vmem:[#allocation4 + $0xe0] sm:$0xff] %v232
  %378 = vst [vmem:[#allocation4 + $0xe8] sm:$0xff] %v234
  %379 = vst [vmem:[#allocation4 + $0xf0] sm:$0xff] %v345
  %380 = vst [vmem:[#allocation4 + $0xf8] sm:$0xff] %v347
  %v381 = vld [vmem:[%s2] sm:$0xff]
  %v382 = vld [vmem:[%s2 + $0x8] sm:$0xff]
  %v383 = vld [vmem:[%s2 + $0x10] sm:$0xff]
  %v384 = vld [vmem:[%s2 + $0x18] sm:$0xff]
  %v385 = vld [vmem:[%s2 + $0x20] sm:$0xff]
  %v386 = vld [vmem:[%s2 + $0x28] sm:$0xff]
  %v387 = vld [vmem:[%s2 + $0x30] sm:$0xff]
  %v388 = vld [vmem:[%s2 + $0x38] sm:$0xff]
  %v389 = vld [vmem:[%s2 + $0x40] sm:$0xff]
  %v390 = vld [vmem:[%s2 + $0x48] sm:$0xff]
  %v391 = vld [vmem:[%s2 + $0x50] sm:$0xff]
  %v392 = vld [vmem:[%s2 + $0x58] sm:$0xff]
  %v393 = vld [vmem:[%s2 + $0x60] sm:$0xff]
  %v394 = vld [vmem:[%s2 + $0x68] sm:$0xff]
  %v395 = vld [vmem:[%s2 + $0x70] sm:$0xff]
  %v396 = vld [vmem:[%s2 + $0x78] sm:$0xff]
  %v397 = vld [vmem:[%s2 + $0x80] sm:$0xff]
  %v398 = vld [vmem:[%s2 + $0x88] sm:$0xff]
  %v399 = vld [vmem:[%s2 + $0x90] sm:$0xff]
  %v400 = vld [vmem:[%s2 + $0x98] sm:$0xff]
  %v401 = vld [vmem:[%s2 + $0xa0] sm:$0xff]
  %v402 = vld [vmem:[%s2 + $0xa8] sm:$0xff]
  %v403 = vld [vmem:[%s2 + $0xb0] sm:$0xff]
  %v404 = vld [vmem:[%s2 + $0xb8] sm:$0xff]
  %v405 = vld [vmem:[%s2 + $0xc0] sm:$0xff]
  %v406 = vld [vmem:[%s2 + $0xc8] sm:$0xff]
  %v407 = vld [vmem:[%s2 + $0xd0] sm:$0xff]
  %v408 = vld [vmem:[%s2 + $0xd8] sm:$0xff]
  %v409 = vld [vmem:[%s2 + $0xe0] sm:$0xff]
  %v410 = vld [vmem:[%s2 + $0xe8] sm:$0xff]
  %v411 = vld [vmem:[%s2 + $0xf0] sm:$0xff]
  %v412 = vld [vmem:[%s2 + $0xf8] sm:$0xff]
  %v413 = vld [vmem:[%s2 + $0x100] sm:$0xff]
  %v414 = vld [vmem:[%s2 + $0x108] sm:$0xff]
  %v415 = vld [vmem:[%s2 + $0x110] sm:$0xff]
  %v416 = vld [vmem:[%s2 + $0x118] sm:$0xff]
  %v417 = vld [vmem:[%s2 + $0x120] sm:$0xff]
  %v418 = vld [vmem:[%s2 + $0x128] sm:$0xff]
  %v419 = vld [vmem:[%s2 + $0x130] sm:$0xff]
  %v420 = vld [vmem:[%s2 + $0x138] sm:$0xff]
  %v421 = vld [vmem:[%s2 + $0x140] sm:$0xff]
  %v422 = vld [vmem:[%s2 + $0x148] sm:$0xff]
  %v423 = vld [vmem:[%s2 + $0x150] sm:$0xff]
  %v424 = vld [vmem:[%s2 + $0x158] sm:$0xff]
  %v425 = vld [vmem:[%s2 + $0x160] sm:$0xff]
  %v426 = vld [vmem:[%s2 + $0x168] sm:$0xff]
  %v427 = vld [vmem:[%s2 + $0x170] sm:$0xff]
  %v428 = vld [vmem:[%s2 + $0x178] sm:$0xff]
  %v429 = vld [vmem:[%s2 + $0x180] sm:$0xff]
  %v430 = vld [vmem:[%s2 + $0x188] sm:$0xff]
  %v431 = vld [vmem:[%s2 + $0x190] sm:$0xff]
  %v432 = vld [vmem:[%s2 + $0x198] sm:$0xff]
  %v433 = vld [vmem:[%s2 + $0x1a0] sm:$0xff]
  %v434 = vld [vmem:[%s2 + $0x1a8] sm:$0xff]
  %v435 = vld [vmem:[%s2 + $0x1b0] sm:$0xff]
  %v436 = vld [vmem:[%s2 + $0x1b8] sm:$0xff]
  %v437 = vld [vmem:[%s2 + $0x1c0] sm:$0xff]
  %v438 = vld [vmem:[%s2 + $0x1c8] sm:$0xff]
  %v439 = vld [vmem:[%s2 + $0x1d0] sm:$0xff]
  %v440 = vld [vmem:[%s2 + $0x1d8] sm:$0xff]
  %v441 = vld [vmem:[%s2 + $0x1e0] sm:$0xff]
  %v442 = vld [vmem:[%s2 + $0x1e8] sm:$0xff]
  %v443 = vld [vmem:[%s2 + $0x1f0] sm:$0xff]
  %v444 = vld [vmem:[%s2 + $0x1f8] sm:$0xff]
  %v445 = vld [vmem:[#allocation2] sm:$0xff]
  %v446 = vld [vmem:[#allocation3] sm:$0xff]
  %v447 = vld [vmem:[#allocation4] sm:$0xff]
  %v448 = vld [vmem:[#allocation4 + $0x8] sm:$0xff]
  %v449 = vld [vmem:[#allocation4 + $0x10] sm:$0xff]
  %v450 = vld [vmem:[#allocation4 + $0x18] sm:$0xff]
  %451 = vmatprep.subr.mxu0 %v442
  %452 = vmatpush1.msra.mxu0 %v441
  %453 = vmatprep.subr.mxu0 %v438
  %454 = vmatpush1.msra.mxu0 %v437
  %455 = vmatprep.subr.mxu0 %v434
  %456 = vmatpush1.msra.mxu0 %v433
  %457 = vmatprep.subr.mxu0 %v430
  %458 = vmatpush1.msra.mxu0 %v429
  %459 = vmatprep.subr.mxu0 %v426
  %460 = vmatpush1.msra.mxu0 %v425
  %461 = vmatprep.subr.mxu0 %v422
  %462 = vmatpush1.msra.mxu0 %v421
  %463 = vmatprep.subr.mxu0 %v418
  %464 = vmatpush1.msra.mxu0 %v417
  %465 = vmatprep.subr.mxu0 %v414
  %466 = vmatpush1.msra.mxu0 %v413
  %467 = vmatprep.subr.mxu0 %v410
  %468 = vmatpush1.msra.mxu0 %v409
  %469 = vmatprep.subr.mxu0 %v406
  %470 = vmatpush1.msra.mxu0 %v405
  %471 = vmatprep.subr.mxu0 %v402
  %472 = vmatpush1.msra.mxu0 %v401
  %473 = vmatprep.subr.mxu0 %v398
  %474 = vmatpush1.msra.mxu0 %v397
  %475 = vmatprep.subr.mxu0 %v394
  %476 = vmatpush1.msra.mxu0 %v393
  %477 = vmatprep.subr.mxu0 %v390
  %478 = vmatpush1.msra.mxu0 %v389
  %479 = vmatprep.subr.mxu0 %v386
  %480 = vmatpush1.msra.mxu0 %v385
  %481 = vmatprep.subr.mxu0 %v382
  %482 = vmatpush1.msra.mxu0 %v381
  %483 = vmatprep.subr.mxu0 0.0
  %484 = vmatpush2.msra.mxu0 0.0
  %485 = vmatprep.subr.mxu0 0.0
  %486 = vmatpush2.msra.mxu0 0.0
  %487 = vmatprep.subr.mxu0 0.0
  %488 = vmatpush2.msra.mxu0 0.0
  %489 = vmatprep.subr.mxu0 0.0
  %490 = vmatpush2.msra.mxu0 0.0
  %491 = vmatprep.subr.mxu0 0.0
  %492 = vmatpush2.msra.mxu0 0.0
  %493 = vmatprep.subr.mxu0 0.0
  %494 = vmatpush2.msra.mxu0 0.0
  %495 = vmatprep.subr.mxu0 0.0
  %496 = vmatpush2.msra.mxu0 0.0
  %497 = vmatprep.subr.mxu0 0.0
  %498 = vmatpush2.msra.mxu0 0.0
  %499 = vmatprep.subr.mxu0 0.0
  %500 = vmatpush2.msra.mxu0 0.0
  %501 = vmatprep.subr.mxu0 0.0
  %502 = vmatpush2.msra.mxu0 0.0
  %503 = vmatprep.subr.mxu0 0.0
  %504 = vmatpush2.msra.mxu0 0.0
  %505 = vmatprep.subr.mxu0 0.0
  %506 = vmatpush2.msra.mxu0 0.0
  %507 = vmatprep.subr.mxu0 0.0
  %508 = vmatpush2.msra.mxu0 0.0
  %509 = vmatprep.subr.mxu0 0.0
  %510 = vmatpush2.msra.mxu0 0.0
  %511 = vmatprep.subr.mxu0 0.0
  %512 = vmatpush2.msra.mxu0 0.0
  %513 = vmatprep.subr.mxu0 0.0
  %514 = vmatpush2.msra.mxu0 0.0
  %515 = vmatprep.mubr.f32.mxu0 0.0
  %516 = vmatmul.mubr.f32.gmra.mxu0 %v445
  %v517 = vpop.f32.mrf.mxu0
  %v518 = vadd.f32 0.0, %v517
  %v519 = vpop.f32.mrf.mxu0
  %v520 = vadd.f32 0.0, %v519
  %521 = vdwg.mxu0
  %522 = vmatprep.subr.mxu0 %v444
  %523 = vmatpush1.msra.mxu0 %v443
  %524 = vmatprep.subr.mxu0 %v440
  %525 = vmatpush1.msra.mxu0 %v439
  %526 = vmatprep.subr.mxu0 %v436
  %527 = vmatpush1.msra.mxu0 %v435
  %528 = vmatprep.subr.mxu0 %v432
  %529 = vmatpush1.msra.mxu0 %v431
  %530 = vmatprep.subr.mxu0 %v428
  %531 = vmatpush1.msra.mxu0 %v427
  %532 = vmatprep.subr.mxu0 %v424
  %533 = vmatpush1.msra.mxu0 %v423
  %534 = vmatprep.subr.mxu0 %v420
  %535 = vmatpush1.msra.mxu0 %v419
  %536 = vmatprep.subr.mxu0 %v416
  %537 = vmatpush1.msra.mxu0 %v415
  %538 = vmatprep.subr.mxu0 %v412
  %539 = vmatpush1.msra.mxu0 %v411
  %540 = vmatprep.subr.mxu0 %v408
  %541 = vmatpush1.msra.mxu0 %v407
  %542 = vmatprep.subr.mxu0 %v404
  %543 = vmatpush1.msra.mxu0 %v403
  %544 = vmatprep.subr.mxu0 %v400
  %545 = vmatpush1.msra.mxu0 %v399
  %546 = vmatprep.subr.mxu0 %v396
  %547 = vmatpush1.msra.mxu0 %v395
  %548 = vmatprep.subr.mxu0 %v392
  %549 = vmatpush1.msra.mxu0 %v391
  %550 = vmatprep.subr.mxu0 %v388
  %551 = vmatpush1.msra.mxu0 %v387
  %552 = vmatprep.subr.mxu0 %v384
  %553 = vmatpush1.msra.mxu0 %v383
  %554 = vmatprep.subr.mxu0 0.0
  %555 = vmatpush2.msra.mxu0 0.0
  %556 = vmatprep.subr.mxu0 0.0
  %557 = vmatpush2.msra.mxu0 0.0
  %558 = vmatprep.subr.mxu0 0.0
  %559 = vmatpush2.msra.mxu0 0.0
  %560 = vmatprep.subr.mxu0 0.0
  %561 = vmatpush2.msra.mxu0 0.0
  %562 = vmatprep.subr.mxu0 0.0
  %563 = vmatpush2.msra.mxu0 0.0
  %564 = vmatprep.subr.mxu0 0.0
  %565 = vmatpush2.msra.mxu0 0.0
  %566 = vmatprep.subr.mxu0 0.0
  %567 = vmatpush2.msra.mxu0 0.0
  %568 = vmatprep.subr.mxu0 0.0
  %569 = vmatpush2.msra.mxu0 0.0
  %570 = vmatprep.subr.mxu0 0.0
  %571 = vmatpush2.msra.mxu0 0.0
  %572 = vmatprep.subr.mxu0 0.0
  %573 = vmatpush2.msra.mxu0 0.0
  %574 = vmatprep.subr.mxu0 0.0
  %575 = vmatpush2.msra.mxu0 0.0
  %576 = vmatprep.subr.mxu0 0.0
  %577 = vmatpush2.msra.mxu0 0.0
  %578 = vmatprep.subr.mxu0 0.0
  %579 = vmatpush2.msra.mxu0 0.0
  %580 = vmatprep.subr.mxu0 0.0
  %581 = vmatpush2.msra.mxu0 0.0
  %582 = vmatprep.subr.mxu0 0.0
  %583 = vmatpush2.msra.mxu0 0.0
  %584 = vmatprep.subr.mxu0 0.0
  %585 = vmatpush2.msra.mxu0 0.0
  %586 = vmatprep.mubr.f32.mxu0 0.0
  %587 = vmatmul.mubr.f32.gmra.mxu0 %v445
  %v588 = vpop.f32.mrf.mxu0
  %v589 = vadd.f32 0.0, %v588
  %v590 = vpop.f32.mrf.mxu0
  %v591 = vadd.f32 0.0, %v590
  %592 = vdwg.mxu0
  %v593 = vadd.f32 %v447, %v518
  %v594 = vadd.f32 %v448, %v520
  %v595 = vadd.f32 %v449, %v589
  %v596 = vadd.f32 %v450, %v591
  %v597 = vmul.f32 %v593, 0.5
  %v598 = vtanh.pop %v597
  %v599 = vmul.f32 %v598, 0.5
  %v600 = vadd.f32 %v599, 0.5
  %v601 = vmul.f32 %v594, 0.5
  %v602 = vtanh.pop %v601
  %v603 = vmul.f32 %v602, 0.5
  %v604 = vadd.f32 %v603, 0.5
  %v605 = vtanh.pop %v595
  %v606 = vmul.f32 %v596, 0.5
  %v607 = vtanh.pop %v606
  %v608 = vmul.f32 %v607, 0.5
  %v609 = vadd.f32 %v608, 0.5
  %v610 = vmul.f32 %v604, %v446
  %v611 = vmul.f32 %v600, %v605
  %v612 = vadd.f32 %v610, %v611
  %v613 = vtanh.pop %v612
  %v614 = vmul.f32 %v609, %v613
  %615 = vst [vmem:[#allocation5] sm:$0xff] %v614
  %s616 = scalar_lea.vmem [#allocation4], 32
  %v617 = vld [vmem:[%s616] sm:$0xff]
  %v618 = vld [vmem:[%s616 + $0x8] sm:$0xff]
  %v619 = vld [vmem:[%s616 + $0x10] sm:$0xff]
  %v620 = vld [vmem:[%s616 + $0x18] sm:$0xff]
  %621 = vmatprep.subr.mxu0 %v442
  %622 = vmatpush1.msra.mxu0 %v441
  %623 = vmatprep.subr.mxu0 %v438
  %624 = vmatpush1.msra.mxu0 %v437
  %625 = vmatprep.subr.mxu0 %v434
  %626 = vmatpush1.msra.mxu0 %v433
  %627 = vmatprep.subr.mxu0 %v430
  %628 = vmatpush1.msra.mxu0 %v429
  %629 = vmatprep.subr.mxu0 %v426
  %630 = vmatpush1.msra.mxu0 %v425
  %631 = vmatprep.subr.mxu0 %v422
  %632 = vmatpush1.msra.mxu0 %v421
  %633 = vmatprep.subr.mxu0 %v418
  %634 = vmatpush1.msra.mxu0 %v417
  %635 = vmatprep.subr.mxu0 %v414
  %636 = vmatpush1.msra.mxu0 %v413
  %637 = vmatprep.subr.mxu0 %v410
  %638 = vmatpush1.msra.mxu0 %v409
  %639 = vmatprep.subr.mxu0 %v406
  %640 = vmatpush1.msra.mxu0 %v405
  %641 = vmatprep.subr.mxu0 %v402
  %642 = vmatpush1.msra.mxu0 %v401
  %643 = vmatprep.subr.mxu0 %v398
  %644 = vmatpush1.msra.mxu0 %v397
  %645 = vmatprep.subr.mxu0 %v394
  %646 = vmatpush1.msra.mxu0 %v393
  %647 = vmatprep.subr.mxu0 %v390
  %648 = vmatpush1.msra.mxu0 %v389
  %649 = vmatprep.subr.mxu0 %v386
  %650 = vmatpush1.msra.mxu0 %v385
  %651 = vmatprep.subr.mxu0 %v382
  %652 = vmatpush1.msra.mxu0 %v381
  %653 = vmatprep.subr.mxu0 0.0
  %654 = vmatpush2.msra.mxu0 0.0
  %655 = vmatprep.subr.mxu0 0.0
  %656 = vmatpush2.msra.mxu0 0.0
  %657 = vmatprep.subr.mxu0 0.0
  %658 = vmatpush2.msra.mxu0 0.0
  %659 = vmatprep.subr.mxu0 0.0
  %660 = vmatpush2.msra.mxu0 0.0
  %661 = vmatprep.subr.mxu0 0.0
  %662 = vmatpush2.msra.mxu0 0.0
  %663 = vmatprep.subr.mxu0 0.0
  %664 = vmatpush2.msra.mxu0 0.0
  %665 = vmatprep.subr.mxu0 0.0
  %666 = vmatpush2.msra.mxu0 0.0
  %667 = vmatprep.subr.mxu0 0.0
  %668 = vmatpush2.msra.mxu0 0.0
  %669 = vmatprep.subr.mxu0 0.0
  %670 = vmatpush2.msra.mxu0 0.0
  %671 = vmatprep.subr.mxu0 0.0
  %672 = vmatpush2.msra.mxu0 0.0
  %673 = vmatprep.subr.mxu0 0.0
  %674 = vmatpush2.msra.mxu0 0.0
  %675 = vmatprep.subr.mxu0 0.0
  %676 = vmatpush2.msra.mxu0 0.0
  %677 = vmatprep.subr.mxu0 0.0
  %678 = vmatpush2.msra.mxu0 0.0
  %679 = vmatprep.subr.mxu0 0.0
  %680 = vmatpush2.msra.mxu0 0.0
  %681 = vmatprep.subr.mxu0 0.0
  %682 = vmatpush2.msra.mxu0 0.0
  %683 = vmatprep.subr.mxu0 0.0
  %684 = vmatpush2.msra.mxu0 0.0
  %685 = vmatprep.mubr.f32.mxu0 0.0
  %686 = vmatmul.mubr.f32.gmra.mxu0 %v614
  %v687 = vpop.f32.mrf.mxu0
  %v688 = vadd.f32 0.0, %v687
  %v689 = vpop.f32.mrf.mxu0
  %v690 = vadd.f32 0.0, %v689
  %691 = vdwg.mxu0
  %692 = vmatprep.subr.mxu0 %v444
  %693 = vmatpush1.msra.mxu0 %v443
  %694 = vmatprep.subr.mxu0 %v440
  %695 = vmatpush1.msra.mxu0 %v439
  %696 = vmatprep.subr.mxu0 %v436
  %697 = vmatpush1.msra.mxu0 %v435
  %698 = vmatprep.subr.mxu0 %v432
  %699 = vmatpush1.msra.mxu0 %v431
  %700 = vmatprep.subr.mxu0 %v428
  %701 = vmatpush1.msra.mxu0 %v427
  %702 = vmatprep.subr.mxu0 %v424
  %703 = vmatpush1.msra.mxu0 %v423
  %704 = vmatprep.subr.mxu0 %v420
  %705 = vmatpush1.msra.mxu0 %v419
  %706 = vmatprep.subr.mxu0 %v416
  %707 = vmatpush1.msra.mxu0 %v415
  %708 = vmatprep.subr.mxu0 %v412
  %709 = vmatpush1.msra.mxu0 %v411
  %710 = vmatprep.subr.mxu0 %v408
  %711 = vmatpush1.msra.mxu0 %v407
  %712 = vmatprep.subr.mxu0 %v404
  %713 = vmatpush1.msra.mxu0 %v403
  %714 = vmatprep.subr.mxu0 %v400
  %715 = vmatpush1.msra.mxu0 %v399
  %716 = vmatprep.subr.mxu0 %v396
  %717 = vmatpush1.msra.mxu0 %v395
  %718 = vmatprep.subr.mxu0 %v392
  %719 = vmatpush1.msra.mxu0 %v391
  %720 = vmatprep.subr.mxu0 %v388
  %721 = vmatpush1.msra.mxu0 %v387
  %722 = vmatprep.subr.mxu0 %v384
  %723 = vmatpush1.msra.mxu0 %v383
  %724 = vmatprep.subr.mxu0 0.0
  %725 = vmatpush2.msra.mxu0 0.0
  %726 = vmatprep.subr.mxu0 0.0
  %727 = vmatpush2.msra.mxu0 0.0
  %728 = vmatprep.subr.mxu0 0.0
  %729 = vmatpush2.msra.mxu0 0.0
  %730 = vmatprep.subr.mxu0 0.0
  %731 = vmatpush2.msra.mxu0 0.0
  %732 = vmatprep.subr.mxu0 0.0
  %733 = vmatpush2.msra.mxu0 0.0
  %734 = vmatprep.subr.mxu0 0.0
  %735 = vmatpush2.msra.mxu0 0.0
  %736 = vmatprep.subr.mxu0 0.0
  %737 = vmatpush2.msra.mxu0 0.0
  %738 = vmatprep.subr.mxu0 0.0
  %739 = vmatpush2.msra.mxu0 0.0
  %740 = vmatprep.subr.mxu0 0.0
  %741 = vmatpush2.msra.mxu0 0.0
  %742 = vmatprep.subr.mxu0 0.0
  %743 = vmatpush2.msra.mxu0 0.0
  %744 = vmatprep.subr.mxu0 0.0
  %745 = vmatpush2.msra.mxu0 0.0
  %746 = vmatprep.subr.mxu0 0.0
  %747 = vmatpush2.msra.mxu0 0.0
  %748 = vmatprep.subr.mxu0 0.0
  %749 = vmatpush2.msra.mxu0 0.0
  %750 = vmatprep.subr.mxu0 0.0
  %751 = vmatpush2.msra.mxu0 0.0
  %752 = vmatprep.subr.mxu0 0.0
  %753 = vmatpush2.msra.mxu0 0.0
  %754 = vmatprep.subr.mxu0 0.0
  %755 = vmatpush2.msra.mxu0 0.0
  %756 = vmatprep.mubr.f32.mxu0 0.0
  %757 = vmatmul.mubr.f32.gmra.mxu0 %v614
  %v758 = vpop.f32.mrf.mxu0
  %v759 = vadd.f32 0.0, %v758
  %v760 = vpop.f32.mrf.mxu0
  %v761 = vadd.f32 0.0, %v760
  %762 = vdwg.mxu0
  %v763 = vadd.f32 %v617, %v688
  %v764 = vadd.f32 %v618, %v690
  %v765 = vadd.f32 %v619, %v759
  %v766 = vadd.f32 %v620, %v761
  %v767 = vmul.f32 %v763, 0.5
  %v768 = vtanh.pop %v767
  %v769 = vmul.f32 %v768, 0.5
  %v770 = vadd.f32 %v769, 0.5
  %v771 = vmul.f32 %v764, 0.5
  %v772 = vtanh.pop %v771
  %v773 = vmul.f32 %v772, 0.5
  %v774 = vadd.f32 %v773, 0.5
  %v775 = vtanh.pop %v765
  %v776 = vmul.f32 %v766, 0.5
  %v777 = vtanh.pop %v776
  %v778 = vmul.f32 %v777, 0.5
  %v779 = vadd.f32 %v778, 0.5
  %v780 = vmul.f32 %v774, %v612
  %v781 = vmul.f32 %v770, %v775
  %v782 = vadd.f32 %v780, %v781
  %v783 = vtanh.pop %v782
  %v784 = vmul.f32 %v779, %v783
  %s785 = scalar_lea.vmem [#allocation5], 8
  %786 = vst [vmem:[%s785] sm:$0xff] %v784
  %s787 = scalar_lea.vmem [#allocation4], 64
  %v788 = vld [vmem:[%s787] sm:$0xff]
  %v789 = vld [vmem:[%s787 + $0x8] sm:$0xff]
  %v790 = vld [vmem:[%s787 + $0x10] sm:$0xff]
  %v791 = vld [vmem:[%s787 + $0x18] sm:$0xff]
  %792 = vmatprep.subr.mxu0 %v442
  %793 = vmatpush1.msra.mxu0 %v441
  %794 = vmatprep.subr.mxu0 %v438
  %795 = vmatpush1.msra.mxu0 %v437
  %796 = vmatprep.subr.mxu0 %v434
  %797 = vmatpush1.msra.mxu0 %v433
  %798 = vmatprep.subr.mxu0 %v430
  %799 = vmatpush1.msra.mxu0 %v429
  %800 = vmatprep.subr.mxu0 %v426
  %801 = vmatpush1.msra.mxu0 %v425
  %802 = vmatprep.subr.mxu0 %v422
  %803 = vmatpush1.msra.mxu0 %v421
  %804 = vmatprep.subr.mxu0 %v418
  %805 = vmatpush1.msra.mxu0 %v417
  %806 = vmatprep.subr.mxu0 %v414
  %807 = vmatpush1.msra.mxu0 %v413
  %808 = vmatprep.subr.mxu0 %v410
  %809 = vmatpush1.msra.mxu0 %v409
  %810 = vmatprep.subr.mxu0 %v406
  %811 = vmatpush1.msra.mxu0 %v405
  %812 = vmatprep.subr.mxu0 %v402
  %813 = vmatpush1.msra.mxu0 %v401
  %814 = vmatprep.subr.mxu0 %v398
  %815 = vmatpush1.msra.mxu0 %v397
  %816 = vmatprep.subr.mxu0 %v394
  %817 = vmatpush1.msra.mxu0 %v393
  %818 = vmatprep.subr.mxu0 %v390
  %819 = vmatpush1.msra.mxu0 %v389
  %820 = vmatprep.subr.mxu0 %v386
  %821 = vmatpush1.msra.mxu0 %v385
  %822 = vmatprep.subr.mxu0 %v382
  %823 = vmatpush1.msra.mxu0 %v381
  %824 = vmatprep.subr.mxu0 0.0
  %825 = vmatpush2.msra.mxu0 0.0
  %826 = vmatprep.subr.mxu0 0.0
  %827 = vmatpush2.msra.mxu0 0.0
  %828 = vmatprep.subr.mxu0 0.0
  %829 = vmatpush2.msra.mxu0 0.0
  %830 = vmatprep.subr.mxu0 0.0
  %831 = vmatpush2.msra.mxu0 0.0
  %832 = vmatprep.subr.mxu0 0.0
  %833 = vmatpush2.msra.mxu0 0.0
  %834 = vmatprep.subr.mxu0 0.0
  %835 = vmatpush2.msra.mxu0 0.0
  %836 = vmatprep.subr.mxu0 0.0
  %837 = vmatpush2.msra.mxu0 0.0
  %838 = vmatprep.subr.mxu0 0.0
  %839 = vmatpush2.msra.mxu0 0.0
  %840 = vmatprep.subr.mxu0 0.0
  %841 = vmatpush2.msra.mxu0 0.0
  %842 = vmatprep.subr.mxu0 0.0
  %843 = vmatpush2.msra.mxu0 0.0
  %844 = vmatprep.subr.mxu0 0.0
  %845 = vmatpush2.msra.mxu0 0.0
  %846 = vmatprep.subr.mxu0 0.0
  %847 = vmatpush2.msra.mxu0 0.0
  %848 = vmatprep.subr.mxu0 0.0
  %849 = vmatpush2.msra.mxu0 0.0
  %850 = vmatprep.subr.mxu0 0.0
  %851 = vmatpush2.msra.mxu0 0.0
  %852 = vmatprep.subr.mxu0 0.0
  %853 = vmatpush2.msra.mxu0 0.0
  %854 = vmatprep.subr.mxu0 0.0
  %855 = vmatpush2.msra.mxu0 0.0
  %856 = vmatprep.mubr.f32.mxu0 0.0
  %857 = vmatmul.mubr.f32.gmra.mxu0 %v784
  %v858 = vpop.f32.mrf.mxu0
  %v859 = vadd.f32 0.0, %v858
  %v860 = vpop.f32.mrf.mxu0
  %v861 = vadd.f32 0.0, %v860
  %862 = vdwg.mxu0
  %863 = vmatprep.subr.mxu0 %v444
  %864 = vmatpush1.msra.mxu0 %v443
  %865 = vmatprep.subr.mxu0 %v440
  %866 = vmatpush1.msra.mxu0 %v439
  %867 = vmatprep.subr.mxu0 %v436
  %868 = vmatpush1.msra.mxu0 %v435
  %869 = vmatprep.subr.mxu0 %v432
  %870 = vmatpush1.msra.mxu0 %v431
  %871 = vmatprep.subr.mxu0 %v428
  %872 = vmatpush1.msra.mxu0 %v427
  %873 = vmatprep.subr.mxu0 %v424
  %874 = vmatpush1.msra.mxu0 %v423
  %875 = vmatprep.subr.mxu0 %v420
  %876 = vmatpush1.msra.mxu0 %v419
  %877 = vmatprep.subr.mxu0 %v416
  %878 = vmatpush1.msra.mxu0 %v415
  %879 = vmatprep.subr.mxu0 %v412
  %880 = vmatpush1.msra.mxu0 %v411
  %881 = vmatprep.subr.mxu0 %v408
  %882 = vmatpush1.msra.mxu0 %v407
  %883 = vmatprep.subr.mxu0 %v404
  %884 = vmatpush1.msra.mxu0 %v403
  %885 = vmatprep.subr.mxu0 %v400
  %886 = vmatpush1.msra.mxu0 %v399
  %887 = vmatprep.subr.mxu0 %v396
  %888 = vmatpush1.msra.mxu0 %v395
  %889 = vmatprep.subr.mxu0 %v392
  %890 = vmatpush1.msra.mxu0 %v391
  %891 = vmatprep.subr.mxu0 %v388
  %892 = vmatpush1.msra.mxu0 %v387
  %893 = vmatprep.subr.mxu0 %v384
  %894 = vmatpush1.msra.mxu0 %v383
  %895 = vmatprep.subr.mxu0 0.0
  %896 = vmatpush2.msra.mxu0 0.0
  %897 = vmatprep.subr.mxu0 0.0
  %898 = vmatpush2.msra.mxu0 0.0
  %899 = vmatprep.subr.mxu0 0.0
  %900 = vmatpush2.msra.mxu0 0.0
  %901 = vmatprep.subr.mxu0 0.0
  %902 = vmatpush2.msra.mxu0 0.0
  %903 = vmatprep.subr.mxu0 0.0
  %904 = vmatpush2.msra.mxu0 0.0
  %905 = vmatprep.subr.mxu0 0.0
  %906 = vmatpush2.msra.mxu0 0.0
  %907 = vmatprep.subr.mxu0 0.0
  %908 = vmatpush2.msra.mxu0 0.0
  %909 = vmatprep.subr.mxu0 0.0
  %910 = vmatpush2.msra.mxu0 0.0
  %911 = vmatprep.subr.mxu0 0.0
  %912 = vmatpush2.msra.mxu0 0.0
  %913 = vmatprep.subr.mxu0 0.0
  %914 = vmatpush2.msra.mxu0 0.0
  %915 = vmatprep.subr.mxu0 0.0
  %916 = vmatpush2.msra.mxu0 0.0
  %917 = vmatprep.subr.mxu0 0.0
  %918 = vmatpush2.msra.mxu0 0.0
  %919 = vmatprep.subr.mxu0 0.0
  %920 = vmatpush2.msra.mxu0 0.0
  %921 = vmatprep.subr.mxu0 0.0
  %922 = vmatpush2.msra.mxu0 0.0
  %923 = vmatprep.subr.mxu0 0.0
  %924 = vmatpush2.msra.mxu0 0.0
  %925 = vmatprep.subr.mxu0 0.0
  %926 = vmatpush2.msra.mxu0 0.0
  %927 = vmatprep.mubr.f32.mxu0 0.0
  %928 = vmatmul.mubr.f32.gmra.mxu0 %v784
  %v929 = vpop.f32.mrf.mxu0
  %v930 = vadd.f32 0.0, %v929
  %v931 = vpop.f32.mrf.mxu0
  %v932 = vadd.f32 0.0, %v931
  %933 = vdwg.mxu0
  %v934 = vadd.f32 %v788, %v859
  %v935 = vadd.f32 %v789, %v861
  %v936 = vadd.f32 %v790, %v930
  %v937 = vadd.f32 %v791, %v932
  %v938 = vmul.f32 %v934, 0.5
  %v939 = vtanh.pop %v938
  %v940 = vmul.f32 %v939, 0.5
  %v941 = vadd.f32 %v940, 0.5
  %v942 = vmul.f32 %v935, 0.5
  %v943 = vtanh.pop %v942
  %v944 = vmul.f32 %v943, 0.5
  %v945 = vadd.f32 %v944, 0.5
  %v946 = vtanh.pop %v936
  %v947 = vmul.f32 %v937, 0.5
  %v948 = vtanh.pop %v947
  %v949 = vmul.f32 %v948, 0.5
  %v950 = vadd.f32 %v949, 0.5
  %v951 = vmul.f32 %v945, %v782
  %v952 = vmul.f32 %v941, %v946
  %v953 = vadd.f32 %v951, %v952
  %v954 = vtanh.pop %v953
  %v955 = vmul.f32 %v950, %v954
  %s956 = scalar_lea.vmem [#allocation5], 16
  %957 = vst [vmem:[%s956] sm:$0xff] %v955
  %s958 = scalar_lea.vmem [#allocation4], 96
  %v959 = vld [vmem:[%s958] sm:$0xff]
  %v960 = vld [vmem:[%s958 + $0x8] sm:$0xff]
  %v961 = vld [vmem:[%s958 + $0x10] sm:$0xff]
  %v962 = vld [vmem:[%s958 + $0x18] sm:$0xff]
  %963 = vmatprep.subr.mxu0 %v442
  %964 = vmatpush1.msra.mxu0 %v441
  %965 = vmatprep.subr.mxu0 %v438
  %966 = vmatpush1.msra.mxu0 %v437
  %967 = vmatprep.subr.mxu0 %v434
  %968 = vmatpush1.msra.mxu0 %v433
  %969 = vmatprep.subr.mxu0 %v430
  %970 = vmatpush1.msra.mxu0 %v429
  %971 = vmatprep.subr.mxu0 %v426
  %972 = vmatpush1.msra.mxu0 %v425
  %973 = vmatprep.subr.mxu0 %v422
  %974 = vmatpush1.msra.mxu0 %v421
  %975 = vmatprep.subr.mxu0 %v418
  %976 = vmatpush1.msra.mxu0 %v417
  %977 = vmatprep.subr.mxu0 %v414
  %978 = vmatpush1.msra.mxu0 %v413
  %979 = vmatprep.subr.mxu0 %v410
  %980 = vmatpush1.msra.mxu0 %v409
  %981 = vmatprep.subr.mxu0 %v406
  %982 = vmatpush1.msra.mxu0 %v405
  %983 = vmatprep.subr.mxu0 %v402
  %984 = vmatpush1.msra.mxu0 %v401
  %985 = vmatprep.subr.mxu0 %v398
  %986 = vmatpush1.msra.mxu0 %v397
  %987 = vmatprep.subr.mxu0 %v394
  %988 = vmatpush1.msra.mxu0 %v393
  %989 = vmatprep.subr.mxu0 %v390
  %990 = vmatpush1.msra.mxu0 %v389
  %991 = vmatprep.subr.mxu0 %v386
  %992 = vmatpush1.msra.mxu0 %v385
  %993 = vmatprep.subr.mxu0 %v382
  %994 = vmatpush1.msra.mxu0 %v381
  %995 = vmatprep.subr.mxu0 0.0
  %996 = vmatpush2.msra.mxu0 0.0
  %997 = vmatprep.subr.mxu0 0.0
  %998 = vmatpush2.msra.mxu0 0.0
  %999 = vmatprep.subr.mxu0 0.0
  %1000 = vmatpush2.msra.mxu0 0.0
  %1001 = vmatprep.subr.mxu0 0.0
  %1002 = vmatpush2.msra.mxu0 0.0
  %1003 = vmatprep.subr.mxu0 0.0
  %1004 = vmatpush2.msra.mxu0 0.0
  %1005 = vmatprep.subr.mxu0 0.0
  %1006 = vmatpush2.msra.mxu0 0.0
  %1007 = vmatprep.subr.mxu0 0.0
  %1008 = vmatpush2.msra.mxu0 0.0
  %1009 = vmatprep.subr.mxu0 0.0
  %1010 = vmatpush2.msra.mxu0 0.0
  %1011 = vmatprep.subr.mxu0 0.0
  %1012 = vmatpush2.msra.mxu0 0.0
  %1013 = vmatprep.subr.mxu0 0.0
  %1014 = vmatpush2.msra.mxu0 0.0
  %1015 = vmatprep.subr.mxu0 0.0
  %1016 = vmatpush2.msra.mxu0 0.0
  %1017 = vmatprep.subr.mxu0 0.0
  %1018 = vmatpush2.msra.mxu0 0.0
  %1019 = vmatprep.subr.mxu0 0.0
  %1020 = vmatpush2.msra.mxu0 0.0
  %1021 = vmatprep.subr.mxu0 0.0
  %1022 = vmatpush2.msra.mxu0 0.0
  %1023 = vmatprep.subr.mxu0 0.0
  %1024 = vmatpush2.msra.mxu0 0.0
  %1025 = vmatprep.subr.mxu0 0.0
  %1026 = vmatpush2.msra.mxu0 0.0
  %1027 = vmatprep.mubr.f32.mxu0 0.0
  %1028 = vmatmul.mubr.f32.gmra.mxu0 %v955
  %v1029 = vpop.f32.mrf.mxu0
  %v1030 = vadd.f32 0.0, %v1029
  %v1031 = vpop.f32.mrf.mxu0
  %v1032 = vadd.f32 0.0, %v1031
  %1033 = vdwg.mxu0
  %1034 = vmatprep.subr.mxu0 %v444
  %1035 = vmatpush1.msra.mxu0 %v443
  %1036 = vmatprep.subr.mxu0 %v440
  %1037 = vmatpush1.msra.mxu0 %v439
  %1038 = vmatprep.subr.mxu0 %v436
  %1039 = vmatpush1.msra.mxu0 %v435
  %1040 = vmatprep.subr.mxu0 %v432
  %1041 = vmatpush1.msra.mxu0 %v431
  %1042 = vmatprep.subr.mxu0 %v428
  %1043 = vmatpush1.msra.mxu0 %v427
  %1044 = vmatprep.subr.mxu0 %v424
  %1045 = vmatpush1.msra.mxu0 %v423
  %1046 = vmatprep.subr.mxu0 %v420
  %1047 = vmatpush1.msra.mxu0 %v419
  %1048 = vmatprep.subr.mxu0 %v416
  %1049 = vmatpush1.msra.mxu0 %v415
  %1050 = vmatprep.subr.mxu0 %v412
  %1051 = vmatpush1.msra.mxu0 %v411
  %1052 = vmatprep.subr.mxu0 %v408
  %1053 = vmatpush1.msra.mxu0 %v407
  %1054 = vmatprep.subr.mxu0 %v404
  %1055 = vmatpush1.msra.mxu0 %v403
  %1056 = vmatprep.subr.mxu0 %v400
  %1057 = vmatpush1.msra.mxu0 %v399
  %1058 = vmatprep.subr.mxu0 %v396
  %1059 = vmatpush1.msra.mxu0 %v395
  %1060 = vmatprep.subr.mxu0 %v392
  %1061 = vmatpush1.msra.mxu0 %v391
  %1062 = vmatprep.subr.mxu0 %v388
  %1063 = vmatpush1.msra.mxu0 %v387
  %1064 = vmatprep.subr.mxu0 %v384
  %1065 = vmatpush1.msra.mxu0 %v383
  %1066 = vmatprep.subr.mxu0 0.0
  %1067 = vmatpush2.msra.mxu0 0.0
  %1068 = vmatprep.subr.mxu0 0.0
  %1069 = vmatpush2.msra.mxu0 0.0
  %1070 = vmatprep.subr.mxu0 0.0
  %1071 = vmatpush2.msra.mxu0 0.0
  %1072 = vmatprep.subr.mxu0 0.0
  %1073 = vmatpush2.msra.mxu0 0.0
  %1074 = vmatprep.subr.mxu0 0.0
  %1075 = vmatpush2.msra.mxu0 0.0
  %1076 = vmatprep.subr.mxu0 0.0
  %1077 = vmatpush2.msra.mxu0 0.0
  %1078 = vmatprep.subr.mxu0 0.0
  %1079 = vmatpush2.msra.mxu0 0.0
  %1080 = vmatprep.subr.mxu0 0.0
  %1081 = vmatpush2.msra.mxu0 0.0
  %1082 = vmatprep.subr.mxu0 0.0
  %1083 = vmatpush2.msra.mxu0 0.0
  %1084 = vmatprep.subr.mxu0 0.0
  %1085 = vmatpush2.msra.mxu0 0.0
  %1086 = vmatprep.subr.mxu0 0.0
  %1087 = vmatpush2.msra.mxu0 0.0
  %1088 = vmatprep.subr.mxu0 0.0
  %1089 = vmatpush2.msra.mxu0 0.0
  %1090 = vmatprep.subr.mxu0 0.0
  %1091 = vmatpush2.msra.mxu0 0.0
  %1092 = vmatprep.subr.mxu0 0.0
  %1093 = vmatpush2.msra.mxu0 0.0
  %1094 = vmatprep.subr.mxu0 0.0
  %1095 = vmatpush2.msra.mxu0 0.0
  %1096 = vmatprep.subr.mxu0 0.0
  %1097 = vmatpush2.msra.mxu0 0.0
  %1098 = vmatprep.mubr.f32.mxu0 0.0
  %1099 = vmatmul.mubr.f32.gmra.mxu0 %v955
  %v1100 = vpop.f32.mrf.mxu0
  %v1101 = vadd.f32 0.0, %v1100
  %v1102 = vpop.f32.mrf.mxu0
  %v1103 = vadd.f32 0.0, %v1102
  %1104 = vdwg.mxu0
  %v1105 = vadd.f32 %v959, %v1030
  %v1106 = vadd.f32 %v960, %v1032
  %v1107 = vadd.f32 %v961, %v1101
  %v1108 = vadd.f32 %v962, %v1103
  %v1109 = vmul.f32 %v1105, 0.5
  %v1110 = vtanh.pop %v1109
  %v1111 = vmul.f32 %v1110, 0.5
  %v1112 = vadd.f32 %v1111, 0.5
  %v1113 = vmul.f32 %v1106, 0.5
  %v1114 = vtanh.pop %v1113
  %v1115 = vmul.f32 %v1114, 0.5
  %v1116 = vadd.f32 %v1115, 0.5
  %v1117 = vtanh.pop %v1107
  %v1118 = vmul.f32 %v1108, 0.5
  %v1119 = vtanh.pop %v1118
  %v1120 = vmul.f32 %v1119, 0.5
  %v1121 = vadd.f32 %v1120, 0.5
  %v1122 = vmul.f32 %v1116, %v953
  %v1123 = vmul.f32 %v1112, %v1117
  %v1124 = vadd.f32 %v1122, %v1123
  %v1125 = vtanh.pop %v1124
  %v1126 = vmul.f32 %v1121, %v1125
  %s1127 = scalar_lea.vmem [#allocation5], 24
  %1128 = vst [vmem:[%s1127] sm:$0xff] %v1126
  %s1129 = scalar_lea.vmem [#allocation4], 128
  %v1130 = vld [vmem:[%s1129] sm:$0xff]
  %v1131 = vld [vmem:[%s1129 + $0x8] sm:$0xff]
  %v1132 = vld [vmem:[%s1129 + $0x10] sm:$0xff]
  %v1133 = vld [vmem:[%s1129 + $0x18] sm:$0xff]
  %1134 = vmatprep.subr.mxu0 %v442
  %1135 = vmatpush1.msra.mxu0 %v441
  %1136 = vmatprep.subr.mxu0 %v438
  %1137 = vmatpush1.msra.mxu0 %v437
  %1138 = vmatprep.subr.mxu0 %v434
  %1139 = vmatpush1.msra.mxu0 %v433
  %1140 = vmatprep.subr.mxu0 %v430
  %1141 = vmatpush1.msra.mxu0 %v429
  %1142 = vmatprep.subr.mxu0 %v426
  %1143 = vmatpush1.msra.mxu0 %v425
  %1144 = vmatprep.subr.mxu0 %v422
  %1145 = vmatpush1.msra.mxu0 %v421
  %1146 = vmatprep.subr.mxu0 %v418
  %1147 = vmatpush1.msra.mxu0 %v417
  %1148 = vmatprep.subr.mxu0 %v414
  %1149 = vmatpush1.msra.mxu0 %v413
  %1150 = vmatprep.subr.mxu0 %v410
  %1151 = vmatpush1.msra.mxu0 %v409
  %1152 = vmatprep.subr.mxu0 %v406
  %1153 = vmatpush1.msra.mxu0 %v405
  %1154 = vmatprep.subr.mxu0 %v402
  %1155 = vmatpush1.msra.mxu0 %v401
  %1156 = vmatprep.subr.mxu0 %v398
  %1157 = vmatpush1.msra.mxu0 %v397
  %1158 = vmatprep.subr.mxu0 %v394
  %1159 = vmatpush1.msra.mxu0 %v393
  %1160 = vmatprep.subr.mxu0 %v390
  %1161 = vmatpush1.msra.mxu0 %v389
  %1162 = vmatprep.subr.mxu0 %v386
  %1163 = vmatpush1.msra.mxu0 %v385
  %1164 = vmatprep.subr.mxu0 %v382
  %1165 = vmatpush1.msra.mxu0 %v381
  %1166 = vmatprep.subr.mxu0 0.0
  %1167 = vmatpush2.msra.mxu0 0.0
  %1168 = vmatprep.subr.mxu0 0.0
  %1169 = vmatpush2.msra.mxu0 0.0
  %1170 = vmatprep.subr.mxu0 0.0
  %1171 = vmatpush2.msra.mxu0 0.0
  %1172 = vmatprep.subr.mxu0 0.0
  %1173 = vmatpush2.msra.mxu0 0.0
  %1174 = vmatprep.subr.mxu0 0.0
  %1175 = vmatpush2.msra.mxu0 0.0
  %1176 = vmatprep.subr.mxu0 0.0
  %1177 = vmatpush2.msra.mxu0 0.0
  %1178 = vmatprep.subr.mxu0 0.0
  %1179 = vmatpush2.msra.mxu0 0.0
  %1180 = vmatprep.subr.mxu0 0.0
  %1181 = vmatpush2.msra.mxu0 0.0
  %1182 = vmatprep.subr.mxu0 0.0
  %1183 = vmatpush2.msra.mxu0 0.0
  %1184 = vmatprep.subr.mxu0 0.0
  %1185 = vmatpush2.msra.mxu0 0.0
  %1186 = vmatprep.subr.mxu0 0.0
  %1187 = vmatpush2.msra.mxu0 0.0
  %1188 = vmatprep.subr.mxu0 0.0
  %1189 = vmatpush2.msra.mxu0 0.0
  %1190 = vmatprep.subr.mxu0 0.0
  %1191 = vmatpush2.msra.mxu0 0.0
  %1192 = vmatprep.subr.mxu0 0.0
  %1193 = vmatpush2.msra.mxu0 0.0
  %1194 = vmatprep.subr.mxu0 0.0
  %1195 = vmatpush2.msra.mxu0 0.0
  %1196 = vmatprep.subr.mxu0 0.0
  %1197 = vmatpush2.msra.mxu0 0.0
  %1198 = vmatprep.mubr.f32.mxu0 0.0
  %1199 = vmatmul.mubr.f32.gmra.mxu0 %v1126
  %v1200 = vpop.f32.mrf.mxu0
  %v1201 = vadd.f32 0.0, %v1200
  %v1202 = vpop.f32.mrf.mxu0
  %v1203 = vadd.f32 0.0, %v1202
  %1204 = vdwg.mxu0
  %1205 = vmatprep.subr.mxu0 %v444
  %1206 = vmatpush1.msra.mxu0 %v443
  %1207 = vmatprep.subr.mxu0 %v440
  %1208 = vmatpush1.msra.mxu0 %v439
  %1209 = vmatprep.subr.mxu0 %v436
  %1210 = vmatpush1.msra.mxu0 %v435
  %1211 = vmatprep.subr.mxu0 %v432
  %1212 = vmatpush1.msra.mxu0 %v431
  %1213 = vmatprep.subr.mxu0 %v428
  %1214 = vmatpush1.msra.mxu0 %v427
  %1215 = vmatprep.subr.mxu0 %v424
  %1216 = vmatpush1.msra.mxu0 %v423
  %1217 = vmatprep.subr.mxu0 %v420
  %1218 = vmatpush1.msra.mxu0 %v419
  %1219 = vmatprep.subr.mxu0 %v416
  %1220 = vmatpush1.msra.mxu0 %v415
  %1221 = vmatprep.subr.mxu0 %v412
  %1222 = vmatpush1.msra.mxu0 %v411
  %1223 = vmatprep.subr.mxu0 %v408
  %1224 = vmatpush1.msra.mxu0 %v407
  %1225 = vmatprep.subr.mxu0 %v404
  %1226 = vmatpush1.msra.mxu0 %v403
  %1227 = vmatprep.subr.mxu0 %v400
  %1228 = vmatpush1.msra.mxu0 %v399
  %1229 = vmatprep.subr.mxu0 %v396
  %1230 = vmatpush1.msra.mxu0 %v395
  %1231 = vmatprep.subr.mxu0 %v392
  %1232 = vmatpush1.msra.mxu0 %v391
  %1233 = vmatprep.subr.mxu0 %v388
  %1234 = vmatpush1.msra.mxu0 %v387
  %1235 = vmatprep.subr.mxu0 %v384
  %1236 = vmatpush1.msra.mxu0 %v383
  %1237 = vmatprep.subr.mxu0 0.0
  %1238 = vmatpush2.msra.mxu0 0.0
  %1239 = vmatprep.subr.mxu0 0.0
  %1240 = vmatpush2.msra.mxu0 0.0
  %1241 = vmatprep.subr.mxu0 0.0
  %1242 = vmatpush2.msra.mxu0 0.0
  %1243 = vmatprep.subr.mxu0 0.0
  %1244 = vmatpush2.msra.mxu0 0.0
  %1245 = vmatprep.subr.mxu0 0.0
  %1246 = vmatpush2.msra.mxu0 0.0
  %1247 = vmatprep.subr.mxu0 0.0
  %1248 = vmatpush2.msra.mxu0 0.0
  %1249 = vmatprep.subr.mxu0 0.0
  %1250 = vmatpush2.msra.mxu0 0.0
  %1251 = vmatprep.subr.mxu0 0.0
  %1252 = vmatpush2.msra.mxu0 0.0
  %1253 = vmatprep.subr.mxu0 0.0
  %1254 = vmatpush2.msra.mxu0 0.0
  %1255 = vmatprep.subr.mxu0 0.0
  %1256 = vmatpush2.msra.mxu0 0.0
  %1257 = vmatprep.subr.mxu0 0.0
  %1258 = vmatpush2.msra.mxu0 0.0
  %1259 = vmatprep.subr.mxu0 0.0
  %1260 = vmatpush2.msra.mxu0 0.0
  %1261 = vmatprep.subr.mxu0 0.0
  %1262 = vmatpush2.msra.mxu0 0.0
  %1263 = vmatprep.subr.mxu0 0.0
  %1264 = vmatpush2.msra.mxu0 0.0
  %1265 = vmatprep.subr.mxu0 0.0
  %1266 = vmatpush2.msra.mxu0 0.0
  %1267 = vmatprep.subr.mxu0 0.0
  %1268 = vmatpush2.msra.mxu0 0.0
  %1269 = vmatprep.mubr.f32.mxu0 0.0
  %1270 = vmatmul.mubr.f32.gmra.mxu0 %v1126
  %v1271 = vpop.f32.mrf.mxu0
  %v1272 = vadd.f32 0.0, %v1271
  %v1273 = vpop.f32.mrf.mxu0
  %v1274 = vadd.f32 0.0, %v1273
  %1275 = vdwg.mxu0
  %v1276 = vadd.f32 %v1130, %v1201
  %v1277 = vadd.f32 %v1131, %v1203
  %v1278 = vadd.f32 %v1132, %v1272
  %v1279 = vadd.f32 %v1133, %v1274
  %v1280 = vmul.f32 %v1276, 0.5
  %v1281 = vtanh.pop %v1280
  %v1282 = vmul.f32 %v1281, 0.5
  %v1283 = vadd.f32 %v1282, 0.5
  %v1284 = vmul.f32 %v1277, 0.5
  %v1285 = vtanh.pop %v1284
  %v1286 = vmul.f32 %v1285, 0.5
  %v1287 = vadd.f32 %v1286, 0.5
  %v1288 = vtanh.pop %v1278
  %v1289 = vmul.f32 %v1279, 0.5
  %v1290 = vtanh.pop %v1289
  %v1291 = vmul.f32 %v1290, 0.5
  %v1292 = vadd.f32 %v1291, 0.5
  %v1293 = vmul.f32 %v1287, %v1124
  %v1294 = vmul.f32 %v1283, %v1288
  %v1295 = vadd.f32 %v1293, %v1294
  %v1296 = vtanh.pop %v1295
  %v1297 = vmul.f32 %v1292, %v1296
  %s1298 = scalar_lea.vmem [#allocation5], 32
  %1299 = vst [vmem:[%s1298] sm:$0xff] %v1297
  %s1300 = scalar_lea.vmem [#allocation4], 160
  %v1301 = vld [vmem:[%s1300] sm:$0xff]
  %v1302 = vld [vmem:[%s1300 + $0x8] sm:$0xff]
  %v1303 = vld [vmem:[%s1300 + $0x10] sm:$0xff]
  %v1304 = vld [vmem:[%s1300 + $0x18] sm:$0xff]
  %1305 = vmatprep.subr.mxu0 %v442
  %1306 = vmatpush1.msra.mxu0 %v441
  %1307 = vmatprep.subr.mxu0 %v438
  %1308 = vmatpush1.msra.mxu0 %v437
  %1309 = vmatprep.subr.mxu0 %v434
  %1310 = vmatpush1.msra.mxu0 %v433
  %1311 = vmatprep.subr.mxu0 %v430
  %1312 = vmatpush1.msra.mxu0 %v429
  %1313 = vmatprep.subr.mxu0 %v426
  %1314 = vmatpush1.msra.mxu0 %v425
  %1315 = vmatprep.subr.mxu0 %v422
  %1316 = vmatpush1.msra.mxu0 %v421
  %1317 = vmatprep.subr.mxu0 %v418
  %1318 = vmatpush1.msra.mxu0 %v417
  %1319 = vmatprep.subr.mxu0 %v414
  %1320 = vmatpush1.msra.mxu0 %v413
  %1321 = vmatprep.subr.mxu0 %v410
  %1322 = vmatpush1.msra.mxu0 %v409
  %1323 = vmatprep.subr.mxu0 %v406
  %1324 = vmatpush1.msra.mxu0 %v405
  %1325 = vmatprep.subr.mxu0 %v402
  %1326 = vmatpush1.msra.mxu0 %v401
  %1327 = vmatprep.subr.mxu0 %v398
  %1328 = vmatpush1.msra.mxu0 %v397
  %1329 = vmatprep.subr.mxu0 %v394
  %1330 = vmatpush1.msra.mxu0 %v393
  %1331 = vmatprep.subr.mxu0 %v390
  %1332 = vmatpush1.msra.mxu0 %v389
  %1333 = vmatprep.subr.mxu0 %v386
  %1334 = vmatpush1.msra.mxu0 %v385
  %1335 = vmatprep.subr.mxu0 %v382
  %1336 = vmatpush1.msra.mxu0 %v381
  %1337 = vmatprep.subr.mxu0 0.0
  %1338 = vmatpush2.msra.mxu0 0.0
  %1339 = vmatprep.subr.mxu0 0.0
  %1340 = vmatpush2.msra.mxu0 0.0
  %1341 = vmatprep.subr.mxu0 0.0
  %1342 = vmatpush2.msra.mxu0 0.0
  %1343 = vmatprep.subr.mxu0 0.0
  %1344 = vmatpush2.msra.mxu0 0.0
  %1345 = vmatprep.subr.mxu0 0.0
  %1346 = vmatpush2.msra.mxu0 0.0
  %1347 = vmatprep.subr.mxu0 0.0
  %1348 = vmatpush2.msra.mxu0 0.0
  %1349 = vmatprep.subr.mxu0 0.0
  %1350 = vmatpush2.msra.mxu0 0.0
  %1351 = vmatprep.subr.mxu0 0.0
  %1352 = vmatpush2.msra.mxu0 0.0
  %1353 = vmatprep.subr.mxu0 0.0
  %1354 = vmatpush2.msra.mxu0 0.0
  %1355 = vmatprep.subr.mxu0 0.0
  %1356 = vmatpush2.msra.mxu0 0.0
  %1357 = vmatprep.subr.mxu0 0.0
  %1358 = vmatpush2.msra.mxu0 0.0
  %1359 = vmatprep.subr.mxu0 0.0
  %1360 = vmatpush2.msra.mxu0 0.0
  %1361 = vmatprep.subr.mxu0 0.0
  %1362 = vmatpush2.msra.mxu0 0.0
  %1363 = vmatprep.subr.mxu0 0.0
  %1364 = vmatpush2.msra.mxu0 0.0
  %1365 = vmatprep.subr.mxu0 0.0
  %1366 = vmatpush2.msra.mxu0 0.0
  %1367 = vmatprep.subr.mxu0 0.0
  %1368 = vmatpush2.msra.mxu0 0.0
  %1369 = vmatprep.mubr.f32.mxu0 0.0
  %1370 = vmatmul.mubr.f32.gmra.mxu0 %v1297
  %v1371 = vpop.f32.mrf.mxu0
  %v1372 = vadd.f32 0.0, %v1371
  %v1373 = vpop.f32.mrf.mxu0
  %v1374 = vadd.f32 0.0, %v1373
  %1375 = vdwg.mxu0
  %1376 = vmatprep.subr.mxu0 %v444
  %1377 = vmatpush1.msra.mxu0 %v443
  %1378 = vmatprep.subr.mxu0 %v440
  %1379 = vmatpush1.msra.mxu0 %v439
  %1380 = vmatprep.subr.mxu0 %v436
  %1381 = vmatpush1.msra.mxu0 %v435
  %1382 = vmatprep.subr.mxu0 %v432
  %1383 = vmatpush1.msra.mxu0 %v431
  %1384 = vmatprep.subr.mxu0 %v428
  %1385 = vmatpush1.msra.mxu0 %v427
  %1386 = vmatprep.subr.mxu0 %v424
  %1387 = vmatpush1.msra.mxu0 %v423
  %1388 = vmatprep.subr.mxu0 %v420
  %1389 = vmatpush1.msra.mxu0 %v419
  %1390 = vmatprep.subr.mxu0 %v416
  %1391 = vmatpush1.msra.mxu0 %v415
  %1392 = vmatprep.subr.mxu0 %v412
  %1393 = vmatpush1.msra.mxu0 %v411
  %1394 = vmatprep.subr.mxu0 %v408
  %1395 = vmatpush1.msra.mxu0 %v407
  %1396 = vmatprep.subr.mxu0 %v404
  %1397 = vmatpush1.msra.mxu0 %v403
  %1398 = vmatprep.subr.mxu0 %v400
  %1399 = vmatpush1.msra.mxu0 %v399
  %1400 = vmatprep.subr.mxu0 %v396
  %1401 = vmatpush1.msra.mxu0 %v395
  %1402 = vmatprep.subr.mxu0 %v392
  %1403 = vmatpush1.msra.mxu0 %v391
  %1404 = vmatprep.subr.mxu0 %v388
  %1405 = vmatpush1.msra.mxu0 %v387
  %1406 = vmatprep.subr.mxu0 %v384
  %1407 = vmatpush1.msra.mxu0 %v383
  %1408 = vmatprep.subr.mxu0 0.0
  %1409 = vmatpush2.msra.mxu0 0.0
  %1410 = vmatprep.subr.mxu0 0.0
  %1411 = vmatpush2.msra.mxu0 0.0
  %1412 = vmatprep.subr.mxu0 0.0
  %1413 = vmatpush2.msra.mxu0 0.0
  %1414 = vmatprep.subr.mxu0 0.0
  %1415 = vmatpush2.msra.mxu0 0.0
  %1416 = vmatprep.subr.mxu0 0.0
  %1417 = vmatpush2.msra.mxu0 0.0
  %1418 = vmatprep.subr.mxu0 0.0
  %1419 = vmatpush2.msra.mxu0 0.0
  %1420 = vmatprep.subr.mxu0 0.0
  %1421 = vmatpush2.msra.mxu0 0.0
  %1422 = vmatprep.subr.mxu0 0.0
  %1423 = vmatpush2.msra.mxu0 0.0
  %1424 = vmatprep.subr.mxu0 0.0
  %1425 = vmatpush2.msra.mxu0 0.0
  %1426 = vmatprep.subr.mxu0 0.0
  %1427 = vmatpush2.msra.mxu0 0.0
  %1428 = vmatprep.subr.mxu0 0.0
  %1429 = vmatpush2.msra.mxu0 0.0
  %1430 = vmatprep.subr.mxu0 0.0
  %1431 = vmatpush2.msra.mxu0 0.0
  %1432 = vmatprep.subr.mxu0 0.0
  %1433 = vmatpush2.msra.mxu0 0.0
  %1434 = vmatprep.subr.mxu0 0.0
  %1435 = vmatpush2.msra.mxu0 0.0
  %1436 = vmatprep.subr.mxu0 0.0
  %1437 = vmatpush2.msra.mxu0 0.0
  %1438 = vmatprep.subr.mxu0 0.0
  %1439 = vmatpush2.msra.mxu0 0.0
  %1440 = vmatprep.mubr.f32.mxu0 0.0
  %1441 = vmatmul.mubr.f32.gmra.mxu0 %v1297
  %v1442 = vpop.f32.mrf.mxu0
  %v1443 = vadd.f32 0.0, %v1442
  %v1444 = vpop.f32.mrf.mxu0
  %v1445 = vadd.f32 0.0, %v1444
  %1446 = vdwg.mxu0
  %v1447 = vadd.f32 %v1301, %v1372
  %v1448 = vadd.f32 %v1302, %v1374
  %v1449 = vadd.f32 %v1303, %v1443
  %v1450 = vadd.f32 %v1304, %v1445
  %v1451 = vmul.f32 %v1447, 0.5
  %v1452 = vtanh.pop %v1451
  %v1453 = vmul.f32 %v1452, 0.5
  %v1454 = vadd.f32 %v1453, 0.5
  %v1455 = vmul.f32 %v1448, 0.5
  %v1456 = vtanh.pop %v1455
  %v1457 = vmul.f32 %v1456, 0.5
  %v1458 = vadd.f32 %v1457, 0.5
  %v1459 = vtanh.pop %v1449
  %v1460 = vmul.f32 %v1450, 0.5
  %v1461 = vtanh.pop %v1460
  %v1462 = vmul.f32 %v1461, 0.5
  %v1463 = vadd.f32 %v1462, 0.5
  %v1464 = vmul.f32 %v1458, %v1295
  %v1465 = vmul.f32 %v1454, %v1459
  %v1466 = vadd.f32 %v1464, %v1465
  %v1467 = vtanh.pop %v1466
  %v1468 = vmul.f32 %v1463, %v1467
  %s1469 = scalar_lea.vmem [#allocation5], 40
  %1470 = vst [vmem:[%s1469] sm:$0xff] %v1468
  %s1471 = scalar_lea.vmem [#allocation4], 192
  %v1472 = vld [vmem:[%s1471] sm:$0xff]
  %v1473 = vld [vmem:[%s1471 + $0x8] sm:$0xff]
  %v1474 = vld [vmem:[%s1471 + $0x10] sm:$0xff]
  %v1475 = vld [vmem:[%s1471 + $0x18] sm:$0xff]
  %1476 = vmatprep.subr.mxu0 %v442
  %1477 = vmatpush1.msra.mxu0 %v441
  %1478 = vmatprep.subr.mxu0 %v438
  %1479 = vmatpush1.msra.mxu0 %v437
  %1480 = vmatprep.subr.mxu0 %v434
  %1481 = vmatpush1.msra.mxu0 %v433
  %1482 = vmatprep.subr.mxu0 %v430
  %1483 = vmatpush1.msra.mxu0 %v429
  %1484 = vmatprep.subr.mxu0 %v426
  %1485 = vmatpush1.msra.mxu0 %v425
  %1486 = vmatprep.subr.mxu0 %v422
  %1487 = vmatpush1.msra.mxu0 %v421
  %1488 = vmatprep.subr.mxu0 %v418
  %1489 = vmatpush1.msra.mxu0 %v417
  %1490 = vmatprep.subr.mxu0 %v414
  %1491 = vmatpush1.msra.mxu0 %v413
  %1492 = vmatprep.subr.mxu0 %v410
  %1493 = vmatpush1.msra.mxu0 %v409
  %1494 = vmatprep.subr.mxu0 %v406
  %1495 = vmatpush1.msra.mxu0 %v405
  %1496 = vmatprep.subr.mxu0 %v402
  %1497 = vmatpush1.msra.mxu0 %v401
  %1498 = vmatprep.subr.mxu0 %v398
  %1499 = vmatpush1.msra.mxu0 %v397
  %1500 = vmatprep.subr.mxu0 %v394
  %1501 = vmatpush1.msra.mxu0 %v393
  %1502 = vmatprep.subr.mxu0 %v390
  %1503 = vmatpush1.msra.mxu0 %v389
  %1504 = vmatprep.subr.mxu0 %v386
  %1505 = vmatpush1.msra.mxu0 %v385
  %1506 = vmatprep.subr.mxu0 %v382
  %1507 = vmatpush1.msra.mxu0 %v381
  %1508 = vmatprep.subr.mxu0 0.0
  %1509 = vmatpush2.msra.mxu0 0.0
  %1510 = vmatprep.subr.mxu0 0.0
  %1511 = vmatpush2.msra.mxu0 0.0
  %1512 = vmatprep.subr.mxu0 0.0
  %1513 = vmatpush2.msra.mxu0 0.0
  %1514 = vmatprep.subr.mxu0 0.0
  %1515 = vmatpush2.msra.mxu0 0.0
  %1516 = vmatprep.subr.mxu0 0.0
  %1517 = vmatpush2.msra.mxu0 0.0
  %1518 = vmatprep.subr.mxu0 0.0
  %1519 = vmatpush2.msra.mxu0 0.0
  %1520 = vmatprep.subr.mxu0 0.0
  %1521 = vmatpush2.msra.mxu0 0.0
  %1522 = vmatprep.subr.mxu0 0.0
  %1523 = vmatpush2.msra.mxu0 0.0
  %1524 = vmatprep.subr.mxu0 0.0
  %1525 = vmatpush2.msra.mxu0 0.0
  %1526 = vmatprep.subr.mxu0 0.0
  %1527 = vmatpush2.msra.mxu0 0.0
  %1528 = vmatprep.subr.mxu0 0.0
  %1529 = vmatpush2.msra.mxu0 0.0
  %1530 = vmatprep.subr.mxu0 0.0
  %1531 = vmatpush2.msra.mxu0 0.0
  %1532 = vmatprep.subr.mxu0 0.0
  %1533 = vmatpush2.msra.mxu0 0.0
  %1534 = vmatprep.subr.mxu0 0.0
  %1535 = vmatpush2.msra.mxu0 0.0
  %1536 = vmatprep.subr.mxu0 0.0
  %1537 = vmatpush2.msra.mxu0 0.0
  %1538 = vmatprep.subr.mxu0 0.0
  %1539 = vmatpush2.msra.mxu0 0.0
  %1540 = vmatprep.mubr.f32.mxu0 0.0
  %1541 = vmatmul.mubr.f32.gmra.mxu0 %v1468
  %v1542 = vpop.f32.mrf.mxu0
  %v1543 = vadd.f32 0.0, %v1542
  %v1544 = vpop.f32.mrf.mxu0
  %v1545 = vadd.f32 0.0, %v1544
  %1546 = vdwg.mxu0
  %1547 = vmatprep.subr.mxu0 %v444
  %1548 = vmatpush1.msra.mxu0 %v443
  %1549 = vmatprep.subr.mxu0 %v440
  %1550 = vmatpush1.msra.mxu0 %v439
  %1551 = vmatprep.subr.mxu0 %v436
  %1552 = vmatpush1.msra.mxu0 %v435
  %1553 = vmatprep.subr.mxu0 %v432
  %1554 = vmatpush1.msra.mxu0 %v431
  %1555 = vmatprep.subr.mxu0 %v428
  %1556 = vmatpush1.msra.mxu0 %v427
  %1557 = vmatprep.subr.mxu0 %v424
  %1558 = vmatpush1.msra.mxu0 %v423
  %1559 = vmatprep.subr.mxu0 %v420
  %1560 = vmatpush1.msra.mxu0 %v419
  %1561 = vmatprep.subr.mxu0 %v416
  %1562 = vmatpush1.msra.mxu0 %v415
  %1563 = vmatprep.subr.mxu0 %v412
  %1564 = vmatpush1.msra.mxu0 %v411
  %1565 = vmatprep.subr.mxu0 %v408
  %1566 = vmatpush1.msra.mxu0 %v407
  %1567 = vmatprep.subr.mxu0 %v404
  %1568 = vmatpush1.msra.mxu0 %v403
  %1569 = vmatprep.subr.mxu0 %v400
  %1570 = vmatpush1.msra.mxu0 %v399
  %1571 = vmatprep.subr.mxu0 %v396
  %1572 = vmatpush1.msra.mxu0 %v395
  %1573 = vmatprep.subr.mxu0 %v392
  %1574 = vmatpush1.msra.mxu0 %v391
  %1575 = vmatprep.subr.mxu0 %v388
  %1576 = vmatpush1.msra.mxu0 %v387
  %1577 = vmatprep.subr.mxu0 %v384
  %1578 = vmatpush1.msra.mxu0 %v383
  %1579 = vmatprep.subr.mxu0 0.0
  %1580 = vmatpush2.msra.mxu0 0.0
  %1581 = vmatprep.subr.mxu0 0.0
  %1582 = vmatpush2.msra.mxu0 0.0
  %1583 = vmatprep.subr.mxu0 0.0
  %1584 = vmatpush2.msra.mxu0 0.0
  %1585 = vmatprep.subr.mxu0 0.0
  %1586 = vmatpush2.msra.mxu0 0.0
  %1587 = vmatprep.subr.mxu0 0.0
  %1588 = vmatpush2.msra.mxu0 0.0
  %1589 = vmatprep.subr.mxu0 0.0
  %1590 = vmatpush2.msra.mxu0 0.0
  %1591 = vmatprep.subr.mxu0 0.0
  %1592 = vmatpush2.msra.mxu0 0.0
  %1593 = vmatprep.subr.mxu0 0.0
  %1594 = vmatpush2.msra.mxu0 0.0
  %1595 = vmatprep.subr.mxu0 0.0
  %1596 = vmatpush2.msra.mxu0 0.0
  %1597 = vmatprep.subr.mxu0 0.0
  %1598 = vmatpush2.msra.mxu0 0.0
  %1599 = vmatprep.subr.mxu0 0.0
  %1600 = vmatpush2.msra.mxu0 0.0
  %1601 = vmatprep.subr.mxu0 0.0
  %1602 = vmatpush2.msra.mxu0 0.0
  %1603 = vmatprep.subr.mxu0 0.0
  %1604 = vmatpush2.msra.mxu0 0.0
  %1605 = vmatprep.subr.mxu0 0.0
  %1606 = vmatpush2.msra.mxu0 0.0
  %1607 = vmatprep.subr.mxu0 0.0
  %1608 = vmatpush2.msra.mxu0 0.0
  %1609 = vmatprep.subr.mxu0 0.0
  %1610 = vmatpush2.msra.mxu0 0.0
  %1611 = vmatprep.mubr.f32.mxu0 0.0
  %1612 = vmatmul.mubr.f32.gmra.mxu0 %v1468
  %v1613 = vpop.f32.mrf.mxu0
  %v1614 = vadd.f32 0.0, %v1613
  %v1615 = vpop.f32.mrf.mxu0
  %v1616 = vadd.f32 0.0, %v1615
  %1617 = vdwg.mxu0
  %v1618 = vadd.f32 %v1472, %v1543
  %v1619 = vadd.f32 %v1473, %v1545
  %v1620 = vadd.f32 %v1474, %v1614
  %v1621 = vadd.f32 %v1475, %v1616
  %v1622 = vmul.f32 %v1618, 0.5
  %v1623 = vtanh.pop %v1622
  %v1624 = vmul.f32 %v1623, 0.5
  %v1625 = vadd.f32 %v1624, 0.5
  %v1626 = vmul.f32 %v1619, 0.5
  %v1627 = vtanh.pop %v1626
  %v1628 = vmul.f32 %v1627, 0.5
  %v1629 = vadd.f32 %v1628, 0.5
  %v1630 = vtanh.pop %v1620
  %v1631 = vmul.f32 %v1621, 0.5
  %v1632 = vtanh.pop %v1631
  %v1633 = vmul.f32 %v1632, 0.5
  %v1634 = vadd.f32 %v1633, 0.5
  %v1635 = vmul.f32 %v1629, %v1466
  %v1636 = vmul.f32 %v1625, %v1630
  %v1637 = vadd.f32 %v1635, %v1636
  %v1638 = vtanh.pop %v1637
  %v1639 = vmul.f32 %v1634, %v1638
  %s1640 = scalar_lea.vmem [#allocation5], 48
  %1641 = vst [vmem:[%s1640] sm:$0xff] %v1639
  %s1642 = scalar_lea.vmem [#allocation4], 224
  %v1643 = vld [vmem:[%s1642] sm:$0xff]
  %v1644 = vld [vmem:[%s1642 + $0x8] sm:$0xff]
  %v1645 = vld [vmem:[%s1642 + $0x10] sm:$0xff]
  %v1646 = vld [vmem:[%s1642 + $0x18] sm:$0xff]
  %1647 = vmatprep.subr.mxu0 %v442
  %1648 = vmatpush1.msra.mxu0 %v441
  %1649 = vmatprep.subr.mxu0 %v438
  %1650 = vmatpush1.msra.mxu0 %v437
  %1651 = vmatprep.subr.mxu0 %v434
  %1652 = vmatpush1.msra.mxu0 %v433
  %1653 = vmatprep.subr.mxu0 %v430
  %1654 = vmatpush1.msra.mxu0 %v429
  %1655 = vmatprep.subr.mxu0 %v426
  %1656 = vmatpush1.msra.mxu0 %v425
  %1657 = vmatprep.subr.mxu0 %v422
  %1658 = vmatpush1.msra.mxu0 %v421
  %1659 = vmatprep.subr.mxu0 %v418
  %1660 = vmatpush1.msra.mxu0 %v417
  %1661 = vmatprep.subr.mxu0 %v414
  %1662 = vmatpush1.msra.mxu0 %v413
  %1663 = vmatprep.subr.mxu0 %v410
  %1664 = vmatpush1.msra.mxu0 %v409
  %1665 = vmatprep.subr.mxu0 %v406
  %1666 = vmatpush1.msra.mxu0 %v405
  %1667 = vmatprep.subr.mxu0 %v402
  %1668 = vmatpush1.msra.mxu0 %v401
  %1669 = vmatprep.subr.mxu0 %v398
  %1670 = vmatpush1.msra.mxu0 %v397
  %1671 = vmatprep.subr.mxu0 %v394
  %1672 = vmatpush1.msra.mxu0 %v393
  %1673 = vmatprep.subr.mxu0 %v390
  %1674 = vmatpush1.msra.mxu0 %v389
  %1675 = vmatprep.subr.mxu0 %v386
  %1676 = vmatpush1.msra.mxu0 %v385
  %1677 = vmatprep.subr.mxu0 %v382
  %1678 = vmatpush1.msra.mxu0 %v381
  %1679 = vmatprep.subr.mxu0 0.0
  %1680 = vmatpush2.msra.mxu0 0.0
  %1681 = vmatprep.subr.mxu0 0.0
  %1682 = vmatpush2.msra.mxu0 0.0
  %1683 = vmatprep.subr.mxu0 0.0
  %1684 = vmatpush2.msra.mxu0 0.0
  %1685 = vmatprep.subr.mxu0 0.0
  %1686 = vmatpush2.msra.mxu0 0.0
  %1687 = vmatprep.subr.mxu0 0.0
  %1688 = vmatpush2.msra.mxu0 0.0
  %1689 = vmatprep.subr.mxu0 0.0
  %1690 = vmatpush2.msra.mxu0 0.0
  %1691 = vmatprep.subr.mxu0 0.0
  %1692 = vmatpush2.msra.mxu0 0.0
  %1693 = vmatprep.subr.mxu0 0.0
  %1694 = vmatpush2.msra.mxu0 0.0
  %1695 = vmatprep.subr.mxu0 0.0
  %1696 = vmatpush2.msra.mxu0 0.0
  %1697 = vmatprep.subr.mxu0 0.0
  %1698 = vmatpush2.msra.mxu0 0.0
  %1699 = vmatprep.subr.mxu0 0.0
  %1700 = vmatpush2.msra.mxu0 0.0
  %1701 = vmatprep.subr.mxu0 0.0
  %1702 = vmatpush2.msra.mxu0 0.0
  %1703 = vmatprep.subr.mxu0 0.0
  %1704 = vmatpush2.msra.mxu0 0.0
  %1705 = vmatprep.subr.mxu0 0.0
  %1706 = vmatpush2.msra.mxu0 0.0
  %1707 = vmatprep.subr.mxu0 0.0
  %1708 = vmatpush2.msra.mxu0 0.0
  %1709 = vmatprep.subr.mxu0 0.0
  %1710 = vmatpush2.msra.mxu0 0.0
  %1711 = vmatprep.mubr.f32.mxu0 0.0
  %1712 = vmatmul.mubr.f32.gmra.mxu0 %v1639
  %v1713 = vpop.f32.mrf.mxu0
  %v1714 = vadd.f32 0.0, %v1713
  %v1715 = vpop.f32.mrf.mxu0
  %v1716 = vadd.f32 0.0, %v1715
  %1717 = vdwg.mxu0
  %1718 = vmatprep.subr.mxu0 %v444
  %1719 = vmatpush1.msra.mxu0 %v443
  %1720 = vmatprep.subr.mxu0 %v440
  %1721 = vmatpush1.msra.mxu0 %v439
  %1722 = vmatprep.subr.mxu0 %v436
  %1723 = vmatpush1.msra.mxu0 %v435
  %1724 = vmatprep.subr.mxu0 %v432
  %1725 = vmatpush1.msra.mxu0 %v431
  %1726 = vmatprep.subr.mxu0 %v428
  %1727 = vmatpush1.msra.mxu0 %v427
  %1728 = vmatprep.subr.mxu0 %v424
  %1729 = vmatpush1.msra.mxu0 %v423
  %1730 = vmatprep.subr.mxu0 %v420
  %1731 = vmatpush1.msra.mxu0 %v419
  %1732 = vmatprep.subr.mxu0 %v416
  %1733 = vmatpush1.msra.mxu0 %v415
  %1734 = vmatprep.subr.mxu0 %v412
  %1735 = vmatpush1.msra.mxu0 %v411
  %1736 = vmatprep.subr.mxu0 %v408
  %1737 = vmatpush1.msra.mxu0 %v407
  %1738 = vmatprep.subr.mxu0 %v404
  %1739 = vmatpush1.msra.mxu0 %v403
  %1740 = vmatprep.subr.mxu0 %v400
  %1741 = vmatpush1.msra.mxu0 %v399
  %1742 = vmatprep.subr.mxu0 %v396
  %1743 = vmatpush1.msra.mxu0 %v395
  %1744 = vmatprep.subr.mxu0 %v392
  %1745 = vmatpush1.msra.mxu0 %v391
  %1746 = vmatprep.subr.mxu0 %v388
  %1747 = vmatpush1.msra.mxu0 %v387
  %1748 = vmatprep.subr.mxu0 %v384
  %1749 = vmatpush1.msra.mxu0 %v383
  %1750 = vmatprep.subr.mxu0 0.0
  %1751 = vmatpush2.msra.mxu0 0.0
  %1752 = vmatprep.subr.mxu0 0.0
  %1753 = vmatpush2.msra.mxu0 0.0
  %1754 = vmatprep.subr.mxu0 0.0
  %1755 = vmatpush2.msra.mxu0 0.0
  %1756 = vmatprep.subr.mxu0 0.0
  %1757 = vmatpush2.msra.mxu0 0.0
  %1758 = vmatprep.subr.mxu0 0.0
  %1759 = vmatpush2.msra.mxu0 0.0
  %1760 = vmatprep.subr.mxu0 0.0
  %1761 = vmatpush2.msra.mxu0 0.0
  %1762 = vmatprep.subr.mxu0 0.0
  %1763 = vmatpush2.msra.mxu0 0.0
  %1764 = vmatprep.subr.mxu0 0.0
  %1765 = vmatpush2.msra.mxu0 0.0
  %1766 = vmatprep.subr.mxu0 0.0
  %1767 = vmatpush2.msra.mxu0 0.0
  %1768 = vmatprep.subr.mxu0 0.0
  %1769 = vmatpush2.msra.mxu0 0.0
  %1770 = vmatprep.subr.mxu0 0.0
  %1771 = vmatpush2.msra.mxu0 0.0
  %1772 = vmatprep.subr.mxu0 0.0
  %1773 = vmatpush2.msra.mxu0 0.0
  %1774 = vmatprep.subr.mxu0 0.0
  %1775 = vmatpush2.msra.mxu0 0.0
  %1776 = vmatprep.subr.mxu0 0.0
  %1777 = vmatpush2.msra.mxu0 0.0
  %1778 = vmatprep.subr.mxu0 0.0
  %1779 = vmatpush2.msra.mxu0 0.0
  %1780 = vmatprep.subr.mxu0 0.0
  %1781 = vmatpush2.msra.mxu0 0.0
  %1782 = vmatprep.mubr.f32.mxu0 0.0
  %1783 = vmatmul.mubr.f32.gmra.mxu0 %v1639
  %v1784 = vpop.f32.mrf.mxu0
  %v1785 = vadd.f32 0.0, %v1784
  %v1786 = vpop.f32.mrf.mxu0
  %v1787 = vadd.f32 0.0, %v1786
  %1788 = vdwg.mxu0
  %v1789 = vadd.f32 %v1643, %v1714
  %v1790 = vadd.f32 %v1644, %v1716
  %v1791 = vadd.f32 %v1645, %v1785
  %v1792 = vadd.f32 %v1646, %v1787
  %v1793 = vmul.f32 %v1789, 0.5
  %v1794 = vtanh.pop %v1793
  %v1795 = vmul.f32 %v1794, 0.5
  %v1796 = vadd.f32 %v1795, 0.5
  %v1797 = vmul.f32 %v1790, 0.5
  %v1798 = vtanh.pop %v1797
  %v1799 = vmul.f32 %v1798, 0.5
  %v1800 = vadd.f32 %v1799, 0.5
  %v1801 = vtanh.pop %v1791
  %v1802 = vmul.f32 %v1792, 0.5
  %v1803 = vtanh.pop %v1802
  %v1804 = vmul.f32 %v1803, 0.5
  %v1805 = vadd.f32 %v1804, 0.5
  %v1806 = vmul.f32 %v1800, %v1637
  %v1807 = vmul.f32 %v1796, %v1801
  %v1808 = vadd.f32 %v1806, %v1807
  %v1809 = vtanh.pop %v1808
  %v1810 = vmul.f32 %v1805, %v1809
  %s1811 = scalar_lea.vmem [#allocation5], 56
  %1812 = vst [vmem:[%s1811] sm:$0xff] %v1810
  %1813 = vst [vmem:[#allocation2] sm:$0xff] %v1810
  %1814 = vst [vmem:[#allocation3] sm:$0xff] %v1808
  %v1815 = vld [vmem:[#allocation5] sm:$0xff]
  %v1816 = vld [vmem:[#allocation5 + $0x8] sm:$0xff]
  %v1817 = vld [vmem:[#allocation5 + $0x10] sm:$0xff]
  %v1818 = vld [vmem:[#allocation5 + $0x18] sm:$0xff]
  %v1819 = vld [vmem:[#allocation5 + $0x20] sm:$0xff]
  %v1820 = vld [vmem:[#allocation5 + $0x28] sm:$0xff]
  %v1821 = vld [vmem:[#allocation5 + $0x30] sm:$0xff]
  %v1822 = vld [vmem:[#allocation5 + $0x38] sm:$0xff]
  %v1823 = vld [vmem:[%s4] sm:$0xff]
  %v1824 = vld [vmem:[%s4 + $0x8] sm:$0xff]
  %v1825 = vld [vmem:[%s4 + $0x10] sm:$0xff]
  %v1826 = vld [vmem:[%s4 + $0x18] sm:$0xff]
  %v1827 = vld [vmem:[%s4 + $0x20] sm:$0xff]
  %v1828 = vld [vmem:[%s4 + $0x28] sm:$0xff]
  %v1829 = vld [vmem:[%s4 + $0x30] sm:$0xff]
  %v1830 = vld [vmem:[%s4 + $0x38] sm:$0xff]
  %v1831 = vld [vmem:[%s4 + $0x40] sm:$0xff]
  %v1832 = vld [vmem:[%s4 + $0x48] sm:$0xff]
  %v1833 = vld [vmem:[%s4 + $0x50] sm:$0xff]
  %v1834 = vld [vmem:[%s4 + $0x58] sm:$0xff]
  %v1835 = vld [vmem:[%s4 + $0x60] sm:$0xff]
  %v1836 = vld [vmem:[%s4 + $0x68] sm:$0xff]
  %v1837 = vld [vmem:[%s4 + $0x70] sm:$0xff]
  %v1838 = vld [vmem:[%s4 + $0x78] sm:$0xff]
  %v1839 = vld [vmem:[%s5] sm:$0x1]
  %v1841 = vlaneseq
  %v1842 = vshrl.u32 %v1841, 7
  %v1843 = vsub.s32 0, %v1842
  %v1844 = vrot.slane %v1839, %v1843
  %1846 = vmatprep.subr.mxu0 0.0
  %1847 = vmatpush1.msra.mxu0 %v1838
  %1848 = vmatprep.subr.mxu0 0.0
  %1849 = vmatpush1.msra.mxu0 %v1837
  %1850 = vmatprep.subr.mxu0 0.0
  %1851 = vmatpush1.msra.mxu0 %v1836
  %1852 = vmatprep.subr.mxu0 0.0
  %1853 = vmatpush1.msra.mxu0 %v1835
  %1854 = vmatprep.subr.mxu0 0.0
  %1855 = vmatpush1.msra.mxu0 %v1834
  %1856 = vmatprep.subr.mxu0 0.0
  %1857 = vmatpush1.msra.mxu0 %v1833
  %1858 = vmatprep.subr.mxu0 0.0
  %1859 = vmatpush1.msra.mxu0 %v1832
  %1860 = vmatprep.subr.mxu0 0.0
  %1861 = vmatpush1.msra.mxu0 %v1831
  %1862 = vmatprep.subr.mxu0 0.0
  %1863 = vmatpush1.msra.mxu0 %v1830
  %1864 = vmatprep.subr.mxu0 0.0
  %1865 = vmatpush1.msra.mxu0 %v1829
  %1866 = vmatprep.subr.mxu0 0.0
  %1867 = vmatpush1.msra.mxu0 %v1828
  %1868 = vmatprep.subr.mxu0 0.0
  %1869 = vmatpush1.msra.mxu0 %v1827
  %1870 = vmatprep.subr.mxu0 0.0
  %1871 = vmatpush1.msra.mxu0 %v1826
  %1872 = vmatprep.subr.mxu0 0.0
  %1873 = vmatpush1.msra.mxu0 %v1825
  %1874 = vmatprep.subr.mxu0 0.0
  %1875 = vmatpush1.msra.mxu0 %v1824
  %1876 = vmatprep.subr.mxu0 0.0
  %1877 = vmatpush1.msra.mxu0 %v1823
  %1878 = vmatprep.subr.mxu0 0.0
  %1879 = vmatpush2.msra.mxu0 0.0
  %1880 = vmatprep.subr.mxu0 0.0
  %1881 = vmatpush2.msra.mxu0 0.0
  %1882 = vmatprep.subr.mxu0 0.0
  %1883 = vmatpush2.msra.mxu0 0.0
  %1884 = vmatprep.subr.mxu0 0.0
  %1885 = vmatpush2.msra.mxu0 0.0
  %1886 = vmatprep.subr.mxu0 0.0
  %1887 = vmatpush2.msra.mxu0 0.0
  %1888 = vmatprep.subr.mxu0 0.0
  %1889 = vmatpush2.msra.mxu0 0.0
  %1890 = vmatprep.subr.mxu0 0.0
  %1891 = vmatpush2.msra.mxu0 0.0
  %1892 = vmatprep.subr.mxu0 0.0
  %1893 = vmatpush2.msra.mxu0 0.0
  %1894 = vmatprep.subr.mxu0 0.0
  %1895 = vmatpush2.msra.mxu0 0.0
  %1896 = vmatprep.subr.mxu0 0.0
  %1897 = vmatpush2.msra.mxu0 0.0
  %1898 = vmatprep.subr.mxu0 0.0
  %1899 = vmatpush2.msra.mxu0 0.0
  %1900 = vmatprep.subr.mxu0 0.0
  %1901 = vmatpush2.msra.mxu0 0.0
  %1902 = vmatprep.subr.mxu0 0.0
  %1903 = vmatpush2.msra.mxu0 0.0
  %1904 = vmatprep.subr.mxu0 0.0
  %1905 = vmatpush2.msra.mxu0 0.0
  %1906 = vmatprep.subr.mxu0 0.0
  %1907 = vmatpush2.msra.mxu0 0.0
  %1908 = vmatprep.subr.mxu0 0.0
  %1909 = vmatpush2.msra.mxu0 0.0
  %1910 = vmatprep.mubr.f32.mxu0 0.0
  %1911 = vmatmul.mubr.f32.gmra.mxu0 %v1815
  %v1912 = vpop.f32.mrf.mxu0
  %v1913 = vadd.f32 %v1844, %v1912
  %v1914 = vpop.f32.mrf.mxu0
  %1915 = vmatprep.mubr.f32.mxu0 0.0
  %1916 = vmatmul.mubr.f32.gmra.mxu0 %v1816
  %v1917 = vpop.f32.mrf.mxu0
  %v1918 = vadd.f32 %v1844, %v1917
  %v1919 = vpop.f32.mrf.mxu0
  %1920 = vmatprep.mubr.f32.mxu0 0.0
  %1921 = vmatmul.mubr.f32.gmra.mxu0 %v1817
  %v1922 = vpop.f32.mrf.mxu0
  %v1923 = vadd.f32 %v1844, %v1922
  %v1924 = vpop.f32.mrf.mxu0
  %1925 = vmatprep.mubr.f32.mxu0 0.0
  %1926 = vmatmul.mubr.f32.gmra.mxu0 %v1818
  %v1927 = vpop.f32.mrf.mxu0
  %v1928 = vadd.f32 %v1844, %v1927
  %v1929 = vpop.f32.mrf.mxu0
  %1930 = vmatprep.mubr.f32.mxu0 0.0
  %1931 = vmatmul.mubr.f32.gmra.mxu0 %v1819
  %v1932 = vpop.f32.mrf.mxu0
  %v1933 = vadd.f32 %v1844, %v1932
  %v1934 = vpop.f32.mrf.mxu0
  %1935 = vmatprep.mubr.f32.mxu0 0.0
  %1936 = vmatmul.mubr.f32.gmra.mxu0 %v1820
  %v1937 = vpop.f32.mrf.mxu0
  %v1938 = vadd.f32 %v1844, %v1937
  %v1939 = vpop.f32.mrf.mxu0
  %1940 = vmatprep.mubr.f32.mxu0 0.0
  %1941 = vmatmul.mubr.f32.gmra.mxu0 %v1821
  %v1942 = vpop.f32.mrf.mxu0
  %v1943 = vadd.f32 %v1844, %v1942
  %v1944 = vpop.f32.mrf.mxu0
  %1945 = vmatprep.mubr.f32.mxu0 0.0
  %1946 = vmatmul.mubr.f32.gmra.mxu0 %v1822
  %v1947 = vpop.f32.mrf.mxu0
  %v1948 = vadd.f32 %v1844, %v1947
  %v1949 = vpop.f32.mrf.mxu0
  %1950 = vdwg.mxu0
  %1951 = vst [vmem:[%s6] sm:$0xff] %v1913
  %1952 = vst [vmem:[%s6 + $0x8] sm:$0xff] %v1918
  %1953 = vst [vmem:[%s6 + $0x10] sm:$0xff] %v1923
  %1954 = vst [vmem:[%s6 + $0x18] sm:$0xff] %v1928
  %1955 = vst [vmem:[%s6 + $0x20] sm:$0xff] %v1933
  %1956 = vst [vmem:[%s6 + $0x28] sm:$0xff] %v1938
  %1957 = vst [vmem:[%s6 + $0x30] sm:$0xff] %v1943
  %1958 = vst [vmem:[%s6 + $0x38] sm:$0xff] %v1948
  // Predicated region
  $region30: #{multi_output_lstm_forward.3} parent=0 // pred_check
    _
  $region31: #{multi_output_lstm_forward.3} parent=0 // pred_check_branch
    %1960 = sbr.rel (0) target = $region33
  $region32: #{multi_output_lstm_forward.3} parent=0 // pred_region
    _
  $region33: #{multi_output_lstm_forward.3} parent=0 // pred_fallthru
    _
  // Predicated region
  $region34: #{multi_output_lstm_forward.3} parent=0 // pred_check
    _
  $region35: #{multi_output_lstm_forward.3} parent=0 // pred_check_branch
    %1962 = sbr.rel (0) target = $region37
  $region36: #{multi_output_lstm_forward.3} parent=0 // pred_region
    _
  $region37: #{multi_output_lstm_forward.3} parent=0 // pred_fallthru
    _

// kernel: multi_output_lstm_forward.2
$region0: #{multi_output_lstm_forward.2}
  #allocation0 [shape = 'u32[]', space=smem, size = 0x4, offset = 0x4, fixed_abs, tag = 'smem constant byte address 0x4 - core index']
  #allocation1 [shape = 'u32[144,128]{1,0:T(1,128)}', space=vmem, size = 0x12000, scoped, tag = 'internal scratch']
  #allocation2 [shape = 'f32[8,128]{1,0:T(8,128)}', space=vmem, size = 0x1000, scoped, tag = 'scratch operand']
  #allocation3 [shape = 'f32[8,128]{1,0:T(8,128)}', space=vmem, size = 0x1000, scoped, tag = 'scratch operand']
  #allocation4 [shape = 'f32[8,8,512]{2,1,0:T(8,128)}', space=vmem, size = 0x20000, scoped, tag = 'scratch operand']
  %s0 = inlined_call_operand.vmem [shape: f32[8,8,8], index: 0, kind: input, shape index: {}]
  %s1 = inlined_call_operand.vmem [shape: f32[8,512], index: 1, kind: input, shape index: {}]
  %s2 = inlined_call_operand.vmem [shape: f32[128,512], index: 2, kind: input, shape index: {}]
  %s3 = inlined_call_operand.vmem [shape: f32[1,512], index: 3, kind: input, shape index: {}]
  %s4 = inlined_call_operand.vmem [shape: f32[8,8,128], index: 4, kind: output, shape index: {}]
  %s5 = sld [smem:[#allocation0]]
  $region30: #{multi_output_lstm_forward.2} parent=0
    _
  %s7 = ssub.s32 1, %s5
  %s8 = scalar_select 0, %s7, %s5
  // Predicated region
  $region2: #{multi_output_lstm_forward.2} parent=0 // pred_check
    _
  $region3: #{multi_output_lstm_forward.2} parent=0 // pred_check_branch
    %10 = sbr.rel (0) target = $region5
  $region4: #{multi_output_lstm_forward.2} parent=0 // pred_region
    _
  $region5: #{multi_output_lstm_forward.2} parent=0 // pred_fallthru
    _
  // Predicated region
  $region6: #{multi_output_lstm_forward.2} parent=0 // pred_check
    _
  $region7: #{multi_output_lstm_forward.2} parent=0 // pred_check_branch
    %12 = sbr.rel (0) target = $region9
  $region8: #{multi_output_lstm_forward.2} parent=0 // pred_region
    _
  $region9: #{multi_output_lstm_forward.2} parent=0 // pred_fallthru
    _
  // Predicated region
  $region10: #{multi_output_lstm_forward.2} parent=0 // pred_check
    _
  $region11: #{multi_output_lstm_forward.2} parent=0 // pred_check_branch
    %14 = sbr.rel (0) target = $region13
  $region12: #{multi_output_lstm_forward.2} parent=0 // pred_region
    _
  $region13: #{multi_output_lstm_forward.2} parent=0 // pred_fallthru
    _
  // Predicated region
  $region14: #{multi_output_lstm_forward.2} parent=0 // pred_check
    _
  $region15: #{multi_output_lstm_forward.2} parent=0 // pred_check_branch
    %16 = sbr.rel (0) target = $region17
  $region16: #{multi_output_lstm_forward.2} parent=0 // pred_region
    _
  $region17: #{multi_output_lstm_forward.2} parent=0 // pred_fallthru
    _
  %p17 = scmp.eq.s32.totalorder 0, 0
  // Predicated region
  $region18: #{multi_output_lstm_forward.2} parent=0 // pred_check
    %p18 = pneg %p17
  $region19: #{multi_output_lstm_forward.2} parent=0 // pred_check_branch
    %20 = sbr.rel (%p18) target = $region21
  $region20: #{multi_output_lstm_forward.2} parent=0 // pred_region
    %21 = vst [vmem:[#allocation2] sm:$0xff] 0.0
    %22 = vst [vmem:[#allocation3] sm:$0xff] 0.0
  $region21: #{multi_output_lstm_forward.2} parent=0 // pred_fallthru
    _
  %v23 = vld [vmem:[%s0] sm:$0xff]
  %v24 = vld [vmem:[%s0 + $0x8] sm:$0xff]
  %v25 = vld [vmem:[%s0 + $0x10] sm:$0xff]
  %v26 = vld [vmem:[%s0 + $0x18] sm:$0xff]
  %v27 = vld [vmem:[%s0 + $0x20] sm:$0xff]
  %v28 = vld [vmem:[%s0 + $0x28] sm:$0xff]
  %v29 = vld [vmem:[%s0 + $0x30] sm:$0xff]
  %v30 = vld [vmem:[%s0 + $0x38] sm:$0xff]
  %v31 = vld [vmem:[%s1] sm:$0xff]
  %v32 = vld [vmem:[%s1 + $0x8] sm:$0xff]
  %v33 = vld [vmem:[%s1 + $0x10] sm:$0xff]
  %v34 = vld [vmem:[%s1 + $0x18] sm:$0xff]
  %v35 = vld [vmem:[%s3] sm:$0xf]
  %v37 = vlaneseq
  %v38 = vshrl.u32 %v37, 7
  %v39 = vsub.s32 0, %v38
  %v40 = vrot.slane %v35, %v39
  %v41 = vlaneseq
  %v42 = vshrl.u32 %v41, 7
  %v43 = vsub.s32 1, %v42
  %v44 = vrot.slane %v35, %v43
  %v45 = vlaneseq
  %v46 = vshrl.u32 %v45, 7
  %v47 = vsub.s32 2, %v46
  %v48 = vrot.slane %v35, %v47
  %v49 = vlaneseq
  %v50 = vshrl.u32 %v49, 7
  %v51 = vsub.s32 3, %v50
  %v52 = vrot.slane %v35, %v51
  %vm57 = vcmask 64512
  %v59 = vsel %vm57, %v23, 0
  %v62 = vsel %vm57, %v24, 0
  %v65 = vsel %vm57, %v25, 0
  %v68 = vsel %vm57, %v26, 0
  %v71 = vsel %vm57, %v27, 0
  %v74 = vsel %vm57, %v28, 0
  %v77 = vsel %vm57, %v29, 0
  %v80 = vsel %vm57, %v30, 0
  %82 = vmatprep.subr.mxu0 0.0
  %83 = vmatpush1.msra.mxu0 0.0
  %84 = vmatprep.subr.mxu0 0.0
  %85 = vmatpush1.msra.mxu0 0.0
  %86 = vmatprep.subr.mxu0 0.0
  %87 = vmatpush1.msra.mxu0 0.0
  %88 = vmatprep.subr.mxu0 0.0
  %89 = vmatpush1.msra.mxu0 0.0
  %90 = vmatprep.subr.mxu0 0.0
  %91 = vmatpush1.msra.mxu0 0.0
  %92 = vmatprep.subr.mxu0 0.0
  %93 = vmatpush1.msra.mxu0 0.0
  %94 = vmatprep.subr.mxu0 0.0
  %95 = vmatpush1.msra.mxu0 0.0
  %96 = vmatprep.subr.mxu0 0.0
  %97 = vmatpush1.msra.mxu0 0.0
  %98 = vmatprep.subr.mxu0 0.0
  %99 = vmatpush1.msra.mxu0 0.0
  %100 = vmatprep.subr.mxu0 0.0
  %101 = vmatpush1.msra.mxu0 0.0
  %102 = vmatprep.subr.mxu0 0.0
  %103 = vmatpush1.msra.mxu0 0.0
  %104 = vmatprep.subr.mxu0 0.0
  %105 = vmatpush1.msra.mxu0 0.0
  %106 = vmatprep.subr.mxu0 0.0
  %107 = vmatpush1.msra.mxu0 0.0
  %108 = vmatprep.subr.mxu0 0.0
  %109 = vmatpush1.msra.mxu0 0.0
  %110 = vmatprep.subr.mxu0 0.0
  %111 = vmatpush1.msra.mxu0 0.0
  %112 = vmatprep.subr.mxu0 %v32
  %113 = vmatpush1.msra.mxu0 %v31
  %114 = vmatprep.subr.mxu0 0.0
  %115 = vmatpush2.msra.mxu0 0.0
  %116 = vmatprep.subr.mxu0 0.0
  %117 = vmatpush2.msra.mxu0 0.0
  %118 = vmatprep.subr.mxu0 0.0
  %119 = vmatpush2.msra.mxu0 0.0
  %120 = vmatprep.subr.mxu0 0.0
  %121 = vmatpush2.msra.mxu0 0.0
  %122 = vmatprep.subr.mxu0 0.0
  %123 = vmatpush2.msra.mxu0 0.0
  %124 = vmatprep.subr.mxu0 0.0
  %125 = vmatpush2.msra.mxu0 0.0
  %126 = vmatprep.subr.mxu0 0.0
  %127 = vmatpush2.msra.mxu0 0.0
  %128 = vmatprep.subr.mxu0 0.0
  %129 = vmatpush2.msra.mxu0 0.0
  %130 = vmatprep.subr.mxu0 0.0
  %131 = vmatpush2.msra.mxu0 0.0
  %132 = vmatprep.subr.mxu0 0.0
  %133 = vmatpush2.msra.mxu0 0.0
  %134 = vmatprep.subr.mxu0 0.0
  %135 = vmatpush2.msra.mxu0 0.0
  %136 = vmatprep.subr.mxu0 0.0
  %137 = vmatpush2.msra.mxu0 0.0
  %138 = vmatprep.subr.mxu0 0.0
  %139 = vmatpush2.msra.mxu0 0.0
  %140 = vmatprep.subr.mxu0 0.0
  %141 = vmatpush2.msra.mxu0 0.0
  %142 = vmatprep.subr.mxu0 0.0
  %143 = vmatpush2.msra.mxu0 0.0
  %144 = vmatprep.subr.mxu0 0.0
  %145 = vmatpush2.msra.mxu0 0.0
  %146 = vmatprep.mubr.f32.mxu0 0.0
  %147 = vmatmul.mubr.f32.gmra.mxu0 %v59
  %v148 = vpop.f32.mrf.mxu0
  %v149 = vadd.f32 %v40, %v148
  %v150 = vpop.f32.mrf.mxu0
  %v151 = vadd.f32 %v44, %v150
  %152 = vmatprep.mubr.f32.mxu0 0.0
  %153 = vmatmul.mubr.f32.gmra.mxu0 %v62
  %v154 = vpop.f32.mrf.mxu0
  %v155 = vadd.f32 %v40, %v154
  %v156 = vpop.f32.mrf.mxu0
  %v157 = vadd.f32 %v44, %v156
  %158 = vmatprep.mubr.f32.mxu0 0.0
  %159 = vmatmul.mubr.f32.gmra.mxu0 %v65
  %v160 = vpop.f32.mrf.mxu0
  %v161 = vadd.f32 %v40, %v160
  %v162 = vpop.f32.mrf.mxu0
  %v163 = vadd.f32 %v44, %v162
  %164 = vmatprep.mubr.f32.mxu0 0.0
  %165 = vmatmul.mubr.f32.gmra.mxu0 %v68
  %v166 = vpop.f32.mrf.mxu0
  %v167 = vadd.f32 %v40, %v166
  %v168 = vpop.f32.mrf.mxu0
  %v169 = vadd.f32 %v44, %v168
  %170 = vmatprep.mubr.f32.mxu0 0.0
  %171 = vmatmul.mubr.f32.gmra.mxu0 %v71
  %v172 = vpop.f32.mrf.mxu0
  %v173 = vadd.f32 %v40, %v172
  %v174 = vpop.f32.mrf.mxu0
  %v175 = vadd.f32 %v44, %v174
  %176 = vmatprep.mubr.f32.mxu0 0.0
  %177 = vmatmul.mubr.f32.gmra.mxu0 %v74
  %v178 = vpop.f32.mrf.mxu0
  %v179 = vadd.f32 %v40, %v178
  %v180 = vpop.f32.mrf.mxu0
  %v181 = vadd.f32 %v44, %v180
  %182 = vmatprep.mubr.f32.mxu0 0.0
  %183 = vmatmul.mubr.f32.gmra.mxu0 %v77
  %v184 = vpop.f32.mrf.mxu0
  %v185 = vadd.f32 %v40, %v184
  %v186 = vpop.f32.mrf.mxu0
  %v187 = vadd.f32 %v44, %v186
  %188 = vmatprep.mubr.f32.mxu0 0.0
  %189 = vmatmul.mubr.f32.gmra.mxu0 %v80
  %v190 = vpop.f32.mrf.mxu0
  %v191 = vadd.f32 %v40, %v190
  %v192 = vpop.f32.mrf.mxu0
  %v193 = vadd.f32 %v44, %v192
  %194 = vdwg.mxu0
  %195 = vmatprep.subr.mxu0 0.0
  %196 = vmatpush1.msra.mxu0 0.0
  %197 = vmatprep.subr.mxu0 0.0
  %198 = vmatpush1.msra.mxu0 0.0
  %199 = vmatprep.subr.mxu0 0.0
  %200 = vmatpush1.msra.mxu0 0.0
  %201 = vmatprep.subr.mxu0 0.0
  %202 = vmatpush1.msra.mxu0 0.0
  %203 = vmatprep.subr.mxu0 0.0
  %204 = vmatpush1.msra.mxu0 0.0
  %205 = vmatprep.subr.mxu0 0.0
  %206 = vmatpush1.msra.mxu0 0.0
  %207 = vmatprep.subr.mxu0 0.0
  %208 = vmatpush1.msra.mxu0 0.0
  %209 = vmatprep.subr.mxu0 0.0
  %210 = vmatpush1.msra.mxu0 0.0
  %211 = vmatprep.subr.mxu0 0.0
  %212 = vmatpush1.msra.mxu0 0.0
  %213 = vmatprep.subr.mxu0 0.0
  %214 = vmatpush1.msra.mxu0 0.0
  %215 = vmatprep.subr.mxu0 0.0
  %216 = vmatpush1.msra.mxu0 0.0
  %217 = vmatprep.subr.mxu0 0.0
  %218 = vmatpush1.msra.mxu0 0.0
  %219 = vmatprep.subr.mxu0 0.0
  %220 = vmatpush1.msra.mxu0 0.0
  %221 = vmatprep.subr.mxu0 0.0
  %222 = vmatpush1.msra.mxu0 0.0
  %223 = vmatprep.subr.mxu0 0.0
  %224 = vmatpush1.msra.mxu0 0.0
  %225 = vmatprep.subr.mxu0 %v34
  %226 = vmatpush1.msra.mxu0 %v33
  %227 = vmatprep.subr.mxu0 0.0
  %228 = vmatpush2.msra.mxu0 0.0
  %229 = vmatprep.subr.mxu0 0.0
  %230 = vmatpush2.msra.mxu0 0.0
  %231 = vmatprep.subr.mxu0 0.0
  %232 = vmatpush2.msra.mxu0 0.0
  %233 = vmatprep.subr.mxu0 0.0
  %234 = vmatpush2.msra.mxu0 0.0
  %235 = vmatprep.subr.mxu0 0.0
  %236 = vmatpush2.msra.mxu0 0.0
  %237 = vmatprep.subr.mxu0 0.0
  %238 = vmatpush2.msra.mxu0 0.0
  %239 = vmatprep.subr.mxu0 0.0
  %240 = vmatpush2.msra.mxu0 0.0
  %241 = vmatprep.subr.mxu0 0.0
  %242 = vmatpush2.msra.mxu0 0.0
  %243 = vmatprep.subr.mxu0 0.0
  %244 = vmatpush2.msra.mxu0 0.0
  %245 = vmatprep.subr.mxu0 0.0
  %246 = vmatpush2.msra.mxu0 0.0
  %247 = vmatprep.subr.mxu0 0.0
  %248 = vmatpush2.msra.mxu0 0.0
  %249 = vmatprep.subr.mxu0 0.0
  %250 = vmatpush2.msra.mxu0 0.0
  %251 = vmatprep.subr.mxu0 0.0
  %252 = vmatpush2.msra.mxu0 0.0
  %253 = vmatprep.subr.mxu0 0.0
  %254 = vmatpush2.msra.mxu0 0.0
  %255 = vmatprep.subr.mxu0 0.0
  %256 = vmatpush2.msra.mxu0 0.0
  %257 = vmatprep.subr.mxu0 0.0
  %258 = vmatpush2.msra.mxu0 0.0
  %259 = vmatprep.mubr.f32.mxu0 0.0
  %260 = vmatmul.mubr.f32.gmra.mxu0 %v59
  %v261 = vpop.f32.mrf.mxu0
  %v262 = vadd.f32 %v48, %v261
  %v263 = vpop.f32.mrf.mxu0
  %v264 = vadd.f32 %v52, %v263
  %265 = vmatprep.mubr.f32.mxu0 0.0
  %266 = vmatmul.mubr.f32.gmra.mxu0 %v62
  %v267 = vpop.f32.mrf.mxu0
  %v268 = vadd.f32 %v48, %v267
  %v269 = vpop.f32.mrf.mxu0
  %v270 = vadd.f32 %v52, %v269
  %271 = vmatprep.mubr.f32.mxu0 0.0
  %272 = vmatmul.mubr.f32.gmra.mxu0 %v65
  %v273 = vpop.f32.mrf.mxu0
  %v274 = vadd.f32 %v48, %v273
  %v275 = vpop.f32.mrf.mxu0
  %v276 = vadd.f32 %v52, %v275
  %277 = vmatprep.mubr.f32.mxu0 0.0
  %278 = vmatmul.mubr.f32.gmra.mxu0 %v68
  %v279 = vpop.f32.mrf.mxu0
  %v280 = vadd.f32 %v48, %v279
  %v281 = vpop.f32.mrf.mxu0
  %v282 = vadd.f32 %v52, %v281
  %283 = vmatprep.mubr.f32.mxu0 0.0
  %284 = vmatmul.mubr.f32.gmra.mxu0 %v71
  %v285 = vpop.f32.mrf.mxu0
  %v286 = vadd.f32 %v48, %v285
  %v287 = vpop.f32.mrf.mxu0
  %v288 = vadd.f32 %v52, %v287
  %289 = vmatprep.mubr.f32.mxu0 0.0
  %290 = vmatmul.mubr.f32.gmra.mxu0 %v74
  %v291 = vpop.f32.mrf.mxu0
  %v292 = vadd.f32 %v48, %v291
  %v293 = vpop.f32.mrf.mxu0
  %v294 = vadd.f32 %v52, %v293
  %295 = vmatprep.mubr.f32.mxu0 0.0
  %296 = vmatmul.mubr.f32.gmra.mxu0 %v77
  %v297 = vpop.f32.mrf.mxu0
  %v298 = vadd.f32 %v48, %v297
  %v299 = vpop.f32.mrf.mxu0
  %v300 = vadd.f32 %v52, %v299
  %301 = vmatprep.mubr.f32.mxu0 0.0
  %302 = vmatmul.mubr.f32.gmra.mxu0 %v80
  %v303 = vpop.f32.mrf.mxu0
  %v304 = vadd.f32 %v48, %v303
  %v305 = vpop.f32.mrf.mxu0
  %v306 = vadd.f32 %v52, %v305
  %307 = vdwg.mxu0
  %308 = vst [vmem:[#allocation4] sm:$0xff] %v149
  %309 = vst [vmem:[#allocation4 + $0x8] sm:$0xff] %v151
  %310 = vst [vmem:[#allocation4 + $0x10] sm:$0xff] %v262
  %311 = vst [vmem:[#allocation4 + $0x18] sm:$0xff] %v264
  %312 = vst [vmem:[#allocation4 + $0x20] sm:$0xff] %v155
  %313 = vst [vmem:[#allocation4 + $0x28] sm:$0xff] %v157
  %314 = vst [vmem:[#allocation4 + $0x30] sm:$0xff] %v268
  %315 = vst [vmem:[#allocation4 + $0x38] sm:$0xff] %v270
  %316 = vst [vmem:[#allocation4 + $0x40] sm:$0xff] %v161
  %317 = vst [vmem:[#allocation4 + $0x48] sm:$0xff] %v163
  %318 = vst [vmem:[#allocation4 + $0x50] sm:$0xff] %v274
  %319 = vst [vmem:[#allocation4 + $0x58] sm:$0xff] %v276
  %320 = vst [vmem:[#allocation4 + $0x60] sm:$0xff] %v167
  %321 = vst [vmem:[#allocation4 + $0x68] sm:$0xff] %v169
  %322 = vst [vmem:[#allocation4 + $0x70] sm:$0xff] %v280
  %323 = vst [vmem:[#allocation4 + $0x78] sm:$0xff] %v282
  %324 = vst [vmem:[#allocation4 + $0x80] sm:$0xff] %v173
  %325 = vst [vmem:[#allocation4 + $0x88] sm:$0xff] %v175
  %326 = vst [vmem:[#allocation4 + $0x90] sm:$0xff] %v286
  %327 = vst [vmem:[#allocation4 + $0x98] sm:$0xff] %v288
  %328 = vst [vmem:[#allocation4 + $0xa0] sm:$0xff] %v179
  %329 = vst [vmem:[#allocation4 + $0xa8] sm:$0xff] %v181
  %330 = vst [vmem:[#allocation4 + $0xb0] sm:$0xff] %v292
  %331 = vst [vmem:[#allocation4 + $0xb8] sm:$0xff] %v294
  %332 = vst [vmem:[#allocation4 + $0xc0] sm:$0xff] %v185
  %333 = vst [vmem:[#allocation4 + $0xc8] sm:$0xff] %v187
  %334 = vst [vmem:[#allocation4 + $0xd0] sm:$0xff] %v298
  %335 = vst [vmem:[#allocation4 + $0xd8] sm:$0xff] %v300
  %336 = vst [vmem:[#allocation4 + $0xe0] sm:$0xff] %v191
  %337 = vst [vmem:[#allocation4 + $0xe8] sm:$0xff] %v193
  %338 = vst [vmem:[#allocation4 + $0xf0] sm:$0xff] %v304
  %339 = vst [vmem:[#allocation4 + $0xf8] sm:$0xff] %v306
  %v340 = vld [vmem:[%s2] sm:$0xff]
  %v341 = vld [vmem:[%s2 + $0x8] sm:$0xff]
  %v342 = vld [vmem:[%s2 + $0x10] sm:$0xff]
  %v343 = vld [vmem:[%s2 + $0x18] sm:$0xff]
  %v344 = vld [vmem:[%s2 + $0x20] sm:$0xff]
  %v345 = vld [vmem:[%s2 + $0x28] sm:$0xff]
  %v346 = vld [vmem:[%s2 + $0x30] sm:$0xff]
  %v347 = vld [vmem:[%s2 + $0x38] sm:$0xff]
  %v348 = vld [vmem:[%s2 + $0x40] sm:$0xff]
  %v349 = vld [vmem:[%s2 + $0x48] sm:$0xff]
  %v350 = vld [vmem:[%s2 + $0x50] sm:$0xff]
  %v351 = vld [vmem:[%s2 + $0x58] sm:$0xff]
  %v352 = vld [vmem:[%s2 + $0x60] sm:$0xff]
  %v353 = vld [vmem:[%s2 + $0x68] sm:$0xff]
  %v354 = vld [vmem:[%s2 + $0x70] sm:$0xff]
  %v355 = vld [vmem:[%s2 + $0x78] sm:$0xff]
  %v356 = vld [vmem:[%s2 + $0x80] sm:$0xff]
  %v357 = vld [vmem:[%s2 + $0x88] sm:$0xff]
  %v358 = vld [vmem:[%s2 + $0x90] sm:$0xff]
  %v359 = vld [vmem:[%s2 + $0x98] sm:$0xff]
  %v360 = vld [vmem:[%s2 + $0xa0] sm:$0xff]
  %v361 = vld [vmem:[%s2 + $0xa8] sm:$0xff]
  %v362 = vld [vmem:[%s2 + $0xb0] sm:$0xff]
  %v363 = vld [vmem:[%s2 + $0xb8] sm:$0xff]
  %v364 = vld [vmem:[%s2 + $0xc0] sm:$0xff]
  %v365 = vld [vmem:[%s2 + $0xc8] sm:$0xff]
  %v366 = vld [vmem:[%s2 + $0xd0] sm:$0xff]
  %v367 = vld [vmem:[%s2 + $0xd8] sm:$0xff]
  %v368 = vld [vmem:[%s2 + $0xe0] sm:$0xff]
  %v369 = vld [vmem:[%s2 + $0xe8] sm:$0xff]
  %v370 = vld [vmem:[%s2 + $0xf0] sm:$0xff]
  %v371 = vld [vmem:[%s2 + $0xf8] sm:$0xff]
  %v372 = vld [vmem:[%s2 + $0x100] sm:$0xff]
  %v373 = vld [vmem:[%s2 + $0x108] sm:$0xff]
  %v374 = vld [vmem:[%s2 + $0x110] sm:$0xff]
  %v375 = vld [vmem:[%s2 + $0x118] sm:$0xff]
  %v376 = vld [vmem:[%s2 + $0x120] sm:$0xff]
  %v377 = vld [vmem:[%s2 + $0x128] sm:$0xff]
  %v378 = vld [vmem:[%s2 + $0x130] sm:$0xff]
  %v379 = vld [vmem:[%s2 + $0x138] sm:$0xff]
  %v380 = vld [vmem:[%s2 + $0x140] sm:$0xff]
  %v381 = vld [vmem:[%s2 + $0x148] sm:$0xff]
  %v382 = vld [vmem:[%s2 + $0x150] sm:$0xff]
  %v383 = vld [vmem:[%s2 + $0x158] sm:$0xff]
  %v384 = vld [vmem:[%s2 + $0x160] sm:$0xff]
  %v385 = vld [vmem:[%s2 + $0x168] sm:$0xff]
  %v386 = vld [vmem:[%s2 + $0x170] sm:$0xff]
  %v387 = vld [vmem:[%s2 + $0x178] sm:$0xff]
  %v388 = vld [vmem:[%s2 + $0x180] sm:$0xff]
  %v389 = vld [vmem:[%s2 + $0x188] sm:$0xff]
  %v390 = vld [vmem:[%s2 + $0x190] sm:$0xff]
  %v391 = vld [vmem:[%s2 + $0x198] sm:$0xff]
  %v392 = vld [vmem:[%s2 + $0x1a0] sm:$0xff]
  %v393 = vld [vmem:[%s2 + $0x1a8] sm:$0xff]
  %v394 = vld [vmem:[%s2 + $0x1b0] sm:$0xff]
  %v395 = vld [vmem:[%s2 + $0x1b8] sm:$0xff]
  %v396 = vld [vmem:[%s2 + $0x1c0] sm:$0xff]
  %v397 = vld [vmem:[%s2 + $0x1c8] sm:$0xff]
  %v398 = vld [vmem:[%s2 + $0x1d0] sm:$0xff]
  %v399 = vld [vmem:[%s2 + $0x1d8] sm:$0xff]
  %v400 = vld [vmem:[%s2 + $0x1e0] sm:$0xff]
  %v401 = vld [vmem:[%s2 + $0x1e8] sm:$0xff]
  %v402 = vld [vmem:[%s2 + $0x1f0] sm:$0xff]
  %v403 = vld [vmem:[%s2 + $0x1f8] sm:$0xff]
  %v404 = vld [vmem:[#allocation2] sm:$0xff]
  %v405 = vld [vmem:[#allocation3] sm:$0xff]
  %v406 = vld [vmem:[#allocation4] sm:$0xff]
  %v407 = vld [vmem:[#allocation4 + $0x8] sm:$0xff]
  %v408 = vld [vmem:[#allocation4 + $0x10] sm:$0xff]
  %v409 = vld [vmem:[#allocation4 + $0x18] sm:$0xff]
  %410 = vmatprep.subr.mxu0 %v401
  %411 = vmatpush1.msra.mxu0 %v400
  %412 = vmatprep.subr.mxu0 %v397
  %413 = vmatpush1.msra.mxu0 %v396
  %414 = vmatprep.subr.mxu0 %v393
  %415 = vmatpush1.msra.mxu0 %v392
  %416 = vmatprep.subr.mxu0 %v389
  %417 = vmatpush1.msra.mxu0 %v388
  %418 = vmatprep.subr.mxu0 %v385
  %419 = vmatpush1.msra.mxu0 %v384
  %420 = vmatprep.subr.mxu0 %v381
  %421 = vmatpush1.msra.mxu0 %v380
  %422 = vmatprep.subr.mxu0 %v377
  %423 = vmatpush1.msra.mxu0 %v376
  %424 = vmatprep.subr.mxu0 %v373
  %425 = vmatpush1.msra.mxu0 %v372
  %426 = vmatprep.subr.mxu0 %v369
  %427 = vmatpush1.msra.mxu0 %v368
  %428 = vmatprep.subr.mxu0 %v365
  %429 = vmatpush1.msra.mxu0 %v364
  %430 = vmatprep.subr.mxu0 %v361
  %431 = vmatpush1.msra.mxu0 %v360
  %432 = vmatprep.subr.mxu0 %v357
  %433 = vmatpush1.msra.mxu0 %v356
  %434 = vmatprep.subr.mxu0 %v353
  %435 = vmatpush1.msra.mxu0 %v352
  %436 = vmatprep.subr.mxu0 %v349
  %437 = vmatpush1.msra.mxu0 %v348
  %438 = vmatprep.subr.mxu0 %v345
  %439 = vmatpush1.msra.mxu0 %v344
  %440 = vmatprep.subr.mxu0 %v341
  %441 = vmatpush1.msra.mxu0 %v340
  %442 = vmatprep.subr.mxu0 0.0
  %443 = vmatpush2.msra.mxu0 0.0
  %444 = vmatprep.subr.mxu0 0.0
  %445 = vmatpush2.msra.mxu0 0.0
  %446 = vmatprep.subr.mxu0 0.0
  %447 = vmatpush2.msra.mxu0 0.0
  %448 = vmatprep.subr.mxu0 0.0
  %449 = vmatpush2.msra.mxu0 0.0
  %450 = vmatprep.subr.mxu0 0.0
  %451 = vmatpush2.msra.mxu0 0.0
  %452 = vmatprep.subr.mxu0 0.0
  %453 = vmatpush2.msra.mxu0 0.0
  %454 = vmatprep.subr.mxu0 0.0
  %455 = vmatpush2.msra.mxu0 0.0
  %456 = vmatprep.subr.mxu0 0.0
  %457 = vmatpush2.msra.mxu0 0.0
  %458 = vmatprep.subr.mxu0 0.0
  %459 = vmatpush2.msra.mxu0 0.0
  %460 = vmatprep.subr.mxu0 0.0
  %461 = vmatpush2.msra.mxu0 0.0
  %462 = vmatprep.subr.mxu0 0.0
  %463 = vmatpush2.msra.mxu0 0.0
  %464 = vmatprep.subr.mxu0 0.0
  %465 = vmatpush2.msra.mxu0 0.0
  %466 = vmatprep.subr.mxu0 0.0
  %467 = vmatpush2.msra.mxu0 0.0
  %468 = vmatprep.subr.mxu0 0.0
  %469 = vmatpush2.msra.mxu0 0.0
  %470 = vmatprep.subr.mxu0 0.0
  %471 = vmatpush2.msra.mxu0 0.0
  %472 = vmatprep.subr.mxu0 0.0
  %473 = vmatpush2.msra.mxu0 0.0
  %474 = vmatprep.mubr.f32.mxu0 0.0
  %475 = vmatmul.mubr.f32.gmra.mxu0 %v404
  %v476 = vpop.f32.mrf.mxu0
  %v477 = vadd.f32 0.0, %v476
  %v478 = vpop.f32.mrf.mxu0
  %v479 = vadd.f32 0.0, %v478
  %480 = vdwg.mxu0
  %481 = vmatprep.subr.mxu0 %v403
  %482 = vmatpush1.msra.mxu0 %v402
  %483 = vmatprep.subr.mxu0 %v399
  %484 = vmatpush1.msra.mxu0 %v398
  %485 = vmatprep.subr.mxu0 %v395
  %486 = vmatpush1.msra.mxu0 %v394
  %487 = vmatprep.subr.mxu0 %v391
  %488 = vmatpush1.msra.mxu0 %v390
  %489 = vmatprep.subr.mxu0 %v387
  %490 = vmatpush1.msra.mxu0 %v386
  %491 = vmatprep.subr.mxu0 %v383
  %492 = vmatpush1.msra.mxu0 %v382
  %493 = vmatprep.subr.mxu0 %v379
  %494 = vmatpush1.msra.mxu0 %v378
  %495 = vmatprep.subr.mxu0 %v375
  %496 = vmatpush1.msra.mxu0 %v374
  %497 = vmatprep.subr.mxu0 %v371
  %498 = vmatpush1.msra.mxu0 %v370
  %499 = vmatprep.subr.mxu0 %v367
  %500 = vmatpush1.msra.mxu0 %v366
  %501 = vmatprep.subr.mxu0 %v363
  %502 = vmatpush1.msra.mxu0 %v362
  %503 = vmatprep.subr.mxu0 %v359
  %504 = vmatpush1.msra.mxu0 %v358
  %505 = vmatprep.subr.mxu0 %v355
  %506 = vmatpush1.msra.mxu0 %v354
  %507 = vmatprep.subr.mxu0 %v351
  %508 = vmatpush1.msra.mxu0 %v350
  %509 = vmatprep.subr.mxu0 %v347
  %510 = vmatpush1.msra.mxu0 %v346
  %511 = vmatprep.subr.mxu0 %v343
  %512 = vmatpush1.msra.mxu0 %v342
  %513 = vmatprep.subr.mxu0 0.0
  %514 = vmatpush2.msra.mxu0 0.0
  %515 = vmatprep.subr.mxu0 0.0
  %516 = vmatpush2.msra.mxu0 0.0
  %517 = vmatprep.subr.mxu0 0.0
  %518 = vmatpush2.msra.mxu0 0.0
  %519 = vmatprep.subr.mxu0 0.0
  %520 = vmatpush2.msra.mxu0 0.0
  %521 = vmatprep.subr.mxu0 0.0
  %522 = vmatpush2.msra.mxu0 0.0
  %523 = vmatprep.subr.mxu0 0.0
  %524 = vmatpush2.msra.mxu0 0.0
  %525 = vmatprep.subr.mxu0 0.0
  %526 = vmatpush2.msra.mxu0 0.0
  %527 = vmatprep.subr.mxu0 0.0
  %528 = vmatpush2.msra.mxu0 0.0
  %529 = vmatprep.subr.mxu0 0.0
  %530 = vmatpush2.msra.mxu0 0.0
  %531 = vmatprep.subr.mxu0 0.0
  %532 = vmatpush2.msra.mxu0 0.0
  %533 = vmatprep.subr.mxu0 0.0
  %534 = vmatpush2.msra.mxu0 0.0
  %535 = vmatprep.subr.mxu0 0.0
  %536 = vmatpush2.msra.mxu0 0.0
  %537 = vmatprep.subr.mxu0 0.0
  %538 = vmatpush2.msra.mxu0 0.0
  %539 = vmatprep.subr.mxu0 0.0
  %540 = vmatpush2.msra.mxu0 0.0
  %541 = vmatprep.subr.mxu0 0.0
  %542 = vmatpush2.msra.mxu0 0.0
  %543 = vmatprep.subr.mxu0 0.0
  %544 = vmatpush2.msra.mxu0 0.0
  %545 = vmatprep.mubr.f32.mxu0 0.0
  %546 = vmatmul.mubr.f32.gmra.mxu0 %v404
  %v547 = vpop.f32.mrf.mxu0
  %v548 = vadd.f32 0.0, %v547
  %v549 = vpop.f32.mrf.mxu0
  %v550 = vadd.f32 0.0, %v549
  %551 = vdwg.mxu0
  %v552 = vadd.f32 %v406, %v477
  %v553 = vadd.f32 %v407, %v479
  %v554 = vadd.f32 %v408, %v548
  %v555 = vadd.f32 %v409, %v550
  %v556 = vmul.f32 %v552, 0.5
  %v557 = vtanh.pop %v556
  %v558 = vmul.f32 %v557, 0.5
  %v559 = vadd.f32 %v558, 0.5
  %v560 = vmul.f32 %v553, 0.5
  %v561 = vtanh.pop %v560
  %v562 = vmul.f32 %v561, 0.5
  %v563 = vadd.f32 %v562, 0.5
  %v564 = vtanh.pop %v554
  %v565 = vmul.f32 %v555, 0.5
  %v566 = vtanh.pop %v565
  %v567 = vmul.f32 %v566, 0.5
  %v568 = vadd.f32 %v567, 0.5
  %v569 = vmul.f32 %v563, %v405
  %v570 = vmul.f32 %v559, %v564
  %v571 = vadd.f32 %v569, %v570
  %v572 = vtanh.pop %v571
  %v573 = vmul.f32 %v568, %v572
  %574 = vst [vmem:[%s4] sm:$0xff] %v573
  %s575 = scalar_lea.vmem [#allocation4], 32
  %v576 = vld [vmem:[%s575] sm:$0xff]
  %v577 = vld [vmem:[%s575 + $0x8] sm:$0xff]
  %v578 = vld [vmem:[%s575 + $0x10] sm:$0xff]
  %v579 = vld [vmem:[%s575 + $0x18] sm:$0xff]
  %580 = vmatprep.subr.mxu0 %v401
  %581 = vmatpush1.msra.mxu0 %v400
  %582 = vmatprep.subr.mxu0 %v397
  %583 = vmatpush1.msra.mxu0 %v396
  %584 = vmatprep.subr.mxu0 %v393
  %585 = vmatpush1.msra.mxu0 %v392
  %586 = vmatprep.subr.mxu0 %v389
  %587 = vmatpush1.msra.mxu0 %v388
  %588 = vmatprep.subr.mxu0 %v385
  %589 = vmatpush1.msra.mxu0 %v384
  %590 = vmatprep.subr.mxu0 %v381
  %591 = vmatpush1.msra.mxu0 %v380
  %592 = vmatprep.subr.mxu0 %v377
  %593 = vmatpush1.msra.mxu0 %v376
  %594 = vmatprep.subr.mxu0 %v373
  %595 = vmatpush1.msra.mxu0 %v372
  %596 = vmatprep.subr.mxu0 %v369
  %597 = vmatpush1.msra.mxu0 %v368
  %598 = vmatprep.subr.mxu0 %v365
  %599 = vmatpush1.msra.mxu0 %v364
  %600 = vmatprep.subr.mxu0 %v361
  %601 = vmatpush1.msra.mxu0 %v360
  %602 = vmatprep.subr.mxu0 %v357
  %603 = vmatpush1.msra.mxu0 %v356
  %604 = vmatprep.subr.mxu0 %v353
  %605 = vmatpush1.msra.mxu0 %v352
  %606 = vmatprep.subr.mxu0 %v349
  %607 = vmatpush1.msra.mxu0 %v348
  %608 = vmatprep.subr.mxu0 %v345
  %609 = vmatpush1.msra.mxu0 %v344
  %610 = vmatprep.subr.mxu0 %v341
  %611 = vmatpush1.msra.mxu0 %v340
  %612 = vmatprep.subr.mxu0 0.0
  %613 = vmatpush2.msra.mxu0 0.0
  %614 = vmatprep.subr.mxu0 0.0
  %615 = vmatpush2.msra.mxu0 0.0
  %616 = vmatprep.subr.mxu0 0.0
  %617 = vmatpush2.msra.mxu0 0.0
  %618 = vmatprep.subr.mxu0 0.0
  %619 = vmatpush2.msra.mxu0 0.0
  %620 = vmatprep.subr.mxu0 0.0
  %621 = vmatpush2.msra.mxu0 0.0
  %622 = vmatprep.subr.mxu0 0.0
  %623 = vmatpush2.msra.mxu0 0.0
  %624 = vmatprep.subr.mxu0 0.0
  %625 = vmatpush2.msra.mxu0 0.0
  %626 = vmatprep.subr.mxu0 0.0
  %627 = vmatpush2.msra.mxu0 0.0
  %628 = vmatprep.subr.mxu0 0.0
  %629 = vmatpush2.msra.mxu0 0.0
  %630 = vmatprep.subr.mxu0 0.0
  %631 = vmatpush2.msra.mxu0 0.0
  %632 = vmatprep.subr.mxu0 0.0
  %633 = vmatpush2.msra.mxu0 0.0
  %634 = vmatprep.subr.mxu0 0.0
  %635 = vmatpush2.msra.mxu0 0.0
  %636 = vmatprep.subr.mxu0 0.0
  %637 = vmatpush2.msra.mxu0 0.0
  %638 = vmatprep.subr.mxu0 0.0
  %639 = vmatpush2.msra.mxu0 0.0
  %640 = vmatprep.subr.mxu0 0.0
  %641 = vmatpush2.msra.mxu0 0.0
  %642 = vmatprep.subr.mxu0 0.0
  %643 = vmatpush2.msra.mxu0 0.0
  %644 = vmatprep.mubr.f32.mxu0 0.0
  %645 = vmatmul.mubr.f32.gmra.mxu0 %v573
  %v646 = vpop.f32.mrf.mxu0
  %v647 = vadd.f32 0.0, %v646
  %v648 = vpop.f32.mrf.mxu0
  %v649 = vadd.f32 0.0, %v648
  %650 = vdwg.mxu0
  %651 = vmatprep.subr.mxu0 %v403
  %652 = vmatpush1.msra.mxu0 %v402
  %653 = vmatprep.subr.mxu0 %v399
  %654 = vmatpush1.msra.mxu0 %v398
  %655 = vmatprep.subr.mxu0 %v395
  %656 = vmatpush1.msra.mxu0 %v394
  %657 = vmatprep.subr.mxu0 %v391
  %658 = vmatpush1.msra.mxu0 %v390
  %659 = vmatprep.subr.mxu0 %v387
  %660 = vmatpush1.msra.mxu0 %v386
  %661 = vmatprep.subr.mxu0 %v383
  %662 = vmatpush1.msra.mxu0 %v382
  %663 = vmatprep.subr.mxu0 %v379
  %664 = vmatpush1.msra.mxu0 %v378
  %665 = vmatprep.subr.mxu0 %v375
  %666 = vmatpush1.msra.mxu0 %v374
  %667 = vmatprep.subr.mxu0 %v371
  %668 = vmatpush1.msra.mxu0 %v370
  %669 = vmatprep.subr.mxu0 %v367
  %670 = vmatpush1.msra.mxu0 %v366
  %671 = vmatprep.subr.mxu0 %v363
  %672 = vmatpush1.msra.mxu0 %v362
  %673 = vmatprep.subr.mxu0 %v359
  %674 = vmatpush1.msra.mxu0 %v358
  %675 = vmatprep.subr.mxu0 %v355
  %676 = vmatpush1.msra.mxu0 %v354
  %677 = vmatprep.subr.mxu0 %v351
  %678 = vmatpush1.msra.mxu0 %v350
  %679 = vmatprep.subr.mxu0 %v347
  %680 = vmatpush1.msra.mxu0 %v346
  %681 = vmatprep.subr.mxu0 %v343
  %682 = vmatpush1.msra.mxu0 %v342
  %683 = vmatprep.subr.mxu0 0.0
  %684 = vmatpush2.msra.mxu0 0.0
  %685 = vmatprep.subr.mxu0 0.0
  %686 = vmatpush2.msra.mxu0 0.0
  %687 = vmatprep.subr.mxu0 0.0
  %688 = vmatpush2.msra.mxu0 0.0
  %689 = vmatprep.subr.mxu0 0.0
  %690 = vmatpush2.msra.mxu0 0.0
  %691 = vmatprep.subr.mxu0 0.0
  %692 = vmatpush2.msra.mxu0 0.0
  %693 = vmatprep.subr.mxu0 0.0
  %694 = vmatpush2.msra.mxu0 0.0
  %695 = vmatprep.subr.mxu0 0.0
  %696 = vmatpush2.msra.mxu0 0.0
  %697 = vmatprep.subr.mxu0 0.0
  %698 = vmatpush2.msra.mxu0 0.0
  %699 = vmatprep.subr.mxu0 0.0
  %700 = vmatpush2.msra.mxu0 0.0
  %701 = vmatprep.subr.mxu0 0.0
  %702 = vmatpush2.msra.mxu0 0.0
  %703 = vmatprep.subr.mxu0 0.0
  %704 = vmatpush2.msra.mxu0 0.0
  %705 = vmatprep.subr.mxu0 0.0
  %706 = vmatpush2.msra.mxu0 0.0
  %707 = vmatprep.subr.mxu0 0.0
  %708 = vmatpush2.msra.mxu0 0.0
  %709 = vmatprep.subr.mxu0 0.0
  %710 = vmatpush2.msra.mxu0 0.0
  %711 = vmatprep.subr.mxu0 0.0
  %712 = vmatpush2.msra.mxu0 0.0
  %713 = vmatprep.subr.mxu0 0.0
  %714 = vmatpush2.msra.mxu0 0.0
  %715 = vmatprep.mubr.f32.mxu0 0.0
  %716 = vmatmul.mubr.f32.gmra.mxu0 %v573
  %v717 = vpop.f32.mrf.mxu0
  %v718 = vadd.f32 0.0, %v717
  %v719 = vpop.f32.mrf.mxu0
  %v720 = vadd.f32 0.0, %v719
  %721 = vdwg.mxu0
  %v722 = vadd.f32 %v576, %v647
  %v723 = vadd.f32 %v577, %v649
  %v724 = vadd.f32 %v578, %v718
  %v725 = vadd.f32 %v579, %v720
  %v726 = vmul.f32 %v722, 0.5
  %v727 = vtanh.pop %v726
  %v728 = vmul.f32 %v727, 0.5
  %v729 = vadd.f32 %v728, 0.5
  %v730 = vmul.f32 %v723, 0.5
  %v731 = vtanh.pop %v730
  %v732 = vmul.f32 %v731, 0.5
  %v733 = vadd.f32 %v732, 0.5
  %v734 = vtanh.pop %v724
  %v735 = vmul.f32 %v725, 0.5
  %v736 = vtanh.pop %v735
  %v737 = vmul.f32 %v736, 0.5
  %v738 = vadd.f32 %v737, 0.5
  %v739 = vmul.f32 %v733, %v571
  %v740 = vmul.f32 %v729, %v734
  %v741 = vadd.f32 %v739, %v740
  %v742 = vtanh.pop %v741
  %v743 = vmul.f32 %v738, %v742
  %s744 = scalar_lea.vmem %s4, 8
  %745 = vst [vmem:[%s744] sm:$0xff] %v743
  %s746 = scalar_lea.vmem [#allocation4], 64
  %v747 = vld [vmem:[%s746] sm:$0xff]
  %v748 = vld [vmem:[%s746 + $0x8] sm:$0xff]
  %v749 = vld [vmem:[%s746 + $0x10] sm:$0xff]
  %v750 = vld [vmem:[%s746 + $0x18] sm:$0xff]
  %751 = vmatprep.subr.mxu0 %v401
  %752 = vmatpush1.msra.mxu0 %v400
  %753 = vmatprep.subr.mxu0 %v397
  %754 = vmatpush1.msra.mxu0 %v396
  %755 = vmatprep.subr.mxu0 %v393
  %756 = vmatpush1.msra.mxu0 %v392
  %757 = vmatprep.subr.mxu0 %v389
  %758 = vmatpush1.msra.mxu0 %v388
  %759 = vmatprep.subr.mxu0 %v385
  %760 = vmatpush1.msra.mxu0 %v384
  %761 = vmatprep.subr.mxu0 %v381
  %762 = vmatpush1.msra.mxu0 %v380
  %763 = vmatprep.subr.mxu0 %v377
  %764 = vmatpush1.msra.mxu0 %v376
  %765 = vmatprep.subr.mxu0 %v373
  %766 = vmatpush1.msra.mxu0 %v372
  %767 = vmatprep.subr.mxu0 %v369
  %768 = vmatpush1.msra.mxu0 %v368
  %769 = vmatprep.subr.mxu0 %v365
  %770 = vmatpush1.msra.mxu0 %v364
  %771 = vmatprep.subr.mxu0 %v361
  %772 = vmatpush1.msra.mxu0 %v360
  %773 = vmatprep.subr.mxu0 %v357
  %774 = vmatpush1.msra.mxu0 %v356
  %775 = vmatprep.subr.mxu0 %v353
  %776 = vmatpush1.msra.mxu0 %v352
  %777 = vmatprep.subr.mxu0 %v349
  %778 = vmatpush1.msra.mxu0 %v348
  %779 = vmatprep.subr.mxu0 %v345
  %780 = vmatpush1.msra.mxu0 %v344
  %781 = vmatprep.subr.mxu0 %v341
  %782 = vmatpush1.msra.mxu0 %v340
  %783 = vmatprep.subr.mxu0 0.0
  %784 = vmatpush2.msra.mxu0 0.0
  %785 = vmatprep.subr.mxu0 0.0
  %786 = vmatpush2.msra.mxu0 0.0
  %787 = vmatprep.subr.mxu0 0.0
  %788 = vmatpush2.msra.mxu0 0.0
  %789 = vmatprep.subr.mxu0 0.0
  %790 = vmatpush2.msra.mxu0 0.0
  %791 = vmatprep.subr.mxu0 0.0
  %792 = vmatpush2.msra.mxu0 0.0
  %793 = vmatprep.subr.mxu0 0.0
  %794 = vmatpush2.msra.mxu0 0.0
  %795 = vmatprep.subr.mxu0 0.0
  %796 = vmatpush2.msra.mxu0 0.0
  %797 = vmatprep.subr.mxu0 0.0
  %798 = vmatpush2.msra.mxu0 0.0
  %799 = vmatprep.subr.mxu0 0.0
  %800 = vmatpush2.msra.mxu0 0.0
  %801 = vmatprep.subr.mxu0 0.0
  %802 = vmatpush2.msra.mxu0 0.0
  %803 = vmatprep.subr.mxu0 0.0
  %804 = vmatpush2.msra.mxu0 0.0
  %805 = vmatprep.subr.mxu0 0.0
  %806 = vmatpush2.msra.mxu0 0.0
  %807 = vmatprep.subr.mxu0 0.0
  %808 = vmatpush2.msra.mxu0 0.0
  %809 = vmatprep.subr.mxu0 0.0
  %810 = vmatpush2.msra.mxu0 0.0
  %811 = vmatprep.subr.mxu0 0.0
  %812 = vmatpush2.msra.mxu0 0.0
  %813 = vmatprep.subr.mxu0 0.0
  %814 = vmatpush2.msra.mxu0 0.0
  %815 = vmatprep.mubr.f32.mxu0 0.0
  %816 = vmatmul.mubr.f32.gmra.mxu0 %v743
  %v817 = vpop.f32.mrf.mxu0
  %v818 = vadd.f32 0.0, %v817
  %v819 = vpop.f32.mrf.mxu0
  %v820 = vadd.f32 0.0, %v819
  %821 = vdwg.mxu0
  %822 = vmatprep.subr.mxu0 %v403
  %823 = vmatpush1.msra.mxu0 %v402
  %824 = vmatprep.subr.mxu0 %v399
  %825 = vmatpush1.msra.mxu0 %v398
  %826 = vmatprep.subr.mxu0 %v395
  %827 = vmatpush1.msra.mxu0 %v394
  %828 = vmatprep.subr.mxu0 %v391
  %829 = vmatpush1.msra.mxu0 %v390
  %830 = vmatprep.subr.mxu0 %v387
  %831 = vmatpush1.msra.mxu0 %v386
  %832 = vmatprep.subr.mxu0 %v383
  %833 = vmatpush1.msra.mxu0 %v382
  %834 = vmatprep.subr.mxu0 %v379
  %835 = vmatpush1.msra.mxu0 %v378
  %836 = vmatprep.subr.mxu0 %v375
  %837 = vmatpush1.msra.mxu0 %v374
  %838 = vmatprep.subr.mxu0 %v371
  %839 = vmatpush1.msra.mxu0 %v370
  %840 = vmatprep.subr.mxu0 %v367
  %841 = vmatpush1.msra.mxu0 %v366
  %842 = vmatprep.subr.mxu0 %v363
  %843 = vmatpush1.msra.mxu0 %v362
  %844 = vmatprep.subr.mxu0 %v359
  %845 = vmatpush1.msra.mxu0 %v358
  %846 = vmatprep.subr.mxu0 %v355
  %847 = vmatpush1.msra.mxu0 %v354
  %848 = vmatprep.subr.mxu0 %v351
  %849 = vmatpush1.msra.mxu0 %v350
  %850 = vmatprep.subr.mxu0 %v347
  %851 = vmatpush1.msra.mxu0 %v346
  %852 = vmatprep.subr.mxu0 %v343
  %853 = vmatpush1.msra.mxu0 %v342
  %854 = vmatprep.subr.mxu0 0.0
  %855 = vmatpush2.msra.mxu0 0.0
  %856 = vmatprep.subr.mxu0 0.0
  %857 = vmatpush2.msra.mxu0 0.0
  %858 = vmatprep.subr.mxu0 0.0
  %859 = vmatpush2.msra.mxu0 0.0
  %860 = vmatprep.subr.mxu0 0.0
  %861 = vmatpush2.msra.mxu0 0.0
  %862 = vmatprep.subr.mxu0 0.0
  %863 = vmatpush2.msra.mxu0 0.0
  %864 = vmatprep.subr.mxu0 0.0
  %865 = vmatpush2.msra.mxu0 0.0
  %866 = vmatprep.subr.mxu0 0.0
  %867 = vmatpush2.msra.mxu0 0.0
  %868 = vmatprep.subr.mxu0 0.0
  %869 = vmatpush2.msra.mxu0 0.0
  %870 = vmatprep.subr.mxu0 0.0
  %871 = vmatpush2.msra.mxu0 0.0
  %872 = vmatprep.subr.mxu0 0.0
  %873 = vmatpush2.msra.mxu0 0.0
  %874 = vmatprep.subr.mxu0 0.0
  %875 = vmatpush2.msra.mxu0 0.0
  %876 = vmatprep.subr.mxu0 0.0
  %877 = vmatpush2.msra.mxu0 0.0
  %878 = vmatprep.subr.mxu0 0.0
  %879 = vmatpush2.msra.mxu0 0.0
  %880 = vmatprep.subr.mxu0 0.0
  %881 = vmatpush2.msra.mxu0 0.0
  %882 = vmatprep.subr.mxu0 0.0
  %883 = vmatpush2.msra.mxu0 0.0
  %884 = vmatprep.subr.mxu0 0.0
  %885 = vmatpush2.msra.mxu0 0.0
  %886 = vmatprep.mubr.f32.mxu0 0.0
  %887 = vmatmul.mubr.f32.gmra.mxu0 %v743
  %v888 = vpop.f32.mrf.mxu0
  %v889 = vadd.f32 0.0, %v888
  %v890 = vpop.f32.mrf.mxu0
  %v891 = vadd.f32 0.0, %v890
  %892 = vdwg.mxu0
  %v893 = vadd.f32 %v747, %v818
  %v894 = vadd.f32 %v748, %v820
  %v895 = vadd.f32 %v749, %v889
  %v896 = vadd.f32 %v750, %v891
  %v897 = vmul.f32 %v893, 0.5
  %v898 = vtanh.pop %v897
  %v899 = vmul.f32 %v898, 0.5
  %v900 = vadd.f32 %v899, 0.5
  %v901 = vmul.f32 %v894, 0.5
  %v902 = vtanh.pop %v901
  %v903 = vmul.f32 %v902, 0.5
  %v904 = vadd.f32 %v903, 0.5
  %v905 = vtanh.pop %v895
  %v906 = vmul.f32 %v896, 0.5
  %v907 = vtanh.pop %v906
  %v908 = vmul.f32 %v907, 0.5
  %v909 = vadd.f32 %v908, 0.5
  %v910 = vmul.f32 %v904, %v741
  %v911 = vmul.f32 %v900, %v905
  %v912 = vadd.f32 %v910, %v911
  %v913 = vtanh.pop %v912
  %v914 = vmul.f32 %v909, %v913
  %s915 = scalar_lea.vmem %s4, 16
  %916 = vst [vmem:[%s915] sm:$0xff] %v914
  %s917 = scalar_lea.vmem [#allocation4], 96
  %v918 = vld [vmem:[%s917] sm:$0xff]
  %v919 = vld [vmem:[%s917 + $0x8] sm:$0xff]
  %v920 = vld [vmem:[%s917 + $0x10] sm:$0xff]
  %v921 = vld [vmem:[%s917 + $0x18] sm:$0xff]
  %922 = vmatprep.subr.mxu0 %v401
  %923 = vmatpush1.msra.mxu0 %v400
  %924 = vmatprep.subr.mxu0 %v397
  %925 = vmatpush1.msra.mxu0 %v396
  %926 = vmatprep.subr.mxu0 %v393
  %927 = vmatpush1.msra.mxu0 %v392
  %928 = vmatprep.subr.mxu0 %v389
  %929 = vmatpush1.msra.mxu0 %v388
  %930 = vmatprep.subr.mxu0 %v385
  %931 = vmatpush1.msra.mxu0 %v384
  %932 = vmatprep.subr.mxu0 %v381
  %933 = vmatpush1.msra.mxu0 %v380
  %934 = vmatprep.subr.mxu0 %v377
  %935 = vmatpush1.msra.mxu0 %v376
  %936 = vmatprep.subr.mxu0 %v373
  %937 = vmatpush1.msra.mxu0 %v372
  %938 = vmatprep.subr.mxu0 %v369
  %939 = vmatpush1.msra.mxu0 %v368
  %940 = vmatprep.subr.mxu0 %v365
  %941 = vmatpush1.msra.mxu0 %v364
  %942 = vmatprep.subr.mxu0 %v361
  %943 = vmatpush1.msra.mxu0 %v360
  %944 = vmatprep.subr.mxu0 %v357
  %945 = vmatpush1.msra.mxu0 %v356
  %946 = vmatprep.subr.mxu0 %v353
  %947 = vmatpush1.msra.mxu0 %v352
  %948 = vmatprep.subr.mxu0 %v349
  %949 = vmatpush1.msra.mxu0 %v348
  %950 = vmatprep.subr.mxu0 %v345
  %951 = vmatpush1.msra.mxu0 %v344
  %952 = vmatprep.subr.mxu0 %v341
  %953 = vmatpush1.msra.mxu0 %v340
  %954 = vmatprep.subr.mxu0 0.0
  %955 = vmatpush2.msra.mxu0 0.0
  %956 = vmatprep.subr.mxu0 0.0
  %957 = vmatpush2.msra.mxu0 0.0
  %958 = vmatprep.subr.mxu0 0.0
  %959 = vmatpush2.msra.mxu0 0.0
  %960 = vmatprep.subr.mxu0 0.0
  %961 = vmatpush2.msra.mxu0 0.0
  %962 = vmatprep.subr.mxu0 0.0
  %963 = vmatpush2.msra.mxu0 0.0
  %964 = vmatprep.subr.mxu0 0.0
  %965 = vmatpush2.msra.mxu0 0.0
  %966 = vmatprep.subr.mxu0 0.0
  %967 = vmatpush2.msra.mxu0 0.0
  %968 = vmatprep.subr.mxu0 0.0
  %969 = vmatpush2.msra.mxu0 0.0
  %970 = vmatprep.subr.mxu0 0.0
  %971 = vmatpush2.msra.mxu0 0.0
  %972 = vmatprep.subr.mxu0 0.0
  %973 = vmatpush2.msra.mxu0 0.0
  %974 = vmatprep.subr.mxu0 0.0
  %975 = vmatpush2.msra.mxu0 0.0
  %976 = vmatprep.subr.mxu0 0.0
  %977 = vmatpush2.msra.mxu0 0.0
  %978 = vmatprep.subr.mxu0 0.0
  %979 = vmatpush2.msra.mxu0 0.0
  %980 = vmatprep.subr.mxu0 0.0
  %981 = vmatpush2.msra.mxu0 0.0
  %982 = vmatprep.subr.mxu0 0.0
  %983 = vmatpush2.msra.mxu0 0.0
  %984 = vmatprep.subr.mxu0 0.0
  %985 = vmatpush2.msra.mxu0 0.0
  %986 = vmatprep.mubr.f32.mxu0 0.0
  %987 = vmatmul.mubr.f32.gmra.mxu0 %v914
  %v988 = vpop.f32.mrf.mxu0
  %v989 = vadd.f32 0.0, %v988
  %v990 = vpop.f32.mrf.mxu0
  %v991 = vadd.f32 0.0, %v990
  %992 = vdwg.mxu0
  %993 = vmatprep.subr.mxu0 %v403
  %994 = vmatpush1.msra.mxu0 %v402
  %995 = vmatprep.subr.mxu0 %v399
  %996 = vmatpush1.msra.mxu0 %v398
  %997 = vmatprep.subr.mxu0 %v395
  %998 = vmatpush1.msra.mxu0 %v394
  %999 = vmatprep.subr.mxu0 %v391
  %1000 = vmatpush1.msra.mxu0 %v390
  %1001 = vmatprep.subr.mxu0 %v387
  %1002 = vmatpush1.msra.mxu0 %v386
  %1003 = vmatprep.subr.mxu0 %v383
  %1004 = vmatpush1.msra.mxu0 %v382
  %1005 = vmatprep.subr.mxu0 %v379
  %1006 = vmatpush1.msra.mxu0 %v378
  %1007 = vmatprep.subr.mxu0 %v375
  %1008 = vmatpush1.msra.mxu0 %v374
  %1009 = vmatprep.subr.mxu0 %v371
  %1010 = vmatpush1.msra.mxu0 %v370
  %1011 = vmatprep.subr.mxu0 %v367
  %1012 = vmatpush1.msra.mxu0 %v366
  %1013 = vmatprep.subr.mxu0 %v363
  %1014 = vmatpush1.msra.mxu0 %v362
  %1015 = vmatprep.subr.mxu0 %v359
  %1016 = vmatpush1.msra.mxu0 %v358
  %1017 = vmatprep.subr.mxu0 %v355
  %1018 = vmatpush1.msra.mxu0 %v354
  %1019 = vmatprep.subr.mxu0 %v351
  %1020 = vmatpush1.msra.mxu0 %v350
  %1021 = vmatprep.subr.mxu0 %v347
  %1022 = vmatpush1.msra.mxu0 %v346
  %1023 = vmatprep.subr.mxu0 %v343
  %1024 = vmatpush1.msra.mxu0 %v342
  %1025 = vmatprep.subr.mxu0 0.0
  %1026 = vmatpush2.msra.mxu0 0.0
  %1027 = vmatprep.subr.mxu0 0.0
  %1028 = vmatpush2.msra.mxu0 0.0
  %1029 = vmatprep.subr.mxu0 0.0
  %1030 = vmatpush2.msra.mxu0 0.0
  %1031 = vmatprep.subr.mxu0 0.0
  %1032 = vmatpush2.msra.mxu0 0.0
  %1033 = vmatprep.subr.mxu0 0.0
  %1034 = vmatpush2.msra.mxu0 0.0
  %1035 = vmatprep.subr.mxu0 0.0
  %1036 = vmatpush2.msra.mxu0 0.0
  %1037 = vmatprep.subr.mxu0 0.0
  %1038 = vmatpush2.msra.mxu0 0.0
  %1039 = vmatprep.subr.mxu0 0.0
  %1040 = vmatpush2.msra.mxu0 0.0
  %1041 = vmatprep.subr.mxu0 0.0
  %1042 = vmatpush2.msra.mxu0 0.0
  %1043 = vmatprep.subr.mxu0 0.0
  %1044 = vmatpush2.msra.mxu0 0.0
  %1045 = vmatprep.subr.mxu0 0.0
  %1046 = vmatpush2.msra.mxu0 0.0
  %1047 = vmatprep.subr.mxu0 0.0
  %1048 = vmatpush2.msra.mxu0 0.0
  %1049 = vmatprep.subr.mxu0 0.0
  %1050 = vmatpush2.msra.mxu0 0.0
  %1051 = vmatprep.subr.mxu0 0.0
  %1052 = vmatpush2.msra.mxu0 0.0
  %1053 = vmatprep.subr.mxu0 0.0
  %1054 = vmatpush2.msra.mxu0 0.0
  %1055 = vmatprep.subr.mxu0 0.0
  %1056 = vmatpush2.msra.mxu0 0.0
  %1057 = vmatprep.mubr.f32.mxu0 0.0
  %1058 = vmatmul.mubr.f32.gmra.mxu0 %v914
  %v1059 = vpop.f32.mrf.mxu0
  %v1060 = vadd.f32 0.0, %v1059
  %v1061 = vpop.f32.mrf.mxu0
  %v1062 = vadd.f32 0.0, %v1061
  %1063 = vdwg.mxu0
  %v1064 = vadd.f32 %v918, %v989
  %v1065 = vadd.f32 %v919, %v991
  %v1066 = vadd.f32 %v920, %v1060
  %v1067 = vadd.f32 %v921, %v1062
  %v1068 = vmul.f32 %v1064, 0.5
  %v1069 = vtanh.pop %v1068
  %v1070 = vmul.f32 %v1069, 0.5
  %v1071 = vadd.f32 %v1070, 0.5
  %v1072 = vmul.f32 %v1065, 0.5
  %v1073 = vtanh.pop %v1072
  %v1074 = vmul.f32 %v1073, 0.5
  %v1075 = vadd.f32 %v1074, 0.5
  %v1076 = vtanh.pop %v1066
  %v1077 = vmul.f32 %v1067, 0.5
  %v1078 = vtanh.pop %v1077
  %v1079 = vmul.f32 %v1078, 0.5
  %v1080 = vadd.f32 %v1079, 0.5
  %v1081 = vmul.f32 %v1075, %v912
  %v1082 = vmul.f32 %v1071, %v1076
  %v1083 = vadd.f32 %v1081, %v1082
  %v1084 = vtanh.pop %v1083
  %v1085 = vmul.f32 %v1080, %v1084
  %s1086 = scalar_lea.vmem %s4, 24
  %1087 = vst [vmem:[%s1086] sm:$0xff] %v1085
  %s1088 = scalar_lea.vmem [#allocation4], 128
  %v1089 = vld [vmem:[%s1088] sm:$0xff]
  %v1090 = vld [vmem:[%s1088 + $0x8] sm:$0xff]
  %v1091 = vld [vmem:[%s1088 + $0x10] sm:$0xff]
  %v1092 = vld [vmem:[%s1088 + $0x18] sm:$0xff]
  %1093 = vmatprep.subr.mxu0 %v401
  %1094 = vmatpush1.msra.mxu0 %v400
  %1095 = vmatprep.subr.mxu0 %v397
  %1096 = vmatpush1.msra.mxu0 %v396
  %1097 = vmatprep.subr.mxu0 %v393
  %1098 = vmatpush1.msra.mxu0 %v392
  %1099 = vmatprep.subr.mxu0 %v389
  %1100 = vmatpush1.msra.mxu0 %v388
  %1101 = vmatprep.subr.mxu0 %v385
  %1102 = vmatpush1.msra.mxu0 %v384
  %1103 = vmatprep.subr.mxu0 %v381
  %1104 = vmatpush1.msra.mxu0 %v380
  %1105 = vmatprep.subr.mxu0 %v377
  %1106 = vmatpush1.msra.mxu0 %v376
  %1107 = vmatprep.subr.mxu0 %v373
  %1108 = vmatpush1.msra.mxu0 %v372
  %1109 = vmatprep.subr.mxu0 %v369
  %1110 = vmatpush1.msra.mxu0 %v368
  %1111 = vmatprep.subr.mxu0 %v365
  %1112 = vmatpush1.msra.mxu0 %v364
  %1113 = vmatprep.subr.mxu0 %v361
  %1114 = vmatpush1.msra.mxu0 %v360
  %1115 = vmatprep.subr.mxu0 %v357
  %1116 = vmatpush1.msra.mxu0 %v356
  %1117 = vmatprep.subr.mxu0 %v353
  %1118 = vmatpush1.msra.mxu0 %v352
  %1119 = vmatprep.subr.mxu0 %v349
  %1120 = vmatpush1.msra.mxu0 %v348
  %1121 = vmatprep.subr.mxu0 %v345
  %1122 = vmatpush1.msra.mxu0 %v344
  %1123 = vmatprep.subr.mxu0 %v341
  %1124 = vmatpush1.msra.mxu0 %v340
  %1125 = vmatprep.subr.mxu0 0.0
  %1126 = vmatpush2.msra.mxu0 0.0
  %1127 = vmatprep.subr.mxu0 0.0
  %1128 = vmatpush2.msra.mxu0 0.0
  %1129 = vmatprep.subr.mxu0 0.0
  %1130 = vmatpush2.msra.mxu0 0.0
  %1131 = vmatprep.subr.mxu0 0.0
  %1132 = vmatpush2.msra.mxu0 0.0
  %1133 = vmatprep.subr.mxu0 0.0
  %1134 = vmatpush2.msra.mxu0 0.0
  %1135 = vmatprep.subr.mxu0 0.0
  %1136 = vmatpush2.msra.mxu0 0.0
  %1137 = vmatprep.subr.mxu0 0.0
  %1138 = vmatpush2.msra.mxu0 0.0
  %1139 = vmatprep.subr.mxu0 0.0
  %1140 = vmatpush2.msra.mxu0 0.0
  %1141 = vmatprep.subr.mxu0 0.0
  %1142 = vmatpush2.msra.mxu0 0.0
  %1143 = vmatprep.subr.mxu0 0.0
  %1144 = vmatpush2.msra.mxu0 0.0
  %1145 = vmatprep.subr.mxu0 0.0
  %1146 = vmatpush2.msra.mxu0 0.0
  %1147 = vmatprep.subr.mxu0 0.0
  %1148 = vmatpush2.msra.mxu0 0.0
  %1149 = vmatprep.subr.mxu0 0.0
  %1150 = vmatpush2.msra.mxu0 0.0
  %1151 = vmatprep.subr.mxu0 0.0
  %1152 = vmatpush2.msra.mxu0 0.0
  %1153 = vmatprep.subr.mxu0 0.0
  %1154 = vmatpush2.msra.mxu0 0.0
  %1155 = vmatprep.subr.mxu0 0.0
  %1156 = vmatpush2.msra.mxu0 0.0
  %1157 = vmatprep.mubr.f32.mxu0 0.0
  %1158 = vmatmul.mubr.f32.gmra.mxu0 %v1085
  %v1159 = vpop.f32.mrf.mxu0
  %v1160 = vadd.f32 0.0, %v1159
  %v1161 = vpop.f32.mrf.mxu0
  %v1162 = vadd.f32 0.0, %v1161
  %1163 = vdwg.mxu0
  %1164 = vmatprep.subr.mxu0 %v403
  %1165 = vmatpush1.msra.mxu0 %v402
  %1166 = vmatprep.subr.mxu0 %v399
  %1167 = vmatpush1.msra.mxu0 %v398
  %1168 = vmatprep.subr.mxu0 %v395
  %1169 = vmatpush1.msra.mxu0 %v394
  %1170 = vmatprep.subr.mxu0 %v391
  %1171 = vmatpush1.msra.mxu0 %v390
  %1172 = vmatprep.subr.mxu0 %v387
  %1173 = vmatpush1.msra.mxu0 %v386
  %1174 = vmatprep.subr.mxu0 %v383
  %1175 = vmatpush1.msra.mxu0 %v382
  %1176 = vmatprep.subr.mxu0 %v379
  %1177 = vmatpush1.msra.mxu0 %v378
  %1178 = vmatprep.subr.mxu0 %v375
  %1179 = vmatpush1.msra.mxu0 %v374
  %1180 = vmatprep.subr.mxu0 %v371
  %1181 = vmatpush1.msra.mxu0 %v370
  %1182 = vmatprep.subr.mxu0 %v367
  %1183 = vmatpush1.msra.mxu0 %v366
  %1184 = vmatprep.subr.mxu0 %v363
  %1185 = vmatpush1.msra.mxu0 %v362
  %1186 = vmatprep.subr.mxu0 %v359
  %1187 = vmatpush1.msra.mxu0 %v358
  %1188 = vmatprep.subr.mxu0 %v355
  %1189 = vmatpush1.msra.mxu0 %v354
  %1190 = vmatprep.subr.mxu0 %v351
  %1191 = vmatpush1.msra.mxu0 %v350
  %1192 = vmatprep.subr.mxu0 %v347
  %1193 = vmatpush1.msra.mxu0 %v346
  %1194 = vmatprep.subr.mxu0 %v343
  %1195 = vmatpush1.msra.mxu0 %v342
  %1196 = vmatprep.subr.mxu0 0.0
  %1197 = vmatpush2.msra.mxu0 0.0
  %1198 = vmatprep.subr.mxu0 0.0
  %1199 = vmatpush2.msra.mxu0 0.0
  %1200 = vmatprep.subr.mxu0 0.0
  %1201 = vmatpush2.msra.mxu0 0.0
  %1202 = vmatprep.subr.mxu0 0.0
  %1203 = vmatpush2.msra.mxu0 0.0
  %1204 = vmatprep.subr.mxu0 0.0
  %1205 = vmatpush2.msra.mxu0 0.0
  %1206 = vmatprep.subr.mxu0 0.0
  %1207 = vmatpush2.msra.mxu0 0.0
  %1208 = vmatprep.subr.mxu0 0.0
  %1209 = vmatpush2.msra.mxu0 0.0
  %1210 = vmatprep.subr.mxu0 0.0
  %1211 = vmatpush2.msra.mxu0 0.0
  %1212 = vmatprep.subr.mxu0 0.0
  %1213 = vmatpush2.msra.mxu0 0.0
  %1214 = vmatprep.subr.mxu0 0.0
  %1215 = vmatpush2.msra.mxu0 0.0
  %1216 = vmatprep.subr.mxu0 0.0
  %1217 = vmatpush2.msra.mxu0 0.0
  %1218 = vmatprep.subr.mxu0 0.0
  %1219 = vmatpush2.msra.mxu0 0.0
  %1220 = vmatprep.subr.mxu0 0.0
  %1221 = vmatpush2.msra.mxu0 0.0
  %1222 = vmatprep.subr.mxu0 0.0
  %1223 = vmatpush2.msra.mxu0 0.0
  %1224 = vmatprep.subr.mxu0 0.0
  %1225 = vmatpush2.msra.mxu0 0.0
  %1226 = vmatprep.subr.mxu0 0.0
  %1227 = vmatpush2.msra.mxu0 0.0
  %1228 = vmatprep.mubr.f32.mxu0 0.0
  %1229 = vmatmul.mubr.f32.gmra.mxu0 %v1085
  %v1230 = vpop.f32.mrf.mxu0
  %v1231 = vadd.f32 0.0, %v1230
  %v1232 = vpop.f32.mrf.mxu0
  %v1233 = vadd.f32 0.0, %v1232
  %1234 = vdwg.mxu0
  %v1235 = vadd.f32 %v1089, %v1160
  %v1236 = vadd.f32 %v1090, %v1162
  %v1237 = vadd.f32 %v1091, %v1231
  %v1238 = vadd.f32 %v1092, %v1233
  %v1239 = vmul.f32 %v1235, 0.5
  %v1240 = vtanh.pop %v1239
  %v1241 = vmul.f32 %v1240, 0.5
  %v1242 = vadd.f32 %v1241, 0.5
  %v1243 = vmul.f32 %v1236, 0.5
  %v1244 = vtanh.pop %v1243
  %v1245 = vmul.f32 %v1244, 0.5
  %v1246 = vadd.f32 %v1245, 0.5
  %v1247 = vtanh.pop %v1237
  %v1248 = vmul.f32 %v1238, 0.5
  %v1249 = vtanh.pop %v1248
  %v1250 = vmul.f32 %v1249, 0.5
  %v1251 = vadd.f32 %v1250, 0.5
  %v1252 = vmul.f32 %v1246, %v1083
  %v1253 = vmul.f32 %v1242, %v1247
  %v1254 = vadd.f32 %v1252, %v1253
  %v1255 = vtanh.pop %v1254
  %v1256 = vmul.f32 %v1251, %v1255
  %s1257 = scalar_lea.vmem %s4, 32
  %1258 = vst [vmem:[%s1257] sm:$0xff] %v1256
  %s1259 = scalar_lea.vmem [#allocation4], 160
  %v1260 = vld [vmem:[%s1259] sm:$0xff]
  %v1261 = vld [vmem:[%s1259 + $0x8] sm:$0xff]
  %v1262 = vld [vmem:[%s1259 + $0x10] sm:$0xff]
  %v1263 = vld [vmem:[%s1259 + $0x18] sm:$0xff]
  %1264 = vmatprep.subr.mxu0 %v401
  %1265 = vmatpush1.msra.mxu0 %v400
  %1266 = vmatprep.subr.mxu0 %v397
  %1267 = vmatpush1.msra.mxu0 %v396
  %1268 = vmatprep.subr.mxu0 %v393
  %1269 = vmatpush1.msra.mxu0 %v392
  %1270 = vmatprep.subr.mxu0 %v389
  %1271 = vmatpush1.msra.mxu0 %v388
  %1272 = vmatprep.subr.mxu0 %v385
  %1273 = vmatpush1.msra.mxu0 %v384
  %1274 = vmatprep.subr.mxu0 %v381
  %1275 = vmatpush1.msra.mxu0 %v380
  %1276 = vmatprep.subr.mxu0 %v377
  %1277 = vmatpush1.msra.mxu0 %v376
  %1278 = vmatprep.subr.mxu0 %v373
  %1279 = vmatpush1.msra.mxu0 %v372
  %1280 = vmatprep.subr.mxu0 %v369
  %1281 = vmatpush1.msra.mxu0 %v368
  %1282 = vmatprep.subr.mxu0 %v365
  %1283 = vmatpush1.msra.mxu0 %v364
  %1284 = vmatprep.subr.mxu0 %v361
  %1285 = vmatpush1.msra.mxu0 %v360
  %1286 = vmatprep.subr.mxu0 %v357
  %1287 = vmatpush1.msra.mxu0 %v356
  %1288 = vmatprep.subr.mxu0 %v353
  %1289 = vmatpush1.msra.mxu0 %v352
  %1290 = vmatprep.subr.mxu0 %v349
  %1291 = vmatpush1.msra.mxu0 %v348
  %1292 = vmatprep.subr.mxu0 %v345
  %1293 = vmatpush1.msra.mxu0 %v344
  %1294 = vmatprep.subr.mxu0 %v341
  %1295 = vmatpush1.msra.mxu0 %v340
  %1296 = vmatprep.subr.mxu0 0.0
  %1297 = vmatpush2.msra.mxu0 0.0
  %1298 = vmatprep.subr.mxu0 0.0
  %1299 = vmatpush2.msra.mxu0 0.0
  %1300 = vmatprep.subr.mxu0 0.0
  %1301 = vmatpush2.msra.mxu0 0.0
  %1302 = vmatprep.subr.mxu0 0.0
  %1303 = vmatpush2.msra.mxu0 0.0
  %1304 = vmatprep.subr.mxu0 0.0
  %1305 = vmatpush2.msra.mxu0 0.0
  %1306 = vmatprep.subr.mxu0 0.0
  %1307 = vmatpush2.msra.mxu0 0.0
  %1308 = vmatprep.subr.mxu0 0.0
  %1309 = vmatpush2.msra.mxu0 0.0
  %1310 = vmatprep.subr.mxu0 0.0
  %1311 = vmatpush2.msra.mxu0 0.0
  %1312 = vmatprep.subr.mxu0 0.0
  %1313 = vmatpush2.msra.mxu0 0.0
  %1314 = vmatprep.subr.mxu0 0.0
  %1315 = vmatpush2.msra.mxu0 0.0
  %1316 = vmatprep.subr.mxu0 0.0
  %1317 = vmatpush2.msra.mxu0 0.0
  %1318 = vmatprep.subr.mxu0 0.0
  %1319 = vmatpush2.msra.mxu0 0.0
  %1320 = vmatprep.subr.mxu0 0.0
  %1321 = vmatpush2.msra.mxu0 0.0
  %1322 = vmatprep.subr.mxu0 0.0
  %1323 = vmatpush2.msra.mxu0 0.0
  %1324 = vmatprep.subr.mxu0 0.0
  %1325 = vmatpush2.msra.mxu0 0.0
  %1326 = vmatprep.subr.mxu0 0.0
  %1327 = vmatpush2.msra.mxu0 0.0
  %1328 = vmatprep.mubr.f32.mxu0 0.0
  %1329 = vmatmul.mubr.f32.gmra.mxu0 %v1256
  %v1330 = vpop.f32.mrf.mxu0
  %v1331 = vadd.f32 0.0, %v1330
  %v1332 = vpop.f32.mrf.mxu0
  %v1333 = vadd.f32 0.0, %v1332
  %1334 = vdwg.mxu0
  %1335 = vmatprep.subr.mxu0 %v403
  %1336 = vmatpush1.msra.mxu0 %v402
  %1337 = vmatprep.subr.mxu0 %v399
  %1338 = vmatpush1.msra.mxu0 %v398
  %1339 = vmatprep.subr.mxu0 %v395
  %1340 = vmatpush1.msra.mxu0 %v394
  %1341 = vmatprep.subr.mxu0 %v391
  %1342 = vmatpush1.msra.mxu0 %v390
  %1343 = vmatprep.subr.mxu0 %v387
  %1344 = vmatpush1.msra.mxu0 %v386
  %1345 = vmatprep.subr.mxu0 %v383
  %1346 = vmatpush1.msra.mxu0 %v382
  %1347 = vmatprep.subr.mxu0 %v379
  %1348 = vmatpush1.msra.mxu0 %v378
  %1349 = vmatprep.subr.mxu0 %v375
  %1350 = vmatpush1.msra.mxu0 %v374
  %1351 = vmatprep.subr.mxu0 %v371
  %1352 = vmatpush1.msra.mxu0 %v370
  %1353 = vmatprep.subr.mxu0 %v367
  %1354 = vmatpush1.msra.mxu0 %v366
  %1355 = vmatprep.subr.mxu0 %v363
  %1356 = vmatpush1.msra.mxu0 %v362
  %1357 = vmatprep.subr.mxu0 %v359
  %1358 = vmatpush1.msra.mxu0 %v358
  %1359 = vmatprep.subr.mxu0 %v355
  %1360 = vmatpush1.msra.mxu0 %v354
  %1361 = vmatprep.subr.mxu0 %v351
  %1362 = vmatpush1.msra.mxu0 %v350
  %1363 = vmatprep.subr.mxu0 %v347
  %1364 = vmatpush1.msra.mxu0 %v346
  %1365 = vmatprep.subr.mxu0 %v343
  %1366 = vmatpush1.msra.mxu0 %v342
  %1367 = vmatprep.subr.mxu0 0.0
  %1368 = vmatpush2.msra.mxu0 0.0
  %1369 = vmatprep.subr.mxu0 0.0
  %1370 = vmatpush2.msra.mxu0 0.0
  %1371 = vmatprep.subr.mxu0 0.0
  %1372 = vmatpush2.msra.mxu0 0.0
  %1373 = vmatprep.subr.mxu0 0.0
  %1374 = vmatpush2.msra.mxu0 0.0
  %1375 = vmatprep.subr.mxu0 0.0
  %1376 = vmatpush2.msra.mxu0 0.0
  %1377 = vmatprep.subr.mxu0 0.0
  %1378 = vmatpush2.msra.mxu0 0.0
  %1379 = vmatprep.subr.mxu0 0.0
  %1380 = vmatpush2.msra.mxu0 0.0
  %1381 = vmatprep.subr.mxu0 0.0
  %1382 = vmatpush2.msra.mxu0 0.0
  %1383 = vmatprep.subr.mxu0 0.0
  %1384 = vmatpush2.msra.mxu0 0.0
  %1385 = vmatprep.subr.mxu0 0.0
  %1386 = vmatpush2.msra.mxu0 0.0
  %1387 = vmatprep.subr.mxu0 0.0
  %1388 = vmatpush2.msra.mxu0 0.0
  %1389 = vmatprep.subr.mxu0 0.0
  %1390 = vmatpush2.msra.mxu0 0.0
  %1391 = vmatprep.subr.mxu0 0.0
  %1392 = vmatpush2.msra.mxu0 0.0
  %1393 = vmatprep.subr.mxu0 0.0
  %1394 = vmatpush2.msra.mxu0 0.0
  %1395 = vmatprep.subr.mxu0 0.0
  %1396 = vmatpush2.msra.mxu0 0.0
  %1397 = vmatprep.subr.mxu0 0.0
  %1398 = vmatpush2.msra.mxu0 0.0
  %1399 = vmatprep.mubr.f32.mxu0 0.0
  %1400 = vmatmul.mubr.f32.gmra.mxu0 %v1256
  %v1401 = vpop.f32.mrf.mxu0
  %v1402 = vadd.f32 0.0, %v1401
  %v1403 = vpop.f32.mrf.mxu0
  %v1404 = vadd.f32 0.0, %v1403
  %1405 = vdwg.mxu0
  %v1406 = vadd.f32 %v1260, %v1331
  %v1407 = vadd.f32 %v1261, %v1333
  %v1408 = vadd.f32 %v1262, %v1402
  %v1409 = vadd.f32 %v1263, %v1404
  %v1410 = vmul.f32 %v1406, 0.5
  %v1411 = vtanh.pop %v1410
  %v1412 = vmul.f32 %v1411, 0.5
  %v1413 = vadd.f32 %v1412, 0.5
  %v1414 = vmul.f32 %v1407, 0.5
  %v1415 = vtanh.pop %v1414
  %v1416 = vmul.f32 %v1415, 0.5
  %v1417 = vadd.f32 %v1416, 0.5
  %v1418 = vtanh.pop %v1408
  %v1419 = vmul.f32 %v1409, 0.5
  %v1420 = vtanh.pop %v1419
  %v1421 = vmul.f32 %v1420, 0.5
  %v1422 = vadd.f32 %v1421, 0.5
  %v1423 = vmul.f32 %v1417, %v1254
  %v1424 = vmul.f32 %v1413, %v1418
  %v1425 = vadd.f32 %v1423, %v1424
  %v1426 = vtanh.pop %v1425
  %v1427 = vmul.f32 %v1422, %v1426
  %s1428 = scalar_lea.vmem %s4, 40
  %1429 = vst [vmem:[%s1428] sm:$0xff] %v1427
  %s1430 = scalar_lea.vmem [#allocation4], 192
  %v1431 = vld [vmem:[%s1430] sm:$0xff]
  %v1432 = vld [vmem:[%s1430 + $0x8] sm:$0xff]
  %v1433 = vld [vmem:[%s1430 + $0x10] sm:$0xff]
  %v1434 = vld [vmem:[%s1430 + $0x18] sm:$0xff]
  %1435 = vmatprep.subr.mxu0 %v401
  %1436 = vmatpush1.msra.mxu0 %v400
  %1437 = vmatprep.subr.mxu0 %v397
  %1438 = vmatpush1.msra.mxu0 %v396
  %1439 = vmatprep.subr.mxu0 %v393
  %1440 = vmatpush1.msra.mxu0 %v392
  %1441 = vmatprep.subr.mxu0 %v389
  %1442 = vmatpush1.msra.mxu0 %v388
  %1443 = vmatprep.subr.mxu0 %v385
  %1444 = vmatpush1.msra.mxu0 %v384
  %1445 = vmatprep.subr.mxu0 %v381
  %1446 = vmatpush1.msra.mxu0 %v380
  %1447 = vmatprep.subr.mxu0 %v377
  %1448 = vmatpush1.msra.mxu0 %v376
  %1449 = vmatprep.subr.mxu0 %v373
  %1450 = vmatpush1.msra.mxu0 %v372
  %1451 = vmatprep.subr.mxu0 %v369
  %1452 = vmatpush1.msra.mxu0 %v368
  %1453 = vmatprep.subr.mxu0 %v365
  %1454 = vmatpush1.msra.mxu0 %v364
  %1455 = vmatprep.subr.mxu0 %v361
  %1456 = vmatpush1.msra.mxu0 %v360
  %1457 = vmatprep.subr.mxu0 %v357
  %1458 = vmatpush1.msra.mxu0 %v356
  %1459 = vmatprep.subr.mxu0 %v353
  %1460 = vmatpush1.msra.mxu0 %v352
  %1461 = vmatprep.subr.mxu0 %v349
  %1462 = vmatpush1.msra.mxu0 %v348
  %1463 = vmatprep.subr.mxu0 %v345
  %1464 = vmatpush1.msra.mxu0 %v344
  %1465 = vmatprep.subr.mxu0 %v341
  %1466 = vmatpush1.msra.mxu0 %v340
  %1467 = vmatprep.subr.mxu0 0.0
  %1468 = vmatpush2.msra.mxu0 0.0
  %1469 = vmatprep.subr.mxu0 0.0
  %1470 = vmatpush2.msra.mxu0 0.0
  %1471 = vmatprep.subr.mxu0 0.0
  %1472 = vmatpush2.msra.mxu0 0.0
  %1473 = vmatprep.subr.mxu0 0.0
  %1474 = vmatpush2.msra.mxu0 0.0
  %1475 = vmatprep.subr.mxu0 0.0
  %1476 = vmatpush2.msra.mxu0 0.0
  %1477 = vmatprep.subr.mxu0 0.0
  %1478 = vmatpush2.msra.mxu0 0.0
  %1479 = vmatprep.subr.mxu0 0.0
  %1480 = vmatpush2.msra.mxu0 0.0
  %1481 = vmatprep.subr.mxu0 0.0
  %1482 = vmatpush2.msra.mxu0 0.0
  %1483 = vmatprep.subr.mxu0 0.0
  %1484 = vmatpush2.msra.mxu0 0.0
  %1485 = vmatprep.subr.mxu0 0.0
  %1486 = vmatpush2.msra.mxu0 0.0
  %1487 = vmatprep.subr.mxu0 0.0
  %1488 = vmatpush2.msra.mxu0 0.0
  %1489 = vmatprep.subr.mxu0 0.0
  %1490 = vmatpush2.msra.mxu0 0.0
  %1491 = vmatprep.subr.mxu0 0.0
  %1492 = vmatpush2.msra.mxu0 0.0
  %1493 = vmatprep.subr.mxu0 0.0
  %1494 = vmatpush2.msra.mxu0 0.0
  %1495 = vmatprep.subr.mxu0 0.0
  %1496 = vmatpush2.msra.mxu0 0.0
  %1497 = vmatprep.subr.mxu0 0.0
  %1498 = vmatpush2.msra.mxu0 0.0
  %1499 = vmatprep.mubr.f32.mxu0 0.0
  %1500 = vmatmul.mubr.f32.gmra.mxu0 %v1427
  %v1501 = vpop.f32.mrf.mxu0
  %v1502 = vadd.f32 0.0, %v1501
  %v1503 = vpop.f32.mrf.mxu0
  %v1504 = vadd.f32 0.0, %v1503
  %1505 = vdwg.mxu0
  %1506 = vmatprep.subr.mxu0 %v403
  %1507 = vmatpush1.msra.mxu0 %v402
  %1508 = vmatprep.subr.mxu0 %v399
  %1509 = vmatpush1.msra.mxu0 %v398
  %1510 = vmatprep.subr.mxu0 %v395
  %1511 = vmatpush1.msra.mxu0 %v394
  %1512 = vmatprep.subr.mxu0 %v391
  %1513 = vmatpush1.msra.mxu0 %v390
  %1514 = vmatprep.subr.mxu0 %v387
  %1515 = vmatpush1.msra.mxu0 %v386
  %1516 = vmatprep.subr.mxu0 %v383
  %1517 = vmatpush1.msra.mxu0 %v382
  %1518 = vmatprep.subr.mxu0 %v379
  %1519 = vmatpush1.msra.mxu0 %v378
  %1520 = vmatprep.subr.mxu0 %v375
  %1521 = vmatpush1.msra.mxu0 %v374
  %1522 = vmatprep.subr.mxu0 %v371
  %1523 = vmatpush1.msra.mxu0 %v370
  %1524 = vmatprep.subr.mxu0 %v367
  %1525 = vmatpush1.msra.mxu0 %v366
  %1526 = vmatprep.subr.mxu0 %v363
  %1527 = vmatpush1.msra.mxu0 %v362
  %1528 = vmatprep.subr.mxu0 %v359
  %1529 = vmatpush1.msra.mxu0 %v358
  %1530 = vmatprep.subr.mxu0 %v355
  %1531 = vmatpush1.msra.mxu0 %v354
  %1532 = vmatprep.subr.mxu0 %v351
  %1533 = vmatpush1.msra.mxu0 %v350
  %1534 = vmatprep.subr.mxu0 %v347
  %1535 = vmatpush1.msra.mxu0 %v346
  %1536 = vmatprep.subr.mxu0 %v343
  %1537 = vmatpush1.msra.mxu0 %v342
  %1538 = vmatprep.subr.mxu0 0.0
  %1539 = vmatpush2.msra.mxu0 0.0
  %1540 = vmatprep.subr.mxu0 0.0
  %1541 = vmatpush2.msra.mxu0 0.0
  %1542 = vmatprep.subr.mxu0 0.0
  %1543 = vmatpush2.msra.mxu0 0.0
  %1544 = vmatprep.subr.mxu0 0.0
  %1545 = vmatpush2.msra.mxu0 0.0
  %1546 = vmatprep.subr.mxu0 0.0
  %1547 = vmatpush2.msra.mxu0 0.0
  %1548 = vmatprep.subr.mxu0 0.0
  %1549 = vmatpush2.msra.mxu0 0.0
  %1550 = vmatprep.subr.mxu0 0.0
  %1551 = vmatpush2.msra.mxu0 0.0
  %1552 = vmatprep.subr.mxu0 0.0
  %1553 = vmatpush2.msra.mxu0 0.0
  %1554 = vmatprep.subr.mxu0 0.0
  %1555 = vmatpush2.msra.mxu0 0.0
  %1556 = vmatprep.subr.mxu0 0.0
  %1557 = vmatpush2.msra.mxu0 0.0
  %1558 = vmatprep.subr.mxu0 0.0
  %1559 = vmatpush2.msra.mxu0 0.0
  %1560 = vmatprep.subr.mxu0 0.0
  %1561 = vmatpush2.msra.mxu0 0.0
  %1562 = vmatprep.subr.mxu0 0.0
  %1563 = vmatpush2.msra.mxu0 0.0
  %1564 = vmatprep.subr.mxu0 0.0
  %1565 = vmatpush2.msra.mxu0 0.0
  %1566 = vmatprep.subr.mxu0 0.0
  %1567 = vmatpush2.msra.mxu0 0.0
  %1568 = vmatprep.subr.mxu0 0.0
  %1569 = vmatpush2.msra.mxu0 0.0
  %1570 = vmatprep.mubr.f32.mxu0 0.0
  %1571 = vmatmul.mubr.f32.gmra.mxu0 %v1427
  %v1572 = vpop.f32.mrf.mxu0
  %v1573 = vadd.f32 0.0, %v1572
  %v1574 = vpop.f32.mrf.mxu0
  %v1575 = vadd.f32 0.0, %v1574
  %1576 = vdwg.mxu0
  %v1577 = vadd.f32 %v1431, %v1502
  %v1578 = vadd.f32 %v1432, %v1504
  %v1579 = vadd.f32 %v1433, %v1573
  %v1580 = vadd.f32 %v1434, %v1575
  %v1581 = vmul.f32 %v1577, 0.5
  %v1582 = vtanh.pop %v1581
  %v1583 = vmul.f32 %v1582, 0.5
  %v1584 = vadd.f32 %v1583, 0.5
  %v1585 = vmul.f32 %v1578, 0.5
  %v1586 = vtanh.pop %v1585
  %v1587 = vmul.f32 %v1586, 0.5
  %v1588 = vadd.f32 %v1587, 0.5
  %v1589 = vtanh.pop %v1579
  %v1590 = vmul.f32 %v1580, 0.5
  %v1591 = vtanh.pop %v1590
  %v1592 = vmul.f32 %v1591, 0.5
  %v1593 = vadd.f32 %v1592, 0.5
  %v1594 = vmul.f32 %v1588, %v1425
  %v1595 = vmul.f32 %v1584, %v1589
  %v1596 = vadd.f32 %v1594, %v1595
  %v1597 = vtanh.pop %v1596
  %v1598 = vmul.f32 %v1593, %v1597
  %s1599 = scalar_lea.vmem %s4, 48
  %1600 = vst [vmem:[%s1599] sm:$0xff] %v1598
  %s1601 = scalar_lea.vmem [#allocation4], 224
  %v1602 = vld [vmem:[%s1601] sm:$0xff]
  %v1603 = vld [vmem:[%s1601 + $0x8] sm:$0xff]
  %v1604 = vld [vmem:[%s1601 + $0x10] sm:$0xff]
  %v1605 = vld [vmem:[%s1601 + $0x18] sm:$0xff]
  %1606 = vmatprep.subr.mxu0 %v401
  %1607 = vmatpush1.msra.mxu0 %v400
  %1608 = vmatprep.subr.mxu0 %v397
  %1609 = vmatpush1.msra.mxu0 %v396
  %1610 = vmatprep.subr.mxu0 %v393
  %1611 = vmatpush1.msra.mxu0 %v392
  %1612 = vmatprep.subr.mxu0 %v389
  %1613 = vmatpush1.msra.mxu0 %v388
  %1614 = vmatprep.subr.mxu0 %v385
  %1615 = vmatpush1.msra.mxu0 %v384
  %1616 = vmatprep.subr.mxu0 %v381
  %1617 = vmatpush1.msra.mxu0 %v380
  %1618 = vmatprep.subr.mxu0 %v377
  %1619 = vmatpush1.msra.mxu0 %v376
  %1620 = vmatprep.subr.mxu0 %v373
  %1621 = vmatpush1.msra.mxu0 %v372
  %1622 = vmatprep.subr.mxu0 %v369
  %1623 = vmatpush1.msra.mxu0 %v368
  %1624 = vmatprep.subr.mxu0 %v365
  %1625 = vmatpush1.msra.mxu0 %v364
  %1626 = vmatprep.subr.mxu0 %v361
  %1627 = vmatpush1.msra.mxu0 %v360
  %1628 = vmatprep.subr.mxu0 %v357
  %1629 = vmatpush1.msra.mxu0 %v356
  %1630 = vmatprep.subr.mxu0 %v353
  %1631 = vmatpush1.msra.mxu0 %v352
  %1632 = vmatprep.subr.mxu0 %v349
  %1633 = vmatpush1.msra.mxu0 %v348
  %1634 = vmatprep.subr.mxu0 %v345
  %1635 = vmatpush1.msra.mxu0 %v344
  %1636 = vmatprep.subr.mxu0 %v341
  %1637 = vmatpush1.msra.mxu0 %v340
  %1638 = vmatprep.subr.mxu0 0.0
  %1639 = vmatpush2.msra.mxu0 0.0
  %1640 = vmatprep.subr.mxu0 0.0
  %1641 = vmatpush2.msra.mxu0 0.0
  %1642 = vmatprep.subr.mxu0 0.0
  %1643 = vmatpush2.msra.mxu0 0.0
  %1644 = vmatprep.subr.mxu0 0.0
  %1645 = vmatpush2.msra.mxu0 0.0
  %1646 = vmatprep.subr.mxu0 0.0
  %1647 = vmatpush2.msra.mxu0 0.0
  %1648 = vmatprep.subr.mxu0 0.0
  %1649 = vmatpush2.msra.mxu0 0.0
  %1650 = vmatprep.subr.mxu0 0.0
  %1651 = vmatpush2.msra.mxu0 0.0
  %1652 = vmatprep.subr.mxu0 0.0
  %1653 = vmatpush2.msra.mxu0 0.0
  %1654 = vmatprep.subr.mxu0 0.0
  %1655 = vmatpush2.msra.mxu0 0.0
  %1656 = vmatprep.subr.mxu0 0.0
  %1657 = vmatpush2.msra.mxu0 0.0
  %1658 = vmatprep.subr.mxu0 0.0
  %1659 = vmatpush2.msra.mxu0 0.0
  %1660 = vmatprep.subr.mxu0 0.0
  %1661 = vmatpush2.msra.mxu0 0.0
  %1662 = vmatprep.subr.mxu0 0.0
  %1663 = vmatpush2.msra.mxu0 0.0
  %1664 = vmatprep.subr.mxu0 0.0
  %1665 = vmatpush2.msra.mxu0 0.0
  %1666 = vmatprep.subr.mxu0 0.0
  %1667 = vmatpush2.msra.mxu0 0.0
  %1668 = vmatprep.subr.mxu0 0.0
  %1669 = vmatpush2.msra.mxu0 0.0
  %1670 = vmatprep.mubr.f32.mxu0 0.0
  %1671 = vmatmul.mubr.f32.gmra.mxu0 %v1598
  %v1672 = vpop.f32.mrf.mxu0
  %v1673 = vadd.f32 0.0, %v1672
  %v1674 = vpop.f32.mrf.mxu0
  %v1675 = vadd.f32 0.0, %v1674
  %1676 = vdwg.mxu0
  %1677 = vmatprep.subr.mxu0 %v403
  %1678 = vmatpush1.msra.mxu0 %v402
  %1679 = vmatprep.subr.mxu0 %v399
  %1680 = vmatpush1.msra.mxu0 %v398
  %1681 = vmatprep.subr.mxu0 %v395
  %1682 = vmatpush1.msra.mxu0 %v394
  %1683 = vmatprep.subr.mxu0 %v391
  %1684 = vmatpush1.msra.mxu0 %v390
  %1685 = vmatprep.subr.mxu0 %v387
  %1686 = vmatpush1.msra.mxu0 %v386
  %1687 = vmatprep.subr.mxu0 %v383
  %1688 = vmatpush1.msra.mxu0 %v382
  %1689 = vmatprep.subr.mxu0 %v379
  %1690 = vmatpush1.msra.mxu0 %v378
  %1691 = vmatprep.subr.mxu0 %v375
  %1692 = vmatpush1.msra.mxu0 %v374
  %1693 = vmatprep.subr.mxu0 %v371
  %1694 = vmatpush1.msra.mxu0 %v370
  %1695 = vmatprep.subr.mxu0 %v367
  %1696 = vmatpush1.msra.mxu0 %v366
  %1697 = vmatprep.subr.mxu0 %v363
  %1698 = vmatpush1.msra.mxu0 %v362
  %1699 = vmatprep.subr.mxu0 %v359
  %1700 = vmatpush1.msra.mxu0 %v358
  %1701 = vmatprep.subr.mxu0 %v355
  %1702 = vmatpush1.msra.mxu0 %v354
  %1703 = vmatprep.subr.mxu0 %v351
  %1704 = vmatpush1.msra.mxu0 %v350
  %1705 = vmatprep.subr.mxu0 %v347
  %1706 = vmatpush1.msra.mxu0 %v346
  %1707 = vmatprep.subr.mxu0 %v343
  %1708 = vmatpush1.msra.mxu0 %v342
  %1709 = vmatprep.subr.mxu0 0.0
  %1710 = vmatpush2.msra.mxu0 0.0
  %1711 = vmatprep.subr.mxu0 0.0
  %1712 = vmatpush2.msra.mxu0 0.0
  %1713 = vmatprep.subr.mxu0 0.0
  %1714 = vmatpush2.msra.mxu0 0.0
  %1715 = vmatprep.subr.mxu0 0.0
  %1716 = vmatpush2.msra.mxu0 0.0
  %1717 = vmatprep.subr.mxu0 0.0
  %1718 = vmatpush2.msra.mxu0 0.0
  %1719 = vmatprep.subr.mxu0 0.0
  %1720 = vmatpush2.msra.mxu0 0.0
  %1721 = vmatprep.subr.mxu0 0.0
  %1722 = vmatpush2.msra.mxu0 0.0
  %1723 = vmatprep.subr.mxu0 0.0
  %1724 = vmatpush2.msra.mxu0 0.0
  %1725 = vmatprep.subr.mxu0 0.0
  %1726 = vmatpush2.msra.mxu0 0.0
  %1727 = vmatprep.subr.mxu0 0.0
  %1728 = vmatpush2.msra.mxu0 0.0
  %1729 = vmatprep.subr.mxu0 0.0
  %1730 = vmatpush2.msra.mxu0 0.0
  %1731 = vmatprep.subr.mxu0 0.0
  %1732 = vmatpush2.msra.mxu0 0.0
  %1733 = vmatprep.subr.mxu0 0.0
  %1734 = vmatpush2.msra.mxu0 0.0
  %1735 = vmatprep.subr.mxu0 0.0
  %1736 = vmatpush2.msra.mxu0 0.0
  %1737 = vmatprep.subr.mxu0 0.0
  %1738 = vmatpush2.msra.mxu0 0.0
  %1739 = vmatprep.subr.mxu0 0.0
  %1740 = vmatpush2.msra.mxu0 0.0
  %1741 = vmatprep.mubr.f32.mxu0 0.0
  %1742 = vmatmul.mubr.f32.gmra.mxu0 %v1598
  %v1743 = vpop.f32.mrf.mxu0
  %v1744 = vadd.f32 0.0, %v1743
  %v1745 = vpop.f32.mrf.mxu0
  %v1746 = vadd.f32 0.0, %v1745
  %1747 = vdwg.mxu0
  %v1748 = vadd.f32 %v1602, %v1673
  %v1749 = vadd.f32 %v1603, %v1675
  %v1750 = vadd.f32 %v1604, %v1744
  %v1751 = vadd.f32 %v1605, %v1746
  %v1752 = vmul.f32 %v1748, 0.5
  %v1753 = vtanh.pop %v1752
  %v1754 = vmul.f32 %v1753, 0.5
  %v1755 = vadd.f32 %v1754, 0.5
  %v1756 = vmul.f32 %v1749, 0.5
  %v1757 = vtanh.pop %v1756
  %v1758 = vmul.f32 %v1757, 0.5
  %v1759 = vadd.f32 %v1758, 0.5
  %v1760 = vtanh.pop %v1750
  %v1761 = vmul.f32 %v1751, 0.5
  %v1762 = vtanh.pop %v1761
  %v1763 = vmul.f32 %v1762, 0.5
  %v1764 = vadd.f32 %v1763, 0.5
  %v1765 = vmul.f32 %v1759, %v1596
  %v1766 = vmul.f32 %v1755, %v1760
  %v1767 = vadd.f32 %v1765, %v1766
  %v1768 = vtanh.pop %v1767
  %v1769 = vmul.f32 %v1764, %v1768
  %s1770 = scalar_lea.vmem %s4, 56
  %1771 = vst [vmem:[%s1770] sm:$0xff] %v1769
  %1772 = vst [vmem:[#allocation2] sm:$0xff] %v1769
  %1773 = vst [vmem:[#allocation3] sm:$0xff] %v1767
  // Predicated region
  $region22: #{multi_output_lstm_forward.2} parent=0 // pred_check
    _
  $region23: #{multi_output_lstm_forward.2} parent=0 // pred_check_branch
    %1775 = sbr.rel (0) target = $region25
  $region24: #{multi_output_lstm_forward.2} parent=0 // pred_region
    _
  $region25: #{multi_output_lstm_forward.2} parent=0 // pred_fallthru
    _
  // Predicated region
  $region26: #{multi_output_lstm_forward.2} parent=0 // pred_check
    _
  $region27: #{multi_output_lstm_forward.2} parent=0 // pred_check_branch
    %1777 = sbr.rel (0) target = $region29
  $region28: #{multi_output_lstm_forward.2} parent=0 // pred_region
    _
  $region29: #{multi_output_lstm_forward.2} parent=0 // pred_fallthru
    _

</llo_original>
